<compile_context>
chip_gen: v5e
topology: v5e:2x2
jax: 0.10.0
libtpu: 0.0.40
codegen_flags: <defaults>
</compile_context>

<pallas_src>
import functools

import jax
import jax.numpy as jnp
from jax.experimental import pallas as pl
from jax.experimental.pallas import tpu as pltpu

D_IN = 28 * 28   # 784
D_OUT = 28 * 28  # 784

# Split the batch into >= 2 grid tiles once each half would have at least this
# many rows (keeps both v7x TensorCores busy without shrinking tiles too much).
_MIN_SPLIT_ROWS = 256


# ----------------------------- kernel -----------------------------------
def autoencoder_kernel(x_ref,
                       w1, b1, w2, b2, w34, b34, w5, b5, w6, b6,
                       out_ref):
    """Full MLP (with the layer-3/4 fold) for one batch tile, entirely in VMEM.

    Matmuls use bf16 operands with f32 accumulation on the MXU; bias adds,
    ReLU and the tanh epilogue stay in f32.
    """
    x = x_ref[...].astype(jnp.bfloat16)

    # encoder
    h = jnp.dot(x, w1[...], preferred_element_type=jnp.float32) + b1[...]
    h = jnp.maximum(h, 0.0).astype(jnp.bfloat16)
    h = jnp.dot(h, w2[...], preferred_element_type=jnp.float32) + b2[...]
    h = jnp.maximum(h, 0.0).astype(jnp.bfloat16)

    # folded bottleneck: (128->64) then (64->128) with no nonlinearity in between,
    # replaced by one 128x128 matmul (W34 = w3 @ w4, b34 = b3 @ w4 + b4; exact).
    h = jnp.dot(h, w34[...], preferred_element_type=jnp.float32) + b34[...]
    h = jnp.maximum(h, 0.0).astype(jnp.bfloat16)

    # decoder tail
    h = jnp.dot(h, w5[...], preferred_element_type=jnp.float32) + b5[...]
    h = jnp.maximum(h, 0.0).astype(jnp.bfloat16)
    h = jnp.dot(h, w6[...], preferred_element_type=jnp.float32) + b6[...]
    out_ref[...] = jnp.tanh(h)


# ----------------------- parameter preparation ---------------------------
def prepare_params(params):
    """One-time prep (call once when params are created/loaded, NOT per forward):
    fold the activation-free bottleneck in f32, then cast weights to bf16."""
    w34_f32 = params["w3"] @ params["w4"]                 # (128, 128), exact fold
    b34_f32 = params["b3"] @ params["w4"] + params["b4"]  # (1, 128)
    return {
        "w1": params["w1"].astype(jnp.bfloat16), "b1": params["b1"],
        "w2": params["w2"].astype(jnp.bfloat16), "b2": params["b2"],
        "w34": w34_f32.astype(jnp.bfloat16),     "b34": b34_f32,
        "w5": params["w5"].astype(jnp.bfloat16), "b5": params["b5"],
        "w6": params["w6"].astype(jnp.bfloat16), "b6": params["b6"],
    }


def _choose_batch_tile(B, requested):
    """Pick the batch tile (second-minor block dim, so it must be a multiple of 8
    unless it equals the full batch):
      - at most `requested`,
      - split into >= 2 tiles when the batch is big enough (v7x has 2 TCs),
      - otherwise a single full-array block (always a legal block shape)."""
    req = max(8, (requested // 8) * 8)
    if B <= req:
        if B >= 2 * _MIN_SPLIT_ROWS:
            # half the batch, rounded up to a multiple of 8 -> exactly 2 grid tiles
            return ((B + 1) // 2 + 7) // 8 * 8
        return B
    return req


# ----------------------------- wrapper -----------------------------------
@functools.partial(jax.jit, static_argnames=("batch_tile",))
def autoencoder_forward(x, prepped, *, batch_tile=1024):
    """x: (B, 784) float32.  prepped: output of prepare_params()."""
    B, d_in = x.shape
    assert d_in == D_IN

    tile = _choose_batch_tile(B, batch_tile)
    n_tiles = pl.cdiv(B, tile)          # ragged last block handled by Pallas masking

    def full(arr):
        # whole-array block, constant index_map -> stays VMEM-resident across the grid
        return pl.BlockSpec(arr.shape, lambda i: (0, 0))

    return pl.pallas_call(
        autoencoder_kernel,
        out_shape=jax.ShapeDtypeStruct((B, D_OUT), jnp.float32),
        grid_spec=pltpu.PrefetchScalarGridSpec(
            num_scalar_prefetch=0,
            grid=(n_tiles,),
            in_specs=[
                pl.BlockSpec((tile, D_IN), lambda i: (i, 0)),
                full(prepped["w1"]), full(prepped["b1"]),
                full(prepped["w2"]), full(prepped["b2"]),
                full(prepped["w34"]), full(prepped["b34"]),
                full(prepped["w5"]), full(prepped["b5"]),
                full(prepped["w6"]), full(prepped["b6"]),
            ],
            out_specs=pl.BlockSpec((tile, D_OUT), lambda i: (i, 0)),
        ),
        compiler_params=pltpu.CompilerParams(
            dimension_semantics=("parallel",),
            vmem_limit_bytes=48 << 20,   # ~20-25 MiB used at tile=1024; fits v7x 64 MiB
        ),
    )(x,
      prepped["w1"], prepped["b1"], prepped["w2"], prepped["b2"],
      prepped["w34"], prepped["b34"], prepped["w5"], prepped["b5"],
      prepped["w6"], prepped["b6"])


# ------------------------- deterministic params ---------------------------
def init_params(key):
    """Deterministic init mimicking nn.Linear's uniform(-1/sqrt(fan_in), 1/sqrt(fan_in))."""
    dims = [(D_IN, 256), (256, 128), (128, 64),      # encoder
            (64, 128), (128, 256), (256, D_OUT)]     # decoder
    params = {}
    for idx, (fan_in, fan_out) in enumerate(dims, start=1):
        key, kw, kb = jax.random.split(key, 3)
        bound = 1.0 / (fan_in ** 0.5)
        params[f"w{idx}"] = jax.random.uniform(
            kw, (fan_in, fan_out), jnp.float32, minval=-bound, maxval=bound)
        params[f"b{idx}"] = jax.random.uniform(
            kb, (1, fan_out), jnp.float32, minval=-bound, maxval=bound)
    return params


# -------------------------- pure-JAX reference -----------------------------
def reference_forward(x, p):
    """Exact f32 reference with the original (un-folded) 6-layer structure."""
    h = jnp.maximum(x @ p["w1"] + p["b1"], 0.0)
    h = jnp.maximum(h @ p["w2"] + p["b2"], 0.0)
    z = h @ p["w3"] + p["b3"]
    d = jnp.maximum(z @ p["w4"] + p["b4"], 0.0)
    d = jnp.maximum(d @ p["w5"] + p["b5"], 0.0)
    d = d @ p["w6"] + p["b6"]
    return jnp.tanh(d)


if __name__ == "__main__":
    key = jax.random.PRNGKey(0)
    key, kx = jax.random.split(key)

    B = 300
    x = jax.random.normal(kx, (B, D_IN), jnp.float32)
    params = init_params(key)
    prepped = prepare_params(params)   # one-time prep, outside the jitted forward

    # Default tile: B=300 -> single full-array block (no padding, no ragged rows).
    out = jax.block_until_ready(autoencoder_forward(x, prepped))
    # Small tile: exercises the multi-tile grid + ragged-last-block masked-write path.
    out_small = jax.block_until_ready(autoencoder_forward(x, prepped, batch_tile=128))

    ref = reference_forward(x, params)
    assert out.shape == (B, D_OUT)
    assert out_small.shape == (B, D_OUT)

    # bf16 matmul operands (+ exact f32 W34 fold) => modest tolerance vs f32 reference.
    err = float(jnp.max(jnp.abs(out - ref)))
    err_small = float(jnp.max(jnp.abs(out_small - ref)))
    assert err < 5e-2, f"max abs error (default tile) {err} too large"
    assert err_small < 5e-2, f"max abs error (tile=128) {err_small} too large"

    print("KERNEL_OK")
</pallas_src>

<mosaic_0001>
module attributes {stable_mosaic.version = 11 : i64} {
  func.func @autoencoder_kernel(%arg0: i32, %arg1: memref<300x784xf32, #tpu.memory_space<vmem>>, %arg2: memref<784x256xbf16, #tpu.memory_space<vmem>>, %arg3: memref<1x256xf32, #tpu.memory_space<vmem>>, %arg4: memref<256x128xbf16, #tpu.memory_space<vmem>>, %arg5: memref<1x128xf32, #tpu.memory_space<vmem>>, %arg6: memref<128x128xbf16, #tpu.memory_space<vmem>>, %arg7: memref<1x128xf32, #tpu.memory_space<vmem>>, %arg8: memref<128x256xbf16, #tpu.memory_space<vmem>>, %arg9: memref<1x256xf32, #tpu.memory_space<vmem>>, %arg10: memref<256x784xbf16, #tpu.memory_space<vmem>>, %arg11: memref<1x784xf32, #tpu.memory_space<vmem>>, %arg12: memref<300x784xf32, #tpu.memory_space<vmem>>) attributes {dimension_semantics = [#tpu.dimension_semantics<parallel>], iteration_bounds = array<i64: 1>, scalar_prefetch = 0 : i64, scratch_operands = 0 : i64, tpu.core_type = #tpu.core_type<tc>, window_params = [{transform_indices = @transform_0, window_bounds = array<i64: 300, 784>}, {pipeline_mode = #tpu.pipeline_mode<synchronous>, transform_indices = @transform_1, window_bounds = array<i64: 784, 256>}, {pipeline_mode = #tpu.pipeline_mode<synchronous>, transform_indices = @transform_2, window_bounds = array<i64: 1, 256>}, {pipeline_mode = #tpu.pipeline_mode<synchronous>, transform_indices = @transform_3, window_bounds = array<i64: 256, 128>}, {pipeline_mode = #tpu.pipeline_mode<synchronous>, transform_indices = @transform_4, window_bounds = array<i64: 1, 128>}, {pipeline_mode = #tpu.pipeline_mode<synchronous>, transform_indices = @transform_5, window_bounds = array<i64: 128, 128>}, {pipeline_mode = #tpu.pipeline_mode<synchronous>, transform_indices = @transform_6, window_bounds = array<i64: 1, 128>}, {pipeline_mode = #tpu.pipeline_mode<synchronous>, transform_indices = @transform_7, window_bounds = array<i64: 128, 256>}, {pipeline_mode = #tpu.pipeline_mode<synchronous>, transform_indices = @transform_8, window_bounds = array<i64: 1, 256>}, {pipeline_mode = #tpu.pipeline_mode<synchronous>, transform_indices = @transform_9, window_bounds = array<i64: 256, 784>}, {pipeline_mode = #tpu.pipeline_mode<synchronous>, transform_indices = @transform_10, window_bounds = array<i64: 1, 784>}, {transform_indices = @transform_11, window_bounds = array<i64: 300, 784>}]} {
    %c0 = arith.constant 0 : index
    %c0_0 = arith.constant 0 : index
    %0 = vector.load %arg1[%c0, %c0_0] : memref<300x784xf32, #tpu.memory_space<vmem>>, vector<300x784xf32>
    %1 = arith.truncf %0 : vector<300x784xf32> to vector<300x784xbf16>
    %c0_1 = arith.constant 0 : index
    %c0_2 = arith.constant 0 : index
    %2 = vector.load %arg2[%c0_1, %c0_2] : memref<784x256xbf16, #tpu.memory_space<vmem>>, vector<784x256xbf16>
    %cst = arith.constant dense<0.000000e+00> : vector<300x256xf32>
    %3 = tpu.matmul %1, %2, %cst {dimension_numbers = #tpu.dot_dimension_numbers<[1], [0], [0], [1], [0, 0, 1, 1], [], []>} : vector<300x784xbf16>, vector<784x256xbf16>, vector<300x256xf32> -> vector<300x256xf32>
    %c0_3 = arith.constant 0 : index
    %c0_4 = arith.constant 0 : index
    %4 = vector.load %arg3[%c0_3, %c0_4] : memref<1x256xf32, #tpu.memory_space<vmem>>, vector<1x256xf32>
    %5 = vector.broadcast %4 : vector<1x256xf32> to vector<300x256xf32>
    %6 = arith.addf %3, %5 : vector<300x256xf32>
    %cst_5 = arith.constant 0.000000e+00 : f32
    %7 = vector.broadcast %cst_5 : f32 to vector<300x256xf32>
    %8 = arith.maximumf %6, %7 : vector<300x256xf32>
    %9 = arith.truncf %8 : vector<300x256xf32> to vector<300x256xbf16>
    %c0_6 = arith.constant 0 : index
    %c0_7 = arith.constant 0 : index
    %10 = vector.load %arg4[%c0_6, %c0_7] : memref<256x128xbf16, #tpu.memory_space<vmem>>, vector<256x128xbf16>
    %cst_8 = arith.constant dense<0.000000e+00> : vector<300x128xf32>
    %11 = tpu.matmul %9, %10, %cst_8 {dimension_numbers = #tpu.dot_dimension_numbers<[1], [0], [0], [1], [0, 0, 1, 1], [], []>} : vector<300x256xbf16>, vector<256x128xbf16>, vector<300x128xf32> -> vector<300x128xf32>
    %c0_9 = arith.constant 0 : index
    %c0_10 = arith.constant 0 : index
    %12 = vector.load %arg5[%c0_9, %c0_10] : memref<1x128xf32, #tpu.memory_space<vmem>>, vector<1x128xf32>
    %13 = vector.broadcast %12 : vector<1x128xf32> to vector<300x128xf32>
    %14 = arith.addf %11, %13 : vector<300x128xf32>
    %cst_11 = arith.constant 0.000000e+00 : f32
    %15 = vector.broadcast %cst_11 : f32 to vector<300x128xf32>
    %16 = arith.maximumf %14, %15 : vector<300x128xf32>
    %17 = arith.truncf %16 : vector<300x128xf32> to vector<300x128xbf16>
    %c0_12 = arith.constant 0 : index
    %c0_13 = arith.constant 0 : index
    %18 = vector.load %arg6[%c0_12, %c0_13] : memref<128x128xbf16, #tpu.memory_space<vmem>>, vector<128x128xbf16>
    %cst_14 = arith.constant dense<0.000000e+00> : vector<300x128xf32>
    %19 = tpu.matmul %17, %18, %cst_14 {dimension_numbers = #tpu.dot_dimension_numbers<[1], [0], [0], [1], [0, 0, 1, 1], [], []>} : vector<300x128xbf16>, vector<128x128xbf16>, vector<300x128xf32> -> vector<300x128xf32>
    %c0_15 = arith.constant 0 : index
    %c0_16 = arith.constant 0 : index
    %20 = vector.load %arg7[%c0_15, %c0_16] : memref<1x128xf32, #tpu.memory_space<vmem>>, vector<1x128xf32>
    %21 = vector.broadcast %20 : vector<1x128xf32> to vector<300x128xf32>
    %22 = arith.addf %19, %21 : vector<300x128xf32>
    %cst_17 = arith.constant 0.000000e+00 : f32
    %23 = vector.broadcast %cst_17 : f32 to vector<300x128xf32>
    %24 = arith.maximumf %22, %23 : vector<300x128xf32>
    %25 = arith.truncf %24 : vector<300x128xf32> to vector<300x128xbf16>
    %c0_18 = arith.constant 0 : index
    %c0_19 = arith.constant 0 : index
    %26 = vector.load %arg8[%c0_18, %c0_19] : memref<128x256xbf16, #tpu.memory_space<vmem>>, vector<128x256xbf16>
    %cst_20 = arith.constant dense<0.000000e+00> : vector<300x256xf32>
    %27 = tpu.matmul %25, %26, %cst_20 {dimension_numbers = #tpu.dot_dimension_numbers<[1], [0], [0], [1], [0, 0, 1, 1], [], []>} : vector<300x128xbf16>, vector<128x256xbf16>, vector<300x256xf32> -> vector<300x256xf32>
    %c0_21 = arith.constant 0 : index
    %c0_22 = arith.constant 0 : index
    %28 = vector.load %arg9[%c0_21, %c0_22] : memref<1x256xf32, #tpu.memory_space<vmem>>, vector<1x256xf32>
    %29 = vector.broadcast %28 : vector<1x256xf32> to vector<300x256xf32>
    %30 = arith.addf %27, %29 : vector<300x256xf32>
    %cst_23 = arith.constant 0.000000e+00 : f32
    %31 = vector.broadcast %cst_23 : f32 to vector<300x256xf32>
    %32 = arith.maximumf %30, %31 : vector<300x256xf32>
    %33 = arith.truncf %32 : vector<300x256xf32> to vector<300x256xbf16>
    %c0_24 = arith.constant 0 : index
    %c0_25 = arith.constant 0 : index
    %34 = vector.load %arg10[%c0_24, %c0_25] : memref<256x784xbf16, #tpu.memory_space<vmem>>, vector<256x784xbf16>
    %cst_26 = arith.constant dense<0.000000e+00> : vector<300x784xf32>
    %35 = tpu.matmul %33, %34, %cst_26 {dimension_numbers = #tpu.dot_dimension_numbers<[1], [0], [0], [1], [0, 0, 1, 1], [], []>} : vector<300x256xbf16>, vector<256x784xbf16>, vector<300x784xf32> -> vector<300x784xf32>
    %c0_27 = arith.constant 0 : index
    %c0_28 = arith.constant 0 : index
    %36 = vector.load %arg11[%c0_27, %c0_28] : memref<1x784xf32, #tpu.memory_space<vmem>>, vector<1x784xf32>
    %37 = vector.broadcast %36 : vector<1x784xf32> to vector<300x784xf32>
    %38 = arith.addf %35, %37 : vector<300x784xf32>
    %39 = math.tanh %38 : vector<300x784xf32>
    %c0_29 = arith.constant 0 : index
    %c0_30 = arith.constant 0 : index
    %40 = vector.load %arg12[%c0_29, %c0_30] : memref<300x784xf32, #tpu.memory_space<vmem>>, vector<300x784xf32>
    tpu.vector_store %arg12[%c0_29, %c0_30], %39 {strides = array<i32>} : memref<300x784xf32, #tpu.memory_space<vmem>>, vector<300x784xf32>,
    return
  }
  func.func @transform_0(%arg0: i32) -> (i32, i32) {
    %c0_i32 = arith.constant 0 : i32
    %c0_i32_0 = arith.constant 0 : i32
    return %arg0, %c0_i32 : i32, i32
  }
  func.func @transform_1(%arg0: i32) -> (i32, i32) {
    %c0_i32 = arith.constant 0 : i32
    %c0_i32_0 = arith.constant 0 : i32
    %c0_i32_1 = arith.constant 0 : i32
    return %c0_i32, %c0_i32_0 : i32, i32
  }
  func.func @transform_2(%arg0: i32) -> (i32, i32) {
    %c0_i32 = arith.constant 0 : i32
    %c0_i32_0 = arith.constant 0 : i32
    %c0_i32_1 = arith.constant 0 : i32
    return %c0_i32, %c0_i32_0 : i32, i32
  }
  func.func @transform_3(%arg0: i32) -> (i32, i32) {
    %c0_i32 = arith.constant 0 : i32
    %c0_i32_0 = arith.constant 0 : i32
    %c0_i32_1 = arith.constant 0 : i32
    return %c0_i32, %c0_i32_0 : i32, i32
  }
  func.func @transform_4(%arg0: i32) -> (i32, i32) {
    %c0_i32 = arith.constant 0 : i32
    %c0_i32_0 = arith.constant 0 : i32
    %c0_i32_1 = arith.constant 0 : i32
    return %c0_i32, %c0_i32_0 : i32, i32
  }
  func.func @transform_5(%arg0: i32) -> (i32, i32) {
    %c0_i32 = arith.constant 0 : i32
    %c0_i32_0 = arith.constant 0 : i32
    %c0_i32_1 = arith.constant 0 : i32
    return %c0_i32, %c0_i32_0 : i32, i32
  }
  func.func @transform_6(%arg0: i32) -> (i32, i32) {
    %c0_i32 = arith.constant 0 : i32
    %c0_i32_0 = arith.constant 0 : i32
    %c0_i32_1 = arith.constant 0 : i32
    return %c0_i32, %c0_i32_0 : i32, i32
  }
  func.func @transform_7(%arg0: i32) -> (i32, i32) {
    %c0_i32 = arith.constant 0 : i32
    %c0_i32_0 = arith.constant 0 : i32
    %c0_i32_1 = arith.constant 0 : i32
    return %c0_i32, %c0_i32_0 : i32, i32
  }
  func.func @transform_8(%arg0: i32) -> (i32, i32) {
    %c0_i32 = arith.constant 0 : i32
    %c0_i32_0 = arith.constant 0 : i32
    %c0_i32_1 = arith.constant 0 : i32
    return %c0_i32, %c0_i32_0 : i32, i32
  }
  func.func @transform_9(%arg0: i32) -> (i32, i32) {
    %c0_i32 = arith.constant 0 : i32
    %c0_i32_0 = arith.constant 0 : i32
    %c0_i32_1 = arith.constant 0 : i32
    return %c0_i32, %c0_i32_0 : i32, i32
  }
  func.func @transform_10(%arg0: i32) -> (i32, i32) {
    %c0_i32 = arith.constant 0 : i32
    %c0_i32_0 = arith.constant 0 : i32
    %c0_i32_1 = arith.constant 0 : i32
    return %c0_i32, %c0_i32_0 : i32, i32
  }
  func.func @transform_11(%arg0: i32) -> (i32, i32) {
    %c0_i32 = arith.constant 0 : i32
    %c0_i32_0 = arith.constant 0 : i32
    return %arg0, %c0_i32 : i32, i32
  }
}

</mosaic_0001>

<llo_original>
// kernel: autoencoder_forward.1
$region0: #{autoencoder_forward.1}
  #allocation0 [shape = 'u32[]', space=smem, size = 0x4, offset = 0x4, fixed_abs, tag = 'smem constant byte address 0x4 - core index']
  #allocation1 [shape = 'u32[72,128]{1,0:T(1,128)}', space=vmem, size = 0x9000, scoped, tag = 'internal scratch']
  %s0 = inlined_call_operand.hbm [shape: f32[300,784], index: 0, kind: input, shape index: {}]
  %s1 = inlined_call_operand.hbm [shape: bf16[784,256], index: 1, kind: input, shape index: {}]
  %s2 = inlined_call_operand.hbm [shape: f32[1,256], index: 2, kind: input, shape index: {}]
  %s3 = inlined_call_operand.hbm [shape: bf16[256,128], index: 3, kind: input, shape index: {}]
  %s4 = inlined_call_operand.hbm [shape: f32[1,128], index: 4, kind: input, shape index: {}]
  %s5 = inlined_call_operand.hbm [shape: bf16[128,128], index: 5, kind: input, shape index: {}]
  %s6 = inlined_call_operand.hbm [shape: f32[1,128], index: 6, kind: input, shape index: {}]
  %s7 = inlined_call_operand.hbm [shape: bf16[128,256], index: 7, kind: input, shape index: {}]
  %s8 = inlined_call_operand.hbm [shape: f32[1,256], index: 8, kind: input, shape index: {}]
  %s9 = inlined_call_operand.vmem [shape: bf16[256,784], index: 9, kind: input, shape index: {}]
  %s10 = inlined_call_operand.hbm [shape: f32[1,784], index: 10, kind: input, shape index: {}]
  %s11 = inlined_call_operand.hbm [shape: f32[300,784], index: 11, kind: output, shape index: {}]
  %s12 = sld [smem:[#allocation0]]
  $region94: #{autoencoder_forward.1} parent=0
    _
  %s14 = ssub.s32 1, %s12
  %s15 = scalar_select 0, %s14, %s12
  $region1: #{autoencoder_forward.1} parent=0
    #allocation2 [shape = 'u8[1089536]{0}', space=vmem, size = 0x10a000, scoped, tag = 'input window, operand 0, single buffered']
    #allocation3 [shape = 's32[1]{0}', space=sflag, size = 0x4, scoped, tag = 'scoped memory for autoencoder_forward.1']
    #allocation4 [shape = 's32[1]{0}', space=sflag, size = 0x4, scoped, tag = 'scoped memory for autoencoder_forward.1']
    #allocation5 [shape = 'u8[401408]{0}', space=vmem, size = 0x62000, scoped, tag = 'input window, operand 1, single buffered']
    #allocation6 [shape = 's32[1]{0}', space=sflag, size = 0x4, scoped, tag = 'scoped memory for autoencoder_forward.1']
    #allocation7 [shape = 'u8[1024]{0}', space=vmem, size = 0x400, scoped, tag = 'input window, operand 2, single buffered']
    #allocation8 [shape = 'u8[65536]{0}', space=vmem, size = 0x10000, scoped, tag = 'input window, operand 3, single buffered']
    #allocation9 [shape = 's32[1]{0}', space=sflag, size = 0x4, scoped, tag = 'scoped memory for autoencoder_forward.1']
    #allocation10 [shape = 'u8[512]{0}', space=vmem, size = 0x400, scoped, tag = 'input window, operand 4, single buffered']
    #allocation11 [shape = 'u8[32768]{0}', space=vmem, size = 0x8000, scoped, tag = 'input window, operand 5, single buffered']
    #allocation12 [shape = 's32[1]{0}', space=sflag, size = 0x4, scoped, tag = 'scoped memory for autoencoder_forward.1']
    #allocation13 [shape = 'u8[512]{0}', space=vmem, size = 0x400, scoped, tag = 'input window, operand 6, single buffered']
    #allocation14 [shape = 'u8[65536]{0}', space=vmem, size = 0x10000, scoped, tag = 'input window, operand 7, single buffered']
    #allocation15 [shape = 's32[1]{0}', space=sflag, size = 0x4, scoped, tag = 'scoped memory for autoencoder_forward.1']
    #allocation16 [shape = 'u8[1024]{0}', space=vmem, size = 0x400, scoped, tag = 'input window, operand 8, single buffered']
    #allocation17 [shape = 'u8[3584]{0}', space=vmem, size = 0x1000, scoped, tag = 'input window, operand 10, single buffered']
    #allocation18 [shape = 's32[1]{0}', space=sflag, size = 0x4, scoped, tag = 'scoped memory for autoencoder_forward.1']
    #allocation19 [shape = 'u8[1089536]{0}', space=vmem, size = 0x10a000, scoped, tag = 'output window, operand 0, single buffered']
    %16 = vsyncpa [#allocation3], 0
    %17 = vsyncpa [#allocation6], 0
    %18 = vsyncpa [#allocation9], 0
    %19 = vsyncpa [#allocation12], 0
    %20 = vsyncpa [#allocation15], 0
    %21 = vsyncpa [#allocation18], 0
    %22 = vsyncpa [#allocation4], 0
    // Predicated region
    $region2: #{autoencoder_forward.1} parent=1 // pred_check
      _
    $region3: #{autoencoder_forward.1} parent=1 // pred_check_branch
      %24 = sbr.rel (0) target = $region5
    $region4: #{autoencoder_forward.1} parent=1 // pred_region
      %26 = vsyncadd [#allocation3], 0
      %s27 = sshll.u32 %s0, 4
      %s28 = int_to_ptr.hbm [resolvable:$true] %s27
      %s29 = sshll.u32 [#allocation2], 4
      %s30 = int_to_ptr.vmem [resolvable:$true] %s29
      %35 = dma.hbm_to_vmem [thread:$0]  %s28, 34048, %s30, [#allocation3], 896, 896, 56
    $region5: #{autoencoder_forward.1} parent=1 // pred_fallthru
      _
    // Predicated region
    $region6: #{autoencoder_forward.1} parent=1 // pred_check
      _
    $region7: #{autoencoder_forward.1} parent=1 // pred_check_branch
      %37 = sbr.rel (0) target = $region9
    $region8: #{autoencoder_forward.1} parent=1 // pred_region
      %39 = vsyncadd [#allocation6], 0
      %s40 = sshll.u32 %s1, 4
      %s41 = int_to_ptr.hbm [resolvable:$true] %s40
      %s42 = sshll.u32 [#allocation5], 4
      %s43 = int_to_ptr.vmem [resolvable:$true] %s42
      %48 = dma.hbm_to_vmem [thread:$0]  %s41, 12544, %s43, [#allocation6], 128, 128, 8
    $region9: #{autoencoder_forward.1} parent=1 // pred_fallthru
      _
    // Predicated region
    $region10: #{autoencoder_forward.1} parent=1 // pred_check
      _
    $region11: #{autoencoder_forward.1} parent=1 // pred_check_branch
      %50 = sbr.rel (0) target = $region13
    $region12: #{autoencoder_forward.1} parent=1 // pred_region
      %52 = vsyncadd [#allocation6], 0
      %s54 = sshll.u32 %s2, 4
      %s55 = int_to_ptr.hbm [resolvable:$true] %s54
      %s56 = sshll.u32 [#allocation7], 4
      %s57 = int_to_ptr.vmem [resolvable:$true] %s56
      %59 = dma.hbm_to_vmem [thread:$0]  %s55, 32, %s57, [#allocation6]
    $region13: #{autoencoder_forward.1} parent=1 // pred_fallthru
      _
    // Predicated region
    $region14: #{autoencoder_forward.1} parent=1 // pred_check
      _
    $region15: #{autoencoder_forward.1} parent=1 // pred_check_branch
      %61 = sbr.rel (0) target = $region17
    $region16: #{autoencoder_forward.1} parent=1 // pred_region
      %63 = vsyncadd [#allocation9], 0
      %s64 = sshll.u32 %s3, 4
      %s65 = int_to_ptr.hbm [resolvable:$true] %s64
      %s66 = sshll.u32 [#allocation8], 4
      %s67 = int_to_ptr.vmem [resolvable:$true] %s66
      %72 = dma.hbm_to_vmem [thread:$0]  %s65, 2048, %s67, [#allocation9], 64, 64, 4
    $region17: #{autoencoder_forward.1} parent=1 // pred_fallthru
      _
    // Predicated region
    $region18: #{autoencoder_forward.1} parent=1 // pred_check
      _
    $region19: #{autoencoder_forward.1} parent=1 // pred_check_branch
      %74 = sbr.rel (0) target = $region21
    $region20: #{autoencoder_forward.1} parent=1 // pred_region
      %76 = vsyncadd [#allocation9], 0
      %s78 = sshll.u32 %s4, 4
      %s79 = int_to_ptr.hbm [resolvable:$true] %s78
      %s80 = sshll.u32 [#allocation10], 4
      %s81 = int_to_ptr.vmem [resolvable:$true] %s80
      %83 = dma.hbm_to_vmem [thread:$0]  %s79, 16, %s81, [#allocation9]
    $region21: #{autoencoder_forward.1} parent=1 // pred_fallthru
      _
    // Predicated region
    $region22: #{autoencoder_forward.1} parent=1 // pred_check
      _
    $region23: #{autoencoder_forward.1} parent=1 // pred_check_branch
      %85 = sbr.rel (0) target = $region25
    $region24: #{autoencoder_forward.1} parent=1 // pred_region
      %87 = vsyncadd [#allocation12], 0
      %s88 = sshll.u32 %s5, 4
      %s89 = int_to_ptr.hbm [resolvable:$true] %s88
      %s90 = sshll.u32 [#allocation11], 4
      %s91 = int_to_ptr.vmem [resolvable:$true] %s90
      %96 = dma.hbm_to_vmem [thread:$0]  %s89, 1024, %s91, [#allocation12], 64, 64, 4
    $region25: #{autoencoder_forward.1} parent=1 // pred_fallthru
      _
    // Predicated region
    $region26: #{autoencoder_forward.1} parent=1 // pred_check
      _
    $region27: #{autoencoder_forward.1} parent=1 // pred_check_branch
      %98 = sbr.rel (0) target = $region29
    $region28: #{autoencoder_forward.1} parent=1 // pred_region
      %100 = vsyncadd [#allocation12], 0
      %s102 = sshll.u32 %s6, 4
      %s103 = int_to_ptr.hbm [resolvable:$true] %s102
      %s104 = sshll.u32 [#allocation13], 4
      %s105 = int_to_ptr.vmem [resolvable:$true] %s104
      %107 = dma.hbm_to_vmem [thread:$0]  %s103, 16, %s105, [#allocation12]
    $region29: #{autoencoder_forward.1} parent=1 // pred_fallthru
      _
    // Predicated region
    $region30: #{autoencoder_forward.1} parent=1 // pred_check
      _
    $region31: #{autoencoder_forward.1} parent=1 // pred_check_branch
      %109 = sbr.rel (0) target = $region33
    $region32: #{autoencoder_forward.1} parent=1 // pred_region
      %111 = vsyncadd [#allocation15], 0
      %s112 = sshll.u32 %s7, 4
      %s113 = int_to_ptr.hbm [resolvable:$true] %s112
      %s114 = sshll.u32 [#allocation14], 4
      %s115 = int_to_ptr.vmem [resolvable:$true] %s114
      %120 = dma.hbm_to_vmem [thread:$0]  %s113, 2048, %s115, [#allocation15], 128, 128, 8
    $region33: #{autoencoder_forward.1} parent=1 // pred_fallthru
      _
    // Predicated region
    $region34: #{autoencoder_forward.1} parent=1 // pred_check
      _
    $region35: #{autoencoder_forward.1} parent=1 // pred_check_branch
      %122 = sbr.rel (0) target = $region37
    $region36: #{autoencoder_forward.1} parent=1 // pred_region
      %124 = vsyncadd [#allocation15], 0
      %s126 = sshll.u32 %s8, 4
      %s127 = int_to_ptr.hbm [resolvable:$true] %s126
      %s128 = sshll.u32 [#allocation16], 4
      %s129 = int_to_ptr.vmem [resolvable:$true] %s128
      %131 = dma.hbm_to_vmem [thread:$0]  %s127, 32, %s129, [#allocation15]
    $region37: #{autoencoder_forward.1} parent=1 // pred_fallthru
      _
    // Predicated region
    $region38: #{autoencoder_forward.1} parent=1 // pred_check
      _
    $region39: #{autoencoder_forward.1} parent=1 // pred_check_branch
      %133 = sbr.rel (0) target = $region41
    $region40: #{autoencoder_forward.1} parent=1 // pred_region
      _
    $region41: #{autoencoder_forward.1} parent=1 // pred_fallthru
      _
    // Predicated region
    $region42: #{autoencoder_forward.1} parent=1 // pred_check
      _
    $region43: #{autoencoder_forward.1} parent=1 // pred_check_branch
      %135 = sbr.rel (0) target = $region45
    $region44: #{autoencoder_forward.1} parent=1 // pred_region
      %137 = vsyncadd [#allocation18], 0
      %s139 = sshll.u32 %s10, 4
      %s140 = int_to_ptr.hbm [resolvable:$true] %s139
      %s141 = sshll.u32 [#allocation17], 4
      %s142 = int_to_ptr.vmem [resolvable:$true] %s141
      %144 = dma.hbm_to_vmem [thread:$0]  %s140, 112, %s142, [#allocation18]
    $region45: #{autoencoder_forward.1} parent=1 // pred_fallthru
      _
    // Predicated region
    $region46: #{autoencoder_forward.1} parent=1 // pred_check
      _
    $region47: #{autoencoder_forward.1} parent=1 // pred_check_branch
      %146 = sbr.rel (0) target = $region49
    $region48: #{autoencoder_forward.1} parent=1 // pred_region
      %148 = dma.done [#allocation3], 34048
    $region49: #{autoencoder_forward.1} parent=1 // pred_fallthru
      _
    // Predicated region
    $region50: #{autoencoder_forward.1} parent=1 // pred_check
      _
    $region51: #{autoencoder_forward.1} parent=1 // pred_check_branch
      %150 = sbr.rel (0) target = $region53
    $region52: #{autoencoder_forward.1} parent=1 // pred_region
      %152 = dma.done [#allocation6], 12544
    $region53: #{autoencoder_forward.1} parent=1 // pred_fallthru
      _
    // Predicated region
    $region54: #{autoencoder_forward.1} parent=1 // pred_check
      _
    $region55: #{autoencoder_forward.1} parent=1 // pred_check_branch
      %154 = sbr.rel (0) target = $region57
    $region56: #{autoencoder_forward.1} parent=1 // pred_region
      %156 = dma.done [#allocation6], 32
    $region57: #{autoencoder_forward.1} parent=1 // pred_fallthru
      _
    // Predicated region
    $region58: #{autoencoder_forward.1} parent=1 // pred_check
      _
    $region59: #{autoencoder_forward.1} parent=1 // pred_check_branch
      %158 = sbr.rel (0) target = $region61
    $region60: #{autoencoder_forward.1} parent=1 // pred_region
      %160 = dma.done [#allocation9], 2048
    $region61: #{autoencoder_forward.1} parent=1 // pred_fallthru
      _
    // Predicated region
    $region62: #{autoencoder_forward.1} parent=1 // pred_check
      _
    $region63: #{autoencoder_forward.1} parent=1 // pred_check_branch
      %162 = sbr.rel (0) target = $region65
    $region64: #{autoencoder_forward.1} parent=1 // pred_region
      %164 = dma.done [#allocation9], 16
    $region65: #{autoencoder_forward.1} parent=1 // pred_fallthru
      _
    // Predicated region
    $region66: #{autoencoder_forward.1} parent=1 // pred_check
      _
    $region67: #{autoencoder_forward.1} parent=1 // pred_check_branch
      %166 = sbr.rel (0) target = $region69
    $region68: #{autoencoder_forward.1} parent=1 // pred_region
      %168 = dma.done [#allocation12], 1024
    $region69: #{autoencoder_forward.1} parent=1 // pred_fallthru
      _
    // Predicated region
    $region70: #{autoencoder_forward.1} parent=1 // pred_check
      _
    $region71: #{autoencoder_forward.1} parent=1 // pred_check_branch
      %170 = sbr.rel (0) target = $region73
    $region72: #{autoencoder_forward.1} parent=1 // pred_region
      %172 = dma.done [#allocation12], 16
    $region73: #{autoencoder_forward.1} parent=1 // pred_fallthru
      _
    // Predicated region
    $region74: #{autoencoder_forward.1} parent=1 // pred_check
      _
    $region75: #{autoencoder_forward.1} parent=1 // pred_check_branch
      %174 = sbr.rel (0) target = $region77
    $region76: #{autoencoder_forward.1} parent=1 // pred_region
      %176 = dma.done [#allocation15], 2048
    $region77: #{autoencoder_forward.1} parent=1 // pred_fallthru
      _
    // Predicated region
    $region78: #{autoencoder_forward.1} parent=1 // pred_check
      _
    $region79: #{autoencoder_forward.1} parent=1 // pred_check_branch
      %178 = sbr.rel (0) target = $region81
    $region80: #{autoencoder_forward.1} parent=1 // pred_region
      %180 = dma.done [#allocation15], 32
    $region81: #{autoencoder_forward.1} parent=1 // pred_fallthru
      _
    // Predicated region
    $region82: #{autoencoder_forward.1} parent=1 // pred_check
      _
    $region83: #{autoencoder_forward.1} parent=1 // pred_check_branch
      %182 = sbr.rel (0) target = $region85
    $region84: #{autoencoder_forward.1} parent=1 // pred_region
      %184 = dma.done [#allocation18], 112
    $region85: #{autoencoder_forward.1} parent=1 // pred_fallthru
      _
    %v186 = vld [vmem:[#allocation2] sm:$0xff]
    %v187 = vld [vmem:[#allocation2 + $0x8] sm:$0xff]
    %v188 = vld [vmem:[#allocation2 + $0x10] sm:$0xff]
    %v189 = vld [vmem:[#allocation2 + $0x18] sm:$0xff]
    %v190 = vld [vmem:[#allocation2 + $0x20] sm:$0xff]
    %v191 = vld [vmem:[#allocation2 + $0x28] sm:$0xff]
    %v192 = vld [vmem:[#allocation2 + $0x30] sm:$0xff]
    %v193 = vld [vmem:[#allocation2 + $0x38] sm:$0xff]
    %v194 = vld [vmem:[#allocation2 + $0x40] sm:$0xff]
    %v195 = vld [vmem:[#allocation2 + $0x48] sm:$0xff]
    %v196 = vld [vmem:[#allocation2 + $0x50] sm:$0xff]
    %v197 = vld [vmem:[#allocation2 + $0x58] sm:$0xff]
    %v198 = vld [vmem:[#allocation2 + $0x60] sm:$0xff]
    %v199 = vld [vmem:[#allocation2 + $0x68] sm:$0xff]
    %v200 = vld [vmem:[#allocation2 + $0x70] sm:$0xff]
    %v201 = vld [vmem:[#allocation2 + $0x78] sm:$0xff]
    %v202 = vld [vmem:[#allocation2 + $0x80] sm:$0xff]
    %v203 = vld [vmem:[#allocation2 + $0x88] sm:$0xff]
    %v204 = vld [vmem:[#allocation2 + $0x90] sm:$0xff]
    %v205 = vld [vmem:[#allocation2 + $0x98] sm:$0xff]
    %v206 = vld [vmem:[#allocation2 + $0xa0] sm:$0xff]
    %v207 = vld [vmem:[#allocation2 + $0xa8] sm:$0xff]
    %v208 = vld [vmem:[#allocation2 + $0xb0] sm:$0xff]
    %v209 = vld [vmem:[#allocation2 + $0xb8] sm:$0xff]
    %v210 = vld [vmem:[#allocation2 + $0xc0] sm:$0xff]
    %v211 = vld [vmem:[#allocation2 + $0xc8] sm:$0xff]
    %v212 = vld [vmem:[#allocation2 + $0xd0] sm:$0xff]
    %v213 = vld [vmem:[#allocation2 + $0xd8] sm:$0xff]
    %v214 = vld [vmem:[#allocation2 + $0xe0] sm:$0xff]
    %v215 = vld [vmem:[#allocation2 + $0xe8] sm:$0xff]
    %v216 = vld [vmem:[#allocation2 + $0xf0] sm:$0xff]
    %v217 = vld [vmem:[#allocation2 + $0xf8] sm:$0xff]
    %v218 = vld [vmem:[#allocation2 + $0x100] sm:$0xff]
    %v219 = vld [vmem:[#allocation2 + $0x108] sm:$0xff]
    %v220 = vld [vmem:[#allocation2 + $0x110] sm:$0xff]
    %v221 = vld [vmem:[#allocation2 + $0x118] sm:$0xff]
    %v222 = vld [vmem:[#allocation2 + $0x120] sm:$0xff]
    %v223 = vld [vmem:[#allocation2 + $0x128] sm:$0xff]
    %v224 = vld [vmem:[#allocation2 + $0x130] sm:$0xff]
    %v225 = vld [vmem:[#allocation2 + $0x138] sm:$0xff]
    %v226 = vld [vmem:[#allocation2 + $0x140] sm:$0xff]
    %v227 = vld [vmem:[#allocation2 + $0x148] sm:$0xff]
    %v228 = vld [vmem:[#allocation2 + $0x150] sm:$0xff]
    %v229 = vld [vmem:[#allocation2 + $0x158] sm:$0xff]
    %v230 = vld [vmem:[#allocation2 + $0x160] sm:$0xff]
    %v231 = vld [vmem:[#allocation2 + $0x168] sm:$0xff]
    %v232 = vld [vmem:[#allocation2 + $0x170] sm:$0xff]
    %v233 = vld [vmem:[#allocation2 + $0x178] sm:$0xff]
    %v234 = vld [vmem:[#allocation2 + $0x180] sm:$0xff]
    %v235 = vld [vmem:[#allocation2 + $0x188] sm:$0xff]
    %v236 = vld [vmem:[#allocation2 + $0x190] sm:$0xff]
    %v237 = vld [vmem:[#allocation2 + $0x198] sm:$0xff]
    %v238 = vld [vmem:[#allocation2 + $0x1a0] sm:$0xff]
    %v239 = vld [vmem:[#allocation2 + $0x1a8] sm:$0xff]
    %v240 = vld [vmem:[#allocation2 + $0x1b0] sm:$0xff]
    %v241 = vld [vmem:[#allocation2 + $0x1b8] sm:$0xff]
    %v242 = vld [vmem:[#allocation2 + $0x1c0] sm:$0xff]
    %v243 = vld [vmem:[#allocation2 + $0x1c8] sm:$0xff]
    %v244 = vld [vmem:[#allocation2 + $0x1d0] sm:$0xff]
    %v245 = vld [vmem:[#allocation2 + $0x1d8] sm:$0xff]
    %v246 = vld [vmem:[#allocation2 + $0x1e0] sm:$0xff]
    %v247 = vld [vmem:[#allocation2 + $0x1e8] sm:$0xff]
    %v248 = vld [vmem:[#allocation2 + $0x1f0] sm:$0xff]
    %v249 = vld [vmem:[#allocation2 + $0x1f8] sm:$0xff]
    %v250 = vld [vmem:[#allocation2 + $0x200] sm:$0xff]
    %v251 = vld [vmem:[#allocation2 + $0x208] sm:$0xff]
    %v252 = vld [vmem:[#allocation2 + $0x210] sm:$0xff]
    %v253 = vld [vmem:[#allocation2 + $0x218] sm:$0xff]
    %v254 = vld [vmem:[#allocation2 + $0x220] sm:$0xff]
    %v255 = vld [vmem:[#allocation2 + $0x228] sm:$0xff]
    %v256 = vld [vmem:[#allocation2 + $0x230] sm:$0xff]
    %v257 = vld [vmem:[#allocation2 + $0x238] sm:$0xff]
    %v258 = vld [vmem:[#allocation2 + $0x240] sm:$0xff]
    %v259 = vld [vmem:[#allocation2 + $0x248] sm:$0xff]
    %v260 = vld [vmem:[#allocation2 + $0x250] sm:$0xff]
    %v261 = vld [vmem:[#allocation2 + $0x258] sm:$0xff]
    %v262 = vld [vmem:[#allocation2 + $0x260] sm:$0xff]
    %v263 = vld [vmem:[#allocation2 + $0x268] sm:$0xff]
    %v264 = vld [vmem:[#allocation2 + $0x270] sm:$0xff]
    %v265 = vld [vmem:[#allocation2 + $0x278] sm:$0xff]
    %v266 = vld [vmem:[#allocation2 + $0x280] sm:$0xff]
    %v267 = vld [vmem:[#allocation2 + $0x288] sm:$0xff]
    %v268 = vld [vmem:[#allocation2 + $0x290] sm:$0xff]
    %v269 = vld [vmem:[#allocation2 + $0x298] sm:$0xff]
    %v270 = vld [vmem:[#allocation2 + $0x2a0] sm:$0xff]
    %v271 = vld [vmem:[#allocation2 + $0x2a8] sm:$0xff]
    %v272 = vld [vmem:[#allocation2 + $0x2b0] sm:$0xff]
    %v273 = vld [vmem:[#allocation2 + $0x2b8] sm:$0xff]
    %v274 = vld [vmem:[#allocation2 + $0x2c0] sm:$0xff]
    %v275 = vld [vmem:[#allocation2 + $0x2c8] sm:$0xff]
    %v276 = vld [vmem:[#allocation2 + $0x2d0] sm:$0xff]
    %v277 = vld [vmem:[#allocation2 + $0x2d8] sm:$0xff]
    %v278 = vld [vmem:[#allocation2 + $0x2e0] sm:$0xff]
    %v279 = vld [vmem:[#allocation2 + $0x2e8] sm:$0xff]
    %v280 = vld [vmem:[#allocation2 + $0x2f0] sm:$0xff]
    %v281 = vld [vmem:[#allocation2 + $0x2f8] sm:$0xff]
    %v282 = vld [vmem:[#allocation2 + $0x300] sm:$0xff]
    %v283 = vld [vmem:[#allocation2 + $0x308] sm:$0xff]
    %v284 = vld [vmem:[#allocation2 + $0x310] sm:$0xff]
    %v285 = vld [vmem:[#allocation2 + $0x318] sm:$0xff]
    %v286 = vld [vmem:[#allocation2 + $0x320] sm:$0xff]
    %v287 = vld [vmem:[#allocation2 + $0x328] sm:$0xff]
    %v288 = vld [vmem:[#allocation2 + $0x330] sm:$0xff]
    %v289 = vld [vmem:[#allocation2 + $0x338] sm:$0xff]
    %v290 = vld [vmem:[#allocation2 + $0x340] sm:$0xff]
    %v291 = vld [vmem:[#allocation2 + $0x348] sm:$0xff]
    %v292 = vld [vmem:[#allocation2 + $0x350] sm:$0xff]
    %v293 = vld [vmem:[#allocation2 + $0x358] sm:$0xff]
    %v294 = vld [vmem:[#allocation2 + $0x360] sm:$0xff]
    %v295 = vld [vmem:[#allocation2 + $0x368] sm:$0xff]
    %v296 = vld [vmem:[#allocation2 + $0x370] sm:$0xff]
    %v297 = vld [vmem:[#allocation2 + $0x378] sm:$0xff]
    %v298 = vld [vmem:[#allocation2 + $0x380] sm:$0xff]
    %v299 = vld [vmem:[#allocation2 + $0x388] sm:$0xff]
    %v300 = vld [vmem:[#allocation2 + $0x390] sm:$0xff]
    %v301 = vld [vmem:[#allocation2 + $0x398] sm:$0xff]
    %v302 = vld [vmem:[#allocation2 + $0x3a0] sm:$0xff]
    %v303 = vld [vmem:[#allocation2 + $0x3a8] sm:$0xff]
    %v304 = vld [vmem:[#allocation2 + $0x3b0] sm:$0xff]
    %v305 = vld [vmem:[#allocation2 + $0x3b8] sm:$0xff]
    %v306 = vld [vmem:[#allocation2 + $0x3c0] sm:$0xff]
    %v307 = vld [vmem:[#allocation2 + $0x3c8] sm:$0xff]
    %v308 = vld [vmem:[#allocation2 + $0x3d0] sm:$0xff]
    %v309 = vld [vmem:[#allocation2 + $0x3d8] sm:$0xff]
    %v310 = vld [vmem:[#allocation2 + $0x3e0] sm:$0xff]
    %v311 = vld [vmem:[#allocation2 + $0x3e8] sm:$0xff]
    %v312 = vld [vmem:[#allocation2 + $0x3f0] sm:$0xff]
    %v313 = vld [vmem:[#allocation2 + $0x3f8] sm:$0xff]
    %v314 = vld [vmem:[#allocation2 + $0x400] sm:$0xff]
    %v315 = vld [vmem:[#allocation2 + $0x408] sm:$0xff]
    %v316 = vld [vmem:[#allocation2 + $0x410] sm:$0xff]
    %v317 = vld [vmem:[#allocation2 + $0x418] sm:$0xff]
    %v318 = vld [vmem:[#allocation2 + $0x420] sm:$0xff]
    %v319 = vld [vmem:[#allocation2 + $0x428] sm:$0xff]
    %v320 = vld [vmem:[#allocation2 + $0x430] sm:$0xff]
    %v321 = vld [vmem:[#allocation2 + $0x438] sm:$0xff]
    %v322 = vld [vmem:[#allocation2 + $0x440] sm:$0xff]
    %v323 = vld [vmem:[#allocation2 + $0x448] sm:$0xff]
    %v324 = vld [vmem:[#allocation2 + $0x450] sm:$0xff]
    %v325 = vld [vmem:[#allocation2 + $0x458] sm:$0xff]
    %v326 = vld [vmem:[#allocation2 + $0x460] sm:$0xff]
    %v327 = vld [vmem:[#allocation2 + $0x468] sm:$0xff]
    %v328 = vld [vmem:[#allocation2 + $0x470] sm:$0xff]
    %v329 = vld [vmem:[#allocation2 + $0x478] sm:$0xff]
    %v330 = vld [vmem:[#allocation2 + $0x480] sm:$0xff]
    %v331 = vld [vmem:[#allocation2 + $0x488] sm:$0xff]
    %v332 = vld [vmem:[#allocation2 + $0x490] sm:$0xff]
    %v333 = vld [vmem:[#allocation2 + $0x498] sm:$0xff]
    %v334 = vld [vmem:[#allocation2 + $0x4a0] sm:$0xff]
    %v335 = vld [vmem:[#allocation2 + $0x4a8] sm:$0xff]
    %v336 = vld [vmem:[#allocation2 + $0x4b0] sm:$0xff]
    %v337 = vld [vmem:[#allocation2 + $0x4b8] sm:$0xff]
    %v338 = vld [vmem:[#allocation2 + $0x4c0] sm:$0xff]
    %v339 = vld [vmem:[#allocation2 + $0x4c8] sm:$0xff]
    %v340 = vld [vmem:[#allocation2 + $0x4d0] sm:$0xff]
    %v341 = vld [vmem:[#allocation2 + $0x4d8] sm:$0xff]
    %v342 = vld [vmem:[#allocation2 + $0x4e0] sm:$0xff]
    %v343 = vld [vmem:[#allocation2 + $0x4e8] sm:$0xff]
    %v344 = vld [vmem:[#allocation2 + $0x4f0] sm:$0xff]
    %v345 = vld [vmem:[#allocation2 + $0x4f8] sm:$0xff]
    %v346 = vld [vmem:[#allocation2 + $0x500] sm:$0xff]
    %v347 = vld [vmem:[#allocation2 + $0x508] sm:$0xff]
    %v348 = vld [vmem:[#allocation2 + $0x510] sm:$0xff]
    %v349 = vld [vmem:[#allocation2 + $0x518] sm:$0xff]
    %v350 = vld [vmem:[#allocation2 + $0x520] sm:$0xff]
    %v351 = vld [vmem:[#allocation2 + $0x528] sm:$0xff]
    %v352 = vld [vmem:[#allocation2 + $0x530] sm:$0xff]
    %v353 = vld [vmem:[#allocation2 + $0x538] sm:$0xff]
    %v354 = vld [vmem:[#allocation2 + $0x540] sm:$0xff]
    %v355 = vld [vmem:[#allocation2 + $0x548] sm:$0xff]
    %v356 = vld [vmem:[#allocation2 + $0x550] sm:$0xff]
    %v357 = vld [vmem:[#allocation2 + $0x558] sm:$0xff]
    %v358 = vld [vmem:[#allocation2 + $0x560] sm:$0xff]
    %v359 = vld [vmem:[#allocation2 + $0x568] sm:$0xff]
    %v360 = vld [vmem:[#allocation2 + $0x570] sm:$0xff]
    %v361 = vld [vmem:[#allocation2 + $0x578] sm:$0xff]
    %v362 = vld [vmem:[#allocation2 + $0x580] sm:$0xff]
    %v363 = vld [vmem:[#allocation2 + $0x588] sm:$0xff]
    %v364 = vld [vmem:[#allocation2 + $0x590] sm:$0xff]
    %v365 = vld [vmem:[#allocation2 + $0x598] sm:$0xff]
    %v366 = vld [vmem:[#allocation2 + $0x5a0] sm:$0xff]
    %v367 = vld [vmem:[#allocation2 + $0x5a8] sm:$0xff]
    %v368 = vld [vmem:[#allocation2 + $0x5b0] sm:$0xff]
    %v369 = vld [vmem:[#allocation2 + $0x5b8] sm:$0xff]
    %v370 = vld [vmem:[#allocation2 + $0x5c0] sm:$0xff]
    %v371 = vld [vmem:[#allocation2 + $0x5c8] sm:$0xff]
    %v372 = vld [vmem:[#allocation2 + $0x5d0] sm:$0xff]
    %v373 = vld [vmem:[#allocation2 + $0x5d8] sm:$0xff]
    %v374 = vld [vmem:[#allocation2 + $0x5e0] sm:$0xff]
    %v375 = vld [vmem:[#allocation2 + $0x5e8] sm:$0xff]
    %v376 = vld [vmem:[#allocation2 + $0x5f0] sm:$0xff]
    %v377 = vld [vmem:[#allocation2 + $0x5f8] sm:$0xff]
    %v378 = vld [vmem:[#allocation2 + $0x600] sm:$0xff]
    %v379 = vld [vmem:[#allocation2 + $0x608] sm:$0xff]
    %v380 = vld [vmem:[#allocation2 + $0x610] sm:$0xff]
    %v381 = vld [vmem:[#allocation2 + $0x618] sm:$0xff]
    %v382 = vld [vmem:[#allocation2 + $0x620] sm:$0xff]
    %v383 = vld [vmem:[#allocation2 + $0x628] sm:$0xff]
    %v384 = vld [vmem:[#allocation2 + $0x630] sm:$0xff]
    %v385 = vld [vmem:[#allocation2 + $0x638] sm:$0xff]
    %v386 = vld [vmem:[#allocation2 + $0x640] sm:$0xff]
    %v387 = vld [vmem:[#allocation2 + $0x648] sm:$0xff]
    %v388 = vld [vmem:[#allocation2 + $0x650] sm:$0xff]
    %v389 = vld [vmem:[#allocation2 + $0x658] sm:$0xff]
    %v390 = vld [vmem:[#allocation2 + $0x660] sm:$0xff]
    %v391 = vld [vmem:[#allocation2 + $0x668] sm:$0xff]
    %v392 = vld [vmem:[#allocation2 + $0x670] sm:$0xff]
    %v393 = vld [vmem:[#allocation2 + $0x678] sm:$0xff]
    %v394 = vld [vmem:[#allocation2 + $0x680] sm:$0xff]
    %v395 = vld [vmem:[#allocation2 + $0x688] sm:$0xff]
    %v396 = vld [vmem:[#allocation2 + $0x690] sm:$0xff]
    %v397 = vld [vmem:[#allocation2 + $0x698] sm:$0xff]
    %v398 = vld [vmem:[#allocation2 + $0x6a0] sm:$0xff]
    %v399 = vld [vmem:[#allocation2 + $0x6a8] sm:$0xff]
    %v400 = vld [vmem:[#allocation2 + $0x6b0] sm:$0xff]
    %v401 = vld [vmem:[#allocation2 + $0x6b8] sm:$0xff]
    %v402 = vld [vmem:[#allocation2 + $0x6c0] sm:$0xff]
    %v403 = vld [vmem:[#allocation2 + $0x6c8] sm:$0xff]
    %v404 = vld [vmem:[#allocation2 + $0x6d0] sm:$0xff]
    %v405 = vld [vmem:[#allocation2 + $0x6d8] sm:$0xff]
    %v406 = vld [vmem:[#allocation2 + $0x6e0] sm:$0xff]
    %v407 = vld [vmem:[#allocation2 + $0x6e8] sm:$0xff]
    %v408 = vld [vmem:[#allocation2 + $0x6f0] sm:$0xff]
    %v409 = vld [vmem:[#allocation2 + $0x6f8] sm:$0xff]
    %v410 = vld [vmem:[#allocation2 + $0x700] sm:$0xff]
    %v411 = vld [vmem:[#allocation2 + $0x708] sm:$0xff]
    %v412 = vld [vmem:[#allocation2 + $0x710] sm:$0xff]
    %v413 = vld [vmem:[#allocation2 + $0x718] sm:$0xff]
    %v414 = vld [vmem:[#allocation2 + $0x720] sm:$0xff]
    %v415 = vld [vmem:[#allocation2 + $0x728] sm:$0xff]
    %v416 = vld [vmem:[#allocation2 + $0x730] sm:$0xff]
    %v417 = vld [vmem:[#allocation2 + $0x738] sm:$0xff]
    %v418 = vld [vmem:[#allocation2 + $0x740] sm:$0xff]
    %v419 = vld [vmem:[#allocation2 + $0x748] sm:$0xff]
    %v420 = vld [vmem:[#allocation2 + $0x750] sm:$0xff]
    %v421 = vld [vmem:[#allocation2 + $0x758] sm:$0xff]
    %v422 = vld [vmem:[#allocation2 + $0x760] sm:$0xff]
    %v423 = vld [vmem:[#allocation2 + $0x768] sm:$0xff]
    %v424 = vld [vmem:[#allocation2 + $0x770] sm:$0xff]
    %v425 = vld [vmem:[#allocation2 + $0x778] sm:$0xff]
    %v426 = vld [vmem:[#allocation2 + $0x780] sm:$0xff]
    %v427 = vld [vmem:[#allocation2 + $0x788] sm:$0xff]
    %v428 = vld [vmem:[#allocation2 + $0x790] sm:$0xff]
    %v429 = vld [vmem:[#allocation2 + $0x798] sm:$0xff]
    %v430 = vld [vmem:[#allocation2 + $0x7a0] sm:$0xff]
    %v431 = vld [vmem:[#allocation2 + $0x7a8] sm:$0xff]
    %v432 = vld [vmem:[#allocation2 + $0x7b0] sm:$0xff]
    %v433 = vld [vmem:[#allocation2 + $0x7b8] sm:$0xff]
    %v434 = vld [vmem:[#allocation2 + $0x7c0] sm:$0xff]
    %v435 = vld [vmem:[#allocation2 + $0x7c8] sm:$0xff]
    %v436 = vld [vmem:[#allocation2 + $0x7d0] sm:$0xff]
    %v437 = vld [vmem:[#allocation2 + $0x7d8] sm:$0xff]
    %v438 = vld [vmem:[#allocation2 + $0x7e0] sm:$0xff]
    %v439 = vld [vmem:[#allocation2 + $0x7e8] sm:$0xff]
    %v440 = vld [vmem:[#allocation2 + $0x7f0] sm:$0xff]
    %v441 = vld [vmem:[#allocation2 + $0x7f8] sm:$0xff]
    %v442 = vld [vmem:[#allocation2 + $0x800] sm:$0xff]
    %v443 = vld [vmem:[#allocation2 + $0x808] sm:$0xff]
    %v444 = vld [vmem:[#allocation2 + $0x810] sm:$0xff]
    %v445 = vld [vmem:[#allocation2 + $0x818] sm:$0xf]
    %v446 = vld [vmem:[#allocation2 + $0x820] sm:$0xf]
    %v447 = vld [vmem:[#allocation2 + $0x828] sm:$0xf]
    %v448 = vld [vmem:[#allocation2 + $0x830] sm:$0xf]
    %v449 = vld [vmem:[#allocation2 + $0x838] sm:$0xf]
    %v450 = vld [vmem:[#allocation2 + $0x840] sm:$0xf]
    %v451 = vld [vmem:[#allocation2 + $0x848] sm:$0xf]
    %v452 = vpack.c.bf16 %v193, %v186
    %v453 = vpack.c.bf16 %v194, %v187
    %v454 = vpack.c.bf16 %v195, %v188
    %v455 = vpack.c.bf16 %v196, %v189
    %v456 = vpack.c.bf16 %v197, %v190
    %v457 = vpack.c.bf16 %v198, %v191
    %v458 = vpack.c.bf16 %v199, %v192
    %v459 = vpack.c.bf16 %v207, %v200
    %v460 = vpack.c.bf16 %v208, %v201
    %v461 = vpack.c.bf16 %v209, %v202
    %v462 = vpack.c.bf16 %v210, %v203
    %v463 = vpack.c.bf16 %v211, %v204
    %v464 = vpack.c.bf16 %v212, %v205
    %v465 = vpack.c.bf16 %v213, %v206
    %v466 = vpack.c.bf16 %v221, %v214
    %v467 = vpack.c.bf16 %v222, %v215
    %v468 = vpack.c.bf16 %v223, %v216
    %v469 = vpack.c.bf16 %v224, %v217
    %v470 = vpack.c.bf16 %v225, %v218
    %v471 = vpack.c.bf16 %v226, %v219
    %v472 = vpack.c.bf16 %v227, %v220
    %v473 = vpack.c.bf16 %v235, %v228
    %v474 = vpack.c.bf16 %v236, %v229
    %v475 = vpack.c.bf16 %v237, %v230
    %v476 = vpack.c.bf16 %v238, %v231
    %v477 = vpack.c.bf16 %v239, %v232
    %v478 = vpack.c.bf16 %v240, %v233
    %v479 = vpack.c.bf16 %v241, %v234
    %v480 = vpack.c.bf16 %v249, %v242
    %v481 = vpack.c.bf16 %v250, %v243
    %v482 = vpack.c.bf16 %v251, %v244
    %v483 = vpack.c.bf16 %v252, %v245
    %v484 = vpack.c.bf16 %v253, %v246
    %v485 = vpack.c.bf16 %v254, %v247
    %v486 = vpack.c.bf16 %v255, %v248
    %v487 = vpack.c.bf16 %v263, %v256
    %v488 = vpack.c.bf16 %v264, %v257
    %v489 = vpack.c.bf16 %v265, %v258
    %v490 = vpack.c.bf16 %v266, %v259
    %v491 = vpack.c.bf16 %v267, %v260
    %v492 = vpack.c.bf16 %v268, %v261
    %v493 = vpack.c.bf16 %v269, %v262
    %v494 = vpack.c.bf16 %v277, %v270
    %v495 = vpack.c.bf16 %v278, %v271
    %v496 = vpack.c.bf16 %v279, %v272
    %v497 = vpack.c.bf16 %v280, %v273
    %v498 = vpack.c.bf16 %v281, %v274
    %v499 = vpack.c.bf16 %v282, %v275
    %v500 = vpack.c.bf16 %v283, %v276
    %v501 = vpack.c.bf16 %v291, %v284
    %v502 = vpack.c.bf16 %v292, %v285
    %v503 = vpack.c.bf16 %v293, %v286
    %v504 = vpack.c.bf16 %v294, %v287
    %v505 = vpack.c.bf16 %v295, %v288
    %v506 = vpack.c.bf16 %v296, %v289
    %v507 = vpack.c.bf16 %v297, %v290
    %v508 = vpack.c.bf16 %v305, %v298
    %v509 = vpack.c.bf16 %v306, %v299
    %v510 = vpack.c.bf16 %v307, %v300
    %v511 = vpack.c.bf16 %v308, %v301
    %v512 = vpack.c.bf16 %v309, %v302
    %v513 = vpack.c.bf16 %v310, %v303
    %v514 = vpack.c.bf16 %v311, %v304
    %v515 = vpack.c.bf16 %v319, %v312
    %v516 = vpack.c.bf16 %v320, %v313
    %v517 = vpack.c.bf16 %v321, %v314
    %v518 = vpack.c.bf16 %v322, %v315
    %v519 = vpack.c.bf16 %v323, %v316
    %v520 = vpack.c.bf16 %v324, %v317
    %v521 = vpack.c.bf16 %v325, %v318
    %v522 = vpack.c.bf16 %v333, %v326
    %v523 = vpack.c.bf16 %v334, %v327
    %v524 = vpack.c.bf16 %v335, %v328
    %v525 = vpack.c.bf16 %v336, %v329
    %v526 = vpack.c.bf16 %v337, %v330
    %v527 = vpack.c.bf16 %v338, %v331
    %v528 = vpack.c.bf16 %v339, %v332
    %v529 = vpack.c.bf16 %v347, %v340
    %v530 = vpack.c.bf16 %v348, %v341
    %v531 = vpack.c.bf16 %v349, %v342
    %v532 = vpack.c.bf16 %v350, %v343
    %v533 = vpack.c.bf16 %v351, %v344
    %v534 = vpack.c.bf16 %v352, %v345
    %v535 = vpack.c.bf16 %v353, %v346
    %v536 = vpack.c.bf16 %v361, %v354
    %v537 = vpack.c.bf16 %v362, %v355
    %v538 = vpack.c.bf16 %v363, %v356
    %v539 = vpack.c.bf16 %v364, %v357
    %v540 = vpack.c.bf16 %v365, %v358
    %v541 = vpack.c.bf16 %v366, %v359
    %v542 = vpack.c.bf16 %v367, %v360
    %v543 = vpack.c.bf16 %v375, %v368
    %v544 = vpack.c.bf16 %v376, %v369
    %v545 = vpack.c.bf16 %v377, %v370
    %v546 = vpack.c.bf16 %v378, %v371
    %v547 = vpack.c.bf16 %v379, %v372
    %v548 = vpack.c.bf16 %v380, %v373
    %v549 = vpack.c.bf16 %v381, %v374
    %v550 = vpack.c.bf16 %v389, %v382
    %v551 = vpack.c.bf16 %v390, %v383
    %v552 = vpack.c.bf16 %v391, %v384
    %v553 = vpack.c.bf16 %v392, %v385
    %v554 = vpack.c.bf16 %v393, %v386
    %v555 = vpack.c.bf16 %v394, %v387
    %v556 = vpack.c.bf16 %v395, %v388
    %v557 = vpack.c.bf16 %v403, %v396
    %v558 = vpack.c.bf16 %v404, %v397
    %v559 = vpack.c.bf16 %v405, %v398
    %v560 = vpack.c.bf16 %v406, %v399
    %v561 = vpack.c.bf16 %v407, %v400
    %v562 = vpack.c.bf16 %v408, %v401
    %v563 = vpack.c.bf16 %v409, %v402
    %v564 = vpack.c.bf16 %v417, %v410
    %v565 = vpack.c.bf16 %v418, %v411
    %v566 = vpack.c.bf16 %v419, %v412
    %v567 = vpack.c.bf16 %v420, %v413
    %v568 = vpack.c.bf16 %v421, %v414
    %v569 = vpack.c.bf16 %v422, %v415
    %v570 = vpack.c.bf16 %v423, %v416
    %v571 = vpack.c.bf16 %v431, %v424
    %v572 = vpack.c.bf16 %v432, %v425
    %v573 = vpack.c.bf16 %v433, %v426
    %v574 = vpack.c.bf16 %v434, %v427
    %v575 = vpack.c.bf16 %v435, %v428
    %v576 = vpack.c.bf16 %v436, %v429
    %v577 = vpack.c.bf16 %v437, %v430
    %v578 = vpack.c.bf16 %v445, %v438
    %v579 = vpack.c.bf16 %v446, %v439
    %v580 = vpack.c.bf16 %v447, %v440
    %v581 = vpack.c.bf16 %v448, %v441
    %v582 = vpack.c.bf16 %v449, %v442
    %v583 = vpack.c.bf16 %v450, %v443
    %v584 = vpack.c.bf16 %v451, %v444
    %v585 = vld [vmem:[#allocation5] sm:$0xff]
    %v586 = vld [vmem:[#allocation5 + $0x8] sm:$0xff]
    %v587 = vld [vmem:[#allocation5 + $0x10] sm:$0xff]
    %v588 = vld [vmem:[#allocation5 + $0x18] sm:$0xff]
    %v589 = vld [vmem:[#allocation5 + $0x20] sm:$0xff]
    %v590 = vld [vmem:[#allocation5 + $0x28] sm:$0xff]
    %v591 = vld [vmem:[#allocation5 + $0x30] sm:$0xff]
    %v592 = vld [vmem:[#allocation5 + $0x38] sm:$0xff]
    %v593 = vld [vmem:[#allocation5 + $0x40] sm:$0xff]
    %v594 = vld [vmem:[#allocation5 + $0x48] sm:$0xff]
    %v595 = vld [vmem:[#allocation5 + $0x50] sm:$0xff]
    %v596 = vld [vmem:[#allocation5 + $0x58] sm:$0xff]
    %v597 = vld [vmem:[#allocation5 + $0x60] sm:$0xff]
    %v598 = vld [vmem:[#allocation5 + $0x68] sm:$0xff]
    %v599 = vld [vmem:[#allocation5 + $0x70] sm:$0xff]
    %v600 = vld [vmem:[#allocation5 + $0x78] sm:$0xff]
    %v601 = vld [vmem:[#allocation5 + $0x80] sm:$0xff]
    %v602 = vld [vmem:[#allocation5 + $0x88] sm:$0xff]
    %v603 = vld [vmem:[#allocation5 + $0x90] sm:$0xff]
    %v604 = vld [vmem:[#allocation5 + $0x98] sm:$0xff]
    %v605 = vld [vmem:[#allocation5 + $0xa0] sm:$0xff]
    %v606 = vld [vmem:[#allocation5 + $0xa8] sm:$0xff]
    %v607 = vld [vmem:[#allocation5 + $0xb0] sm:$0xff]
    %v608 = vld [vmem:[#allocation5 + $0xb8] sm:$0xff]
    %v609 = vld [vmem:[#allocation5 + $0xc0] sm:$0xff]
    %v610 = vld [vmem:[#allocation5 + $0xc8] sm:$0xff]
    %v611 = vld [vmem:[#allocation5 + $0xd0] sm:$0xff]
    %v612 = vld [vmem:[#allocation5 + $0xd8] sm:$0xff]
    %v613 = vld [vmem:[#allocation5 + $0xe0] sm:$0xff]
    %v614 = vld [vmem:[#allocation5 + $0xe8] sm:$0xff]
    %v615 = vld [vmem:[#allocation5 + $0xf0] sm:$0xff]
    %v616 = vld [vmem:[#allocation5 + $0xf8] sm:$0xff]
    %v617 = vld [vmem:[#allocation5 + $0x100] sm:$0xff]
    %v618 = vld [vmem:[#allocation5 + $0x108] sm:$0xff]
    %v619 = vld [vmem:[#allocation5 + $0x110] sm:$0xff]
    %v620 = vld [vmem:[#allocation5 + $0x118] sm:$0xff]
    %v621 = vld [vmem:[#allocation5 + $0x120] sm:$0xff]
    %v622 = vld [vmem:[#allocation5 + $0x128] sm:$0xff]
    %v623 = vld [vmem:[#allocation5 + $0x130] sm:$0xff]
    %v624 = vld [vmem:[#allocation5 + $0x138] sm:$0xff]
    %v625 = vld [vmem:[#allocation5 + $0x140] sm:$0xff]
    %v626 = vld [vmem:[#allocation5 + $0x148] sm:$0xff]
    %v627 = vld [vmem:[#allocation5 + $0x150] sm:$0xff]
    %v628 = vld [vmem:[#allocation5 + $0x158] sm:$0xff]
    %v629 = vld [vmem:[#allocation5 + $0x160] sm:$0xff]
    %v630 = vld [vmem:[#allocation5 + $0x168] sm:$0xff]
    %v631 = vld [vmem:[#allocation5 + $0x170] sm:$0xff]
    %v632 = vld [vmem:[#allocation5 + $0x178] sm:$0xff]
    %v633 = vld [vmem:[#allocation5 + $0x180] sm:$0xff]
    %v634 = vld [vmem:[#allocation5 + $0x188] sm:$0xff]
    %v635 = vld [vmem:[#allocation5 + $0x190] sm:$0xff]
    %v636 = vld [vmem:[#allocation5 + $0x198] sm:$0xff]
    %v637 = vld [vmem:[#allocation5 + $0x1a0] sm:$0xff]
    %v638 = vld [vmem:[#allocation5 + $0x1a8] sm:$0xff]
    %v639 = vld [vmem:[#allocation5 + $0x1b0] sm:$0xff]
    %v640 = vld [vmem:[#allocation5 + $0x1b8] sm:$0xff]
    %v641 = vld [vmem:[#allocation5 + $0x1c0] sm:$0xff]
    %v642 = vld [vmem:[#allocation5 + $0x1c8] sm:$0xff]
    %v643 = vld [vmem:[#allocation5 + $0x1d0] sm:$0xff]
    %v644 = vld [vmem:[#allocation5 + $0x1d8] sm:$0xff]
    %v645 = vld [vmem:[#allocation5 + $0x1e0] sm:$0xff]
    %v646 = vld [vmem:[#allocation5 + $0x1e8] sm:$0xff]
    %v647 = vld [vmem:[#allocation5 + $0x1f0] sm:$0xff]
    %v648 = vld [vmem:[#allocation5 + $0x1f8] sm:$0xff]
    %v649 = vld [vmem:[#allocation5 + $0x200] sm:$0xff]
    %v650 = vld [vmem:[#allocation5 + $0x208] sm:$0xff]
    %v651 = vld [vmem:[#allocation5 + $0x210] sm:$0xff]
    %v652 = vld [vmem:[#allocation5 + $0x218] sm:$0xff]
    %v653 = vld [vmem:[#allocation5 + $0x220] sm:$0xff]
    %v654 = vld [vmem:[#allocation5 + $0x228] sm:$0xff]
    %v655 = vld [vmem:[#allocation5 + $0x230] sm:$0xff]
    %v656 = vld [vmem:[#allocation5 + $0x238] sm:$0xff]
    %v657 = vld [vmem:[#allocation5 + $0x240] sm:$0xff]
    %v658 = vld [vmem:[#allocation5 + $0x248] sm:$0xff]
    %v659 = vld [vmem:[#allocation5 + $0x250] sm:$0xff]
    %v660 = vld [vmem:[#allocation5 + $0x258] sm:$0xff]
    %v661 = vld [vmem:[#allocation5 + $0x260] sm:$0xff]
    %v662 = vld [vmem:[#allocation5 + $0x268] sm:$0xff]
    %v663 = vld [vmem:[#allocation5 + $0x270] sm:$0xff]
    %v664 = vld [vmem:[#allocation5 + $0x278] sm:$0xff]
    %v665 = vld [vmem:[#allocation5 + $0x280] sm:$0xff]
    %v666 = vld [vmem:[#allocation5 + $0x288] sm:$0xff]
    %v667 = vld [vmem:[#allocation5 + $0x290] sm:$0xff]
    %v668 = vld [vmem:[#allocation5 + $0x298] sm:$0xff]
    %v669 = vld [vmem:[#allocation5 + $0x2a0] sm:$0xff]
    %v670 = vld [vmem:[#allocation5 + $0x2a8] sm:$0xff]
    %v671 = vld [vmem:[#allocation5 + $0x2b0] sm:$0xff]
    %v672 = vld [vmem:[#allocation5 + $0x2b8] sm:$0xff]
    %v673 = vld [vmem:[#allocation5 + $0x2c0] sm:$0xff]
    %v674 = vld [vmem:[#allocation5 + $0x2c8] sm:$0xff]
    %v675 = vld [vmem:[#allocation5 + $0x2d0] sm:$0xff]
    %v676 = vld [vmem:[#allocation5 + $0x2d8] sm:$0xff]
    %v677 = vld [vmem:[#allocation5 + $0x2e0] sm:$0xff]
    %v678 = vld [vmem:[#allocation5 + $0x2e8] sm:$0xff]
    %v679 = vld [vmem:[#allocation5 + $0x2f0] sm:$0xff]
    %v680 = vld [vmem:[#allocation5 + $0x2f8] sm:$0xff]
    %v681 = vld [vmem:[#allocation5 + $0x300] sm:$0xff]
    %v682 = vld [vmem:[#allocation5 + $0x308] sm:$0xff]
    %v683 = vld [vmem:[#allocation7] sm:$0x3]
    %v685 = vperm.slane %v683, 0
    %v686 = vperm.slane %v683, 1
    %v787 = vunpack.c.l.b16 %v585
    %v788 = vunpack.c.h.b16 %v585
    %v789 = vunpack.c.l.b16 %v586
    %v790 = vunpack.c.h.b16 %v586
    %v791 = vunpack.c.l.b16 %v587
    %v792 = vunpack.c.h.b16 %v587
    %v793 = vunpack.c.l.b16 %v588
    %v794 = vunpack.c.h.b16 %v588
    %v795 = vunpack.c.l.b16 %v589
    %v796 = vunpack.c.h.b16 %v589
    %v797 = vunpack.c.l.b16 %v590
    %v798 = vunpack.c.h.b16 %v590
    %v799 = vunpack.c.l.b16 %v591
    %v800 = vunpack.c.h.b16 %v591
    %v801 = vunpack.c.l.b16 %v592
    %v802 = vunpack.c.h.b16 %v592
    %v803 = vunpack.c.l.b16 %v593
    %v804 = vunpack.c.h.b16 %v593
    %v805 = vunpack.c.l.b16 %v594
    %v806 = vunpack.c.h.b16 %v594
    %v807 = vunpack.c.l.b16 %v595
    %v808 = vunpack.c.h.b16 %v595
    %v809 = vunpack.c.l.b16 %v596
    %v810 = vunpack.c.h.b16 %v596
    %v811 = vunpack.c.l.b16 %v597
    %v812 = vunpack.c.h.b16 %v597
    %v813 = vunpack.c.l.b16 %v598
    %v814 = vunpack.c.h.b16 %v598
    %v815 = vunpack.c.l.b16 %v599
    %v816 = vunpack.c.h.b16 %v599
    %v817 = vunpack.c.l.b16 %v600
    %v818 = vunpack.c.h.b16 %v600
    %v819 = vunpack.c.l.b16 %v601
    %v820 = vunpack.c.h.b16 %v601
    %v821 = vunpack.c.l.b16 %v602
    %v822 = vunpack.c.h.b16 %v602
    %v823 = vunpack.c.l.b16 %v603
    %v824 = vunpack.c.h.b16 %v603
    %v825 = vunpack.c.l.b16 %v604
    %v826 = vunpack.c.h.b16 %v604
    %v827 = vunpack.c.l.b16 %v605
    %v828 = vunpack.c.h.b16 %v605
    %v829 = vunpack.c.l.b16 %v606
    %v830 = vunpack.c.h.b16 %v606
    %v831 = vunpack.c.l.b16 %v607
    %v832 = vunpack.c.h.b16 %v607
    %v833 = vunpack.c.l.b16 %v608
    %v834 = vunpack.c.h.b16 %v608
    %v835 = vunpack.c.l.b16 %v609
    %v836 = vunpack.c.h.b16 %v609
    %v837 = vunpack.c.l.b16 %v610
    %v838 = vunpack.c.h.b16 %v610
    %v839 = vunpack.c.l.b16 %v611
    %v840 = vunpack.c.h.b16 %v611
    %v841 = vunpack.c.l.b16 %v612
    %v842 = vunpack.c.h.b16 %v612
    %v843 = vunpack.c.l.b16 %v613
    %v844 = vunpack.c.h.b16 %v613
    %v845 = vunpack.c.l.b16 %v614
    %v846 = vunpack.c.h.b16 %v614
    %v847 = vunpack.c.l.b16 %v615
    %v848 = vunpack.c.h.b16 %v615
    %v849 = vunpack.c.l.b16 %v616
    %v850 = vunpack.c.h.b16 %v616
    %v851 = vunpack.c.l.b16 %v617
    %v852 = vunpack.c.h.b16 %v617
    %v853 = vunpack.c.l.b16 %v618
    %v854 = vunpack.c.h.b16 %v618
    %v855 = vunpack.c.l.b16 %v619
    %v856 = vunpack.c.h.b16 %v619
    %v857 = vunpack.c.l.b16 %v620
    %v858 = vunpack.c.h.b16 %v620
    %v859 = vunpack.c.l.b16 %v621
    %v860 = vunpack.c.h.b16 %v621
    %v861 = vunpack.c.l.b16 %v622
    %v862 = vunpack.c.h.b16 %v622
    %v863 = vunpack.c.l.b16 %v623
    %v864 = vunpack.c.h.b16 %v623
    %v865 = vunpack.c.l.b16 %v624
    %v866 = vunpack.c.h.b16 %v624
    %v867 = vunpack.c.l.b16 %v625
    %v868 = vunpack.c.h.b16 %v625
    %v869 = vunpack.c.l.b16 %v626
    %v870 = vunpack.c.h.b16 %v626
    %v871 = vunpack.c.l.b16 %v627
    %v872 = vunpack.c.h.b16 %v627
    %v873 = vunpack.c.l.b16 %v628
    %v874 = vunpack.c.h.b16 %v628
    %v875 = vunpack.c.l.b16 %v629
    %v876 = vunpack.c.h.b16 %v629
    %v877 = vunpack.c.l.b16 %v630
    %v878 = vunpack.c.h.b16 %v630
    %v879 = vunpack.c.l.b16 %v631
    %v880 = vunpack.c.h.b16 %v631
    %v881 = vunpack.c.l.b16 %v632
    %v882 = vunpack.c.h.b16 %v632
    %v883 = vunpack.c.l.b16 %v633
    %v884 = vunpack.c.h.b16 %v633
    %v885 = vunpack.c.l.b16 %v634
    %v886 = vunpack.c.h.b16 %v634
    %v887 = vunpack.c.l.b16 %v635
    %v888 = vunpack.c.h.b16 %v635
    %v889 = vunpack.c.l.b16 %v636
    %v890 = vunpack.c.h.b16 %v636
    %v891 = vunpack.c.l.b16 %v637
    %v892 = vunpack.c.h.b16 %v637
    %v893 = vunpack.c.l.b16 %v638
    %v894 = vunpack.c.h.b16 %v638
    %v895 = vunpack.c.l.b16 %v639
    %v896 = vunpack.c.h.b16 %v639
    %v897 = vunpack.c.l.b16 %v640
    %v898 = vunpack.c.h.b16 %v640
    %v899 = vunpack.c.l.b16 %v641
    %v900 = vunpack.c.h.b16 %v641
    %v901 = vunpack.c.l.b16 %v642
    %v902 = vunpack.c.h.b16 %v642
    %v903 = vunpack.c.l.b16 %v643
    %v904 = vunpack.c.h.b16 %v643
    %v905 = vunpack.c.l.b16 %v644
    %v906 = vunpack.c.h.b16 %v644
    %v907 = vunpack.c.l.b16 %v645
    %v908 = vunpack.c.h.b16 %v645
    %v909 = vunpack.c.l.b16 %v646
    %v910 = vunpack.c.h.b16 %v646
    %v911 = vunpack.c.l.b16 %v647
    %v912 = vunpack.c.h.b16 %v647
    %v913 = vunpack.c.l.b16 %v648
    %v914 = vunpack.c.h.b16 %v648
    %v915 = vunpack.c.l.b16 %v649
    %v916 = vunpack.c.h.b16 %v649
    %v917 = vunpack.c.l.b16 %v650
    %v918 = vunpack.c.h.b16 %v650
    %v919 = vunpack.c.l.b16 %v651
    %v920 = vunpack.c.h.b16 %v651
    %v921 = vunpack.c.l.b16 %v652
    %v922 = vunpack.c.h.b16 %v652
    %v923 = vunpack.c.l.b16 %v653
    %v924 = vunpack.c.h.b16 %v653
    %v925 = vunpack.c.l.b16 %v654
    %v926 = vunpack.c.h.b16 %v654
    %v927 = vunpack.c.l.b16 %v655
    %v928 = vunpack.c.h.b16 %v655
    %v929 = vunpack.c.l.b16 %v656
    %v930 = vunpack.c.h.b16 %v656
    %v931 = vunpack.c.l.b16 %v657
    %v932 = vunpack.c.h.b16 %v657
    %v933 = vunpack.c.l.b16 %v658
    %v934 = vunpack.c.h.b16 %v658
    %v935 = vunpack.c.l.b16 %v659
    %v936 = vunpack.c.h.b16 %v659
    %v937 = vunpack.c.l.b16 %v660
    %v938 = vunpack.c.h.b16 %v660
    %v939 = vunpack.c.l.b16 %v661
    %v940 = vunpack.c.h.b16 %v661
    %v941 = vunpack.c.l.b16 %v662
    %v942 = vunpack.c.h.b16 %v662
    %v943 = vunpack.c.l.b16 %v663
    %v944 = vunpack.c.h.b16 %v663
    %v945 = vunpack.c.l.b16 %v664
    %v946 = vunpack.c.h.b16 %v664
    %v947 = vunpack.c.l.b16 %v665
    %v948 = vunpack.c.h.b16 %v665
    %v949 = vunpack.c.l.b16 %v666
    %v950 = vunpack.c.h.b16 %v666
    %v951 = vunpack.c.l.b16 %v667
    %v952 = vunpack.c.h.b16 %v667
    %v953 = vunpack.c.l.b16 %v668
    %v954 = vunpack.c.h.b16 %v668
    %v955 = vunpack.c.l.b16 %v669
    %v956 = vunpack.c.h.b16 %v669
    %v957 = vunpack.c.l.b16 %v670
    %v958 = vunpack.c.h.b16 %v670
    %v959 = vunpack.c.l.b16 %v671
    %v960 = vunpack.c.h.b16 %v671
    %v961 = vunpack.c.l.b16 %v672
    %v962 = vunpack.c.h.b16 %v672
    %v963 = vunpack.c.l.b16 %v673
    %v964 = vunpack.c.h.b16 %v673
    %v965 = vunpack.c.l.b16 %v674
    %v966 = vunpack.c.h.b16 %v674
    %v967 = vunpack.c.l.b16 %v675
    %v968 = vunpack.c.h.b16 %v675
    %v969 = vunpack.c.l.b16 %v676
    %v970 = vunpack.c.h.b16 %v676
    %v971 = vunpack.c.l.b16 %v677
    %v972 = vunpack.c.h.b16 %v677
    %v973 = vunpack.c.l.b16 %v678
    %v974 = vunpack.c.h.b16 %v678
    %v975 = vunpack.c.l.b16 %v679
    %v976 = vunpack.c.h.b16 %v679
    %v977 = vunpack.c.l.b16 %v680
    %v978 = vunpack.c.h.b16 %v680
    %v979 = vunpack.c.l.b16 %v681
    %v980 = vunpack.c.h.b16 %v681
    %v981 = vunpack.c.l.b16 %v682
    %v982 = vunpack.c.h.b16 %v682
    %v983 = vpack.c.b16 %v789, %v787
    %v984 = vpack.c.b16 %v790, %v788
    %v985 = vpack.c.b16 %v793, %v791
    %v986 = vpack.c.b16 %v794, %v792
    %v987 = vpack.c.b16 %v797, %v795
    %v988 = vpack.c.b16 %v798, %v796
    %v989 = vpack.c.b16 %v801, %v799
    %v990 = vpack.c.b16 %v802, %v800
    %v991 = vpack.c.b16 %v805, %v803
    %v992 = vpack.c.b16 %v806, %v804
    %v993 = vpack.c.b16 %v809, %v807
    %v994 = vpack.c.b16 %v810, %v808
    %v995 = vpack.c.b16 %v813, %v811
    %v996 = vpack.c.b16 %v814, %v812
    %v997 = vpack.c.b16 %v817, %v815
    %v998 = vpack.c.b16 %v818, %v816
    %v999 = vpack.c.b16 %v821, %v819
    %v1000 = vpack.c.b16 %v822, %v820
    %v1001 = vpack.c.b16 %v825, %v823
    %v1002 = vpack.c.b16 %v826, %v824
    %v1003 = vpack.c.b16 %v829, %v827
    %v1004 = vpack.c.b16 %v830, %v828
    %v1005 = vpack.c.b16 %v833, %v831
    %v1006 = vpack.c.b16 %v834, %v832
    %v1007 = vpack.c.b16 %v837, %v835
    %v1008 = vpack.c.b16 %v838, %v836
    %v1009 = vpack.c.b16 %v841, %v839
    %v1010 = vpack.c.b16 %v842, %v840
    %v1011 = vpack.c.b16 %v845, %v843
    %v1012 = vpack.c.b16 %v846, %v844
    %v1013 = vpack.c.b16 %v849, %v847
    %v1014 = vpack.c.b16 %v850, %v848
    %v1015 = vpack.c.b16 %v853, %v851
    %v1016 = vpack.c.b16 %v854, %v852
    %v1017 = vpack.c.b16 %v857, %v855
    %v1018 = vpack.c.b16 %v858, %v856
    %v1019 = vpack.c.b16 %v861, %v859
    %v1020 = vpack.c.b16 %v862, %v860
    %v1021 = vpack.c.b16 %v865, %v863
    %v1022 = vpack.c.b16 %v866, %v864
    %v1023 = vpack.c.b16 %v869, %v867
    %v1024 = vpack.c.b16 %v870, %v868
    %v1025 = vpack.c.b16 %v873, %v871
    %v1026 = vpack.c.b16 %v874, %v872
    %v1027 = vpack.c.b16 %v877, %v875
    %v1028 = vpack.c.b16 %v878, %v876
    %v1029 = vpack.c.b16 %v881, %v879
    %v1030 = vpack.c.b16 %v882, %v880
    %v1031 = vpack.c.b16 %v885, %v883
    %v1032 = vpack.c.b16 %v886, %v884
    %v1033 = vpack.c.b16 %v889, %v887
    %v1034 = vpack.c.b16 %v890, %v888
    %v1035 = vpack.c.b16 %v893, %v891
    %v1036 = vpack.c.b16 %v894, %v892
    %v1037 = vpack.c.b16 %v897, %v895
    %v1038 = vpack.c.b16 %v898, %v896
    %v1039 = vpack.c.b16 %v901, %v899
    %v1040 = vpack.c.b16 %v902, %v900
    %v1041 = vpack.c.b16 %v905, %v903
    %v1042 = vpack.c.b16 %v906, %v904
    %v1043 = vpack.c.b16 %v909, %v907
    %v1044 = vpack.c.b16 %v910, %v908
    %v1045 = vpack.c.b16 %v913, %v911
    %v1046 = vpack.c.b16 %v914, %v912
    %v1047 = vpack.c.b16 %v917, %v915
    %v1048 = vpack.c.b16 %v918, %v916
    %v1049 = vpack.c.b16 %v921, %v919
    %v1050 = vpack.c.b16 %v922, %v920
    %v1051 = vpack.c.b16 %v925, %v923
    %v1052 = vpack.c.b16 %v926, %v924
    %v1053 = vpack.c.b16 %v929, %v927
    %v1054 = vpack.c.b16 %v930, %v928
    %v1055 = vpack.c.b16 %v933, %v931
    %v1056 = vpack.c.b16 %v934, %v932
    %v1057 = vpack.c.b16 %v937, %v935
    %v1058 = vpack.c.b16 %v938, %v936
    %v1059 = vpack.c.b16 %v941, %v939
    %v1060 = vpack.c.b16 %v942, %v940
    %v1061 = vpack.c.b16 %v945, %v943
    %v1062 = vpack.c.b16 %v946, %v944
    %v1063 = vpack.c.b16 %v949, %v947
    %v1064 = vpack.c.b16 %v950, %v948
    %v1065 = vpack.c.b16 %v953, %v951
    %v1066 = vpack.c.b16 %v954, %v952
    %v1067 = vpack.c.b16 %v957, %v955
    %v1068 = vpack.c.b16 %v958, %v956
    %v1069 = vpack.c.b16 %v961, %v959
    %v1070 = vpack.c.b16 %v962, %v960
    %v1071 = vpack.c.b16 %v965, %v963
    %v1072 = vpack.c.b16 %v966, %v964
    %v1073 = vpack.c.b16 %v969, %v967
    %v1074 = vpack.c.b16 %v970, %v968
    %v1075 = vpack.c.b16 %v973, %v971
    %v1076 = vpack.c.b16 %v974, %v972
    %v1077 = vpack.c.b16 %v977, %v975
    %v1078 = vpack.c.b16 %v978, %v976
    %v1079 = vpack.c.b16 %v981, %v979
    %v1080 = vpack.c.b16 %v982, %v980
    %vm1179 = vcmask 130048
    %v1181 = vsel %vm1179, %v458, 0
    %v1184 = vsel %vm1179, %v465, 0
    %v1187 = vsel %vm1179, %v472, 0
    %v1190 = vsel %vm1179, %v479, 0
    %v1193 = vsel %vm1179, %v486, 0
    %v1196 = vsel %vm1179, %v493, 0
    %v1199 = vsel %vm1179, %v500, 0
    %v1202 = vsel %vm1179, %v507, 0
    %v1205 = vsel %vm1179, %v514, 0
    %v1208 = vsel %vm1179, %v521, 0
    %v1211 = vsel %vm1179, %v528, 0
    %v1214 = vsel %vm1179, %v535, 0
    %v1217 = vsel %vm1179, %v542, 0
    %v1220 = vsel %vm1179, %v549, 0
    %v1223 = vsel %vm1179, %v556, 0
    %v1226 = vsel %vm1179, %v563, 0
    %v1229 = vsel %vm1179, %v570, 0
    %v1232 = vsel %vm1179, %v577, 0
    %v1235 = vsel %vm1179, %v584, 0
    %1237 = vmatpush.bf16.msra.mxu0 %v997
    %1238 = vmatpush.bf16.msra.mxu0 %v995
    %1239 = vmatpush.bf16.msra.mxu0 %v993
    %1240 = vmatpush.bf16.msra.mxu0 %v991
    %1241 = vmatpush.bf16.msra.mxu0 %v989
    %1242 = vmatpush.bf16.msra.mxu0 %v987
    %1243 = vmatpush.bf16.msra.mxu0 %v985
    %1244 = vmatpush.bf16.msra.mxu0 %v983
    %1245 = vmatmul.bf16.gmra.mxu0 %v452
    %v1246 = vpop.f32.mrf.mxu0
    %v1247 = vadd.f32 %v685, %v1246
    %v1248 = vpop.f32.mrf.mxu0
    %v1249 = vadd.f32 %v685, %v1248
    %1250 = vmatmul.bf16.gmra.mxu0 %v459
    %v1251 = vpop.f32.mrf.mxu0
    %v1252 = vadd.f32 %v685, %v1251
    %v1253 = vpop.f32.mrf.mxu0
    %v1254 = vadd.f32 %v685, %v1253
    %1255 = vmatmul.bf16.gmra.mxu0 %v466
    %v1256 = vpop.f32.mrf.mxu0
    %v1257 = vadd.f32 %v685, %v1256
    %v1258 = vpop.f32.mrf.mxu0
    %v1259 = vadd.f32 %v685, %v1258
    %1260 = vmatmul.bf16.gmra.mxu0 %v473
    %v1261 = vpop.f32.mrf.mxu0
    %v1262 = vadd.f32 %v685, %v1261
    %v1263 = vpop.f32.mrf.mxu0
    %v1264 = vadd.f32 %v685, %v1263
    %1265 = vmatmul.bf16.gmra.mxu0 %v480
    %v1266 = vpop.f32.mrf.mxu0
    %v1267 = vadd.f32 %v685, %v1266
    %v1268 = vpop.f32.mrf.mxu0
    %v1269 = vadd.f32 %v685, %v1268
    %1270 = vmatmul.bf16.gmra.mxu0 %v487
    %v1271 = vpop.f32.mrf.mxu0
    %v1272 = vadd.f32 %v685, %v1271
    %v1273 = vpop.f32.mrf.mxu0
    %v1274 = vadd.f32 %v685, %v1273
    %1275 = vmatmul.bf16.gmra.mxu0 %v494
    %v1276 = vpop.f32.mrf.mxu0
    %v1277 = vadd.f32 %v685, %v1276
    %v1278 = vpop.f32.mrf.mxu0
    %v1279 = vadd.f32 %v685, %v1278
    %1280 = vmatmul.bf16.gmra.mxu0 %v501
    %v1281 = vpop.f32.mrf.mxu0
    %v1282 = vadd.f32 %v685, %v1281
    %v1283 = vpop.f32.mrf.mxu0
    %v1284 = vadd.f32 %v685, %v1283
    %1285 = vmatmul.bf16.gmra.mxu0 %v508
    %v1286 = vpop.f32.mrf.mxu0
    %v1287 = vadd.f32 %v685, %v1286
    %v1288 = vpop.f32.mrf.mxu0
    %v1289 = vadd.f32 %v685, %v1288
    %1290 = vmatmul.bf16.gmra.mxu0 %v515
    %v1291 = vpop.f32.mrf.mxu0
    %v1292 = vadd.f32 %v685, %v1291
    %v1293 = vpop.f32.mrf.mxu0
    %v1294 = vadd.f32 %v685, %v1293
    %1295 = vmatmul.bf16.gmra.mxu0 %v522
    %v1296 = vpop.f32.mrf.mxu0
    %v1297 = vadd.f32 %v685, %v1296
    %v1298 = vpop.f32.mrf.mxu0
    %v1299 = vadd.f32 %v685, %v1298
    %1300 = vmatmul.bf16.gmra.mxu0 %v529
    %v1301 = vpop.f32.mrf.mxu0
    %v1302 = vadd.f32 %v685, %v1301
    %v1303 = vpop.f32.mrf.mxu0
    %v1304 = vadd.f32 %v685, %v1303
    %1305 = vmatmul.bf16.gmra.mxu0 %v536
    %v1306 = vpop.f32.mrf.mxu0
    %v1307 = vadd.f32 %v685, %v1306
    %v1308 = vpop.f32.mrf.mxu0
    %v1309 = vadd.f32 %v685, %v1308
    %1310 = vmatmul.bf16.gmra.mxu0 %v543
    %v1311 = vpop.f32.mrf.mxu0
    %v1312 = vadd.f32 %v685, %v1311
    %v1313 = vpop.f32.mrf.mxu0
    %v1314 = vadd.f32 %v685, %v1313
    %1315 = vmatmul.bf16.gmra.mxu0 %v550
    %v1316 = vpop.f32.mrf.mxu0
    %v1317 = vadd.f32 %v685, %v1316
    %v1318 = vpop.f32.mrf.mxu0
    %v1319 = vadd.f32 %v685, %v1318
    %1320 = vmatmul.bf16.gmra.mxu0 %v557
    %v1321 = vpop.f32.mrf.mxu0
    %v1322 = vadd.f32 %v685, %v1321
    %v1323 = vpop.f32.mrf.mxu0
    %v1324 = vadd.f32 %v685, %v1323
    %1325 = vmatmul.bf16.gmra.mxu0 %v564
    %v1326 = vpop.f32.mrf.mxu0
    %v1327 = vadd.f32 %v685, %v1326
    %v1328 = vpop.f32.mrf.mxu0
    %v1329 = vadd.f32 %v685, %v1328
    %1330 = vmatmul.bf16.gmra.mxu0 %v571
    %v1331 = vpop.f32.mrf.mxu0
    %v1332 = vadd.f32 %v685, %v1331
    %v1333 = vpop.f32.mrf.mxu0
    %v1334 = vadd.f32 %v685, %v1333
    %1335 = vmatmul.bf16.gmra.mxu0 %v578
    %v1336 = vpop.f32.mrf.mxu0
    %v1337 = vadd.f32 %v685, %v1336
    %v1338 = vpop.f32.mrf.mxu0
    %v1339 = vadd.f32 %v685, %v1338
    %1340 = vdwg.mxu0
    %1341 = vmatpush.bf16.msra.mxu0 %v1013
    %1342 = vmatpush.bf16.msra.mxu0 %v1011
    %1343 = vmatpush.bf16.msra.mxu0 %v1009
    %1344 = vmatpush.bf16.msra.mxu0 %v1007
    %1345 = vmatpush.bf16.msra.mxu0 %v1005
    %1346 = vmatpush.bf16.msra.mxu0 %v1003
    %1347 = vmatpush.bf16.msra.mxu0 %v1001
    %1348 = vmatpush.bf16.msra.mxu0 %v999
    %1349 = vmatmul.bf16.gmra.mxu0 %v453
    %v1350 = vpop.f32.mrf.mxu0
    %v1351 = vadd.f32 %v1247, %v1350
    %v1352 = vpop.f32.mrf.mxu0
    %v1353 = vadd.f32 %v1249, %v1352
    %1354 = vmatmul.bf16.gmra.mxu0 %v460
    %v1355 = vpop.f32.mrf.mxu0
    %v1356 = vadd.f32 %v1252, %v1355
    %v1357 = vpop.f32.mrf.mxu0
    %v1358 = vadd.f32 %v1254, %v1357
    %1359 = vmatmul.bf16.gmra.mxu0 %v467
    %v1360 = vpop.f32.mrf.mxu0
    %v1361 = vadd.f32 %v1257, %v1360
    %v1362 = vpop.f32.mrf.mxu0
    %v1363 = vadd.f32 %v1259, %v1362
    %1364 = vmatmul.bf16.gmra.mxu0 %v474
    %v1365 = vpop.f32.mrf.mxu0
    %v1366 = vadd.f32 %v1262, %v1365
    %v1367 = vpop.f32.mrf.mxu0
    %v1368 = vadd.f32 %v1264, %v1367
    %1369 = vmatmul.bf16.gmra.mxu0 %v481
    %v1370 = vpop.f32.mrf.mxu0
    %v1371 = vadd.f32 %v1267, %v1370
    %v1372 = vpop.f32.mrf.mxu0
    %v1373 = vadd.f32 %v1269, %v1372
    %1374 = vmatmul.bf16.gmra.mxu0 %v488
    %v1375 = vpop.f32.mrf.mxu0
    %v1376 = vadd.f32 %v1272, %v1375
    %v1377 = vpop.f32.mrf.mxu0
    %v1378 = vadd.f32 %v1274, %v1377
    %1379 = vmatmul.bf16.gmra.mxu0 %v495
    %v1380 = vpop.f32.mrf.mxu0
    %v1381 = vadd.f32 %v1277, %v1380
    %v1382 = vpop.f32.mrf.mxu0
    %v1383 = vadd.f32 %v1279, %v1382
    %1384 = vmatmul.bf16.gmra.mxu0 %v502
    %v1385 = vpop.f32.mrf.mxu0
    %v1386 = vadd.f32 %v1282, %v1385
    %v1387 = vpop.f32.mrf.mxu0
    %v1388 = vadd.f32 %v1284, %v1387
    %1389 = vmatmul.bf16.gmra.mxu0 %v509
    %v1390 = vpop.f32.mrf.mxu0
    %v1391 = vadd.f32 %v1287, %v1390
    %v1392 = vpop.f32.mrf.mxu0
    %v1393 = vadd.f32 %v1289, %v1392
    %1394 = vmatmul.bf16.gmra.mxu0 %v516
    %v1395 = vpop.f32.mrf.mxu0
    %v1396 = vadd.f32 %v1292, %v1395
    %v1397 = vpop.f32.mrf.mxu0
    %v1398 = vadd.f32 %v1294, %v1397
    %1399 = vmatmul.bf16.gmra.mxu0 %v523
    %v1400 = vpop.f32.mrf.mxu0
    %v1401 = vadd.f32 %v1297, %v1400
    %v1402 = vpop.f32.mrf.mxu0
    %v1403 = vadd.f32 %v1299, %v1402
    %1404 = vmatmul.bf16.gmra.mxu0 %v530
    %v1405 = vpop.f32.mrf.mxu0
    %v1406 = vadd.f32 %v1302, %v1405
    %v1407 = vpop.f32.mrf.mxu0
    %v1408 = vadd.f32 %v1304, %v1407
    %1409 = vmatmul.bf16.gmra.mxu0 %v537
    %v1410 = vpop.f32.mrf.mxu0
    %v1411 = vadd.f32 %v1307, %v1410
    %v1412 = vpop.f32.mrf.mxu0
    %v1413 = vadd.f32 %v1309, %v1412
    %1414 = vmatmul.bf16.gmra.mxu0 %v544
    %v1415 = vpop.f32.mrf.mxu0
    %v1416 = vadd.f32 %v1312, %v1415
    %v1417 = vpop.f32.mrf.mxu0
    %v1418 = vadd.f32 %v1314, %v1417
    %1419 = vmatmul.bf16.gmra.mxu0 %v551
    %v1420 = vpop.f32.mrf.mxu0
    %v1421 = vadd.f32 %v1317, %v1420
    %v1422 = vpop.f32.mrf.mxu0
    %v1423 = vadd.f32 %v1319, %v1422
    %1424 = vmatmul.bf16.gmra.mxu0 %v558
    %v1425 = vpop.f32.mrf.mxu0
    %v1426 = vadd.f32 %v1322, %v1425
    %v1427 = vpop.f32.mrf.mxu0
    %v1428 = vadd.f32 %v1324, %v1427
    %1429 = vmatmul.bf16.gmra.mxu0 %v565
    %v1430 = vpop.f32.mrf.mxu0
    %v1431 = vadd.f32 %v1327, %v1430
    %v1432 = vpop.f32.mrf.mxu0
    %v1433 = vadd.f32 %v1329, %v1432
    %1434 = vmatmul.bf16.gmra.mxu0 %v572
    %v1435 = vpop.f32.mrf.mxu0
    %v1436 = vadd.f32 %v1332, %v1435
    %v1437 = vpop.f32.mrf.mxu0
    %v1438 = vadd.f32 %v1334, %v1437
    %1439 = vmatmul.bf16.gmra.mxu0 %v579
    %v1440 = vpop.f32.mrf.mxu0
    %v1441 = vadd.f32 %v1337, %v1440
    %v1442 = vpop.f32.mrf.mxu0
    %v1443 = vadd.f32 %v1339, %v1442
    %1444 = vdwg.mxu0
    %1445 = vmatpush.bf16.msra.mxu0 %v1029
    %1446 = vmatpush.bf16.msra.mxu0 %v1027
    %1447 = vmatpush.bf16.msra.mxu0 %v1025
    %1448 = vmatpush.bf16.msra.mxu0 %v1023
    %1449 = vmatpush.bf16.msra.mxu0 %v1021
    %1450 = vmatpush.bf16.msra.mxu0 %v1019
    %1451 = vmatpush.bf16.msra.mxu0 %v1017
    %1452 = vmatpush.bf16.msra.mxu0 %v1015
    %1453 = vmatmul.bf16.gmra.mxu0 %v454
    %v1454 = vpop.f32.mrf.mxu0
    %v1455 = vadd.f32 %v1351, %v1454
    %v1456 = vpop.f32.mrf.mxu0
    %v1457 = vadd.f32 %v1353, %v1456
    %1458 = vmatmul.bf16.gmra.mxu0 %v461
    %v1459 = vpop.f32.mrf.mxu0
    %v1460 = vadd.f32 %v1356, %v1459
    %v1461 = vpop.f32.mrf.mxu0
    %v1462 = vadd.f32 %v1358, %v1461
    %1463 = vmatmul.bf16.gmra.mxu0 %v468
    %v1464 = vpop.f32.mrf.mxu0
    %v1465 = vadd.f32 %v1361, %v1464
    %v1466 = vpop.f32.mrf.mxu0
    %v1467 = vadd.f32 %v1363, %v1466
    %1468 = vmatmul.bf16.gmra.mxu0 %v475
    %v1469 = vpop.f32.mrf.mxu0
    %v1470 = vadd.f32 %v1366, %v1469
    %v1471 = vpop.f32.mrf.mxu0
    %v1472 = vadd.f32 %v1368, %v1471
    %1473 = vmatmul.bf16.gmra.mxu0 %v482
    %v1474 = vpop.f32.mrf.mxu0
    %v1475 = vadd.f32 %v1371, %v1474
    %v1476 = vpop.f32.mrf.mxu0
    %v1477 = vadd.f32 %v1373, %v1476
    %1478 = vmatmul.bf16.gmra.mxu0 %v489
    %v1479 = vpop.f32.mrf.mxu0
    %v1480 = vadd.f32 %v1376, %v1479
    %v1481 = vpop.f32.mrf.mxu0
    %v1482 = vadd.f32 %v1378, %v1481
    %1483 = vmatmul.bf16.gmra.mxu0 %v496
    %v1484 = vpop.f32.mrf.mxu0
    %v1485 = vadd.f32 %v1381, %v1484
    %v1486 = vpop.f32.mrf.mxu0
    %v1487 = vadd.f32 %v1383, %v1486
    %1488 = vmatmul.bf16.gmra.mxu0 %v503
    %v1489 = vpop.f32.mrf.mxu0
    %v1490 = vadd.f32 %v1386, %v1489
    %v1491 = vpop.f32.mrf.mxu0
    %v1492 = vadd.f32 %v1388, %v1491
    %1493 = vmatmul.bf16.gmra.mxu0 %v510
    %v1494 = vpop.f32.mrf.mxu0
    %v1495 = vadd.f32 %v1391, %v1494
    %v1496 = vpop.f32.mrf.mxu0
    %v1497 = vadd.f32 %v1393, %v1496
    %1498 = vmatmul.bf16.gmra.mxu0 %v517
    %v1499 = vpop.f32.mrf.mxu0
    %v1500 = vadd.f32 %v1396, %v1499
    %v1501 = vpop.f32.mrf.mxu0
    %v1502 = vadd.f32 %v1398, %v1501
    %1503 = vmatmul.bf16.gmra.mxu0 %v524
    %v1504 = vpop.f32.mrf.mxu0
    %v1505 = vadd.f32 %v1401, %v1504
    %v1506 = vpop.f32.mrf.mxu0
    %v1507 = vadd.f32 %v1403, %v1506
    %1508 = vmatmul.bf16.gmra.mxu0 %v531
    %v1509 = vpop.f32.mrf.mxu0
    %v1510 = vadd.f32 %v1406, %v1509
    %v1511 = vpop.f32.mrf.mxu0
    %v1512 = vadd.f32 %v1408, %v1511
    %1513 = vmatmul.bf16.gmra.mxu0 %v538
    %v1514 = vpop.f32.mrf.mxu0
    %v1515 = vadd.f32 %v1411, %v1514
    %v1516 = vpop.f32.mrf.mxu0
    %v1517 = vadd.f32 %v1413, %v1516
    %1518 = vmatmul.bf16.gmra.mxu0 %v545
    %v1519 = vpop.f32.mrf.mxu0
    %v1520 = vadd.f32 %v1416, %v1519
    %v1521 = vpop.f32.mrf.mxu0
    %v1522 = vadd.f32 %v1418, %v1521
    %1523 = vmatmul.bf16.gmra.mxu0 %v552
    %v1524 = vpop.f32.mrf.mxu0
    %v1525 = vadd.f32 %v1421, %v1524
    %v1526 = vpop.f32.mrf.mxu0
    %v1527 = vadd.f32 %v1423, %v1526
    %1528 = vmatmul.bf16.gmra.mxu0 %v559
    %v1529 = vpop.f32.mrf.mxu0
    %v1530 = vadd.f32 %v1426, %v1529
    %v1531 = vpop.f32.mrf.mxu0
    %v1532 = vadd.f32 %v1428, %v1531
    %1533 = vmatmul.bf16.gmra.mxu0 %v566
    %v1534 = vpop.f32.mrf.mxu0
    %v1535 = vadd.f32 %v1431, %v1534
    %v1536 = vpop.f32.mrf.mxu0
    %v1537 = vadd.f32 %v1433, %v1536
    %1538 = vmatmul.bf16.gmra.mxu0 %v573
    %v1539 = vpop.f32.mrf.mxu0
    %v1540 = vadd.f32 %v1436, %v1539
    %v1541 = vpop.f32.mrf.mxu0
    %v1542 = vadd.f32 %v1438, %v1541
    %1543 = vmatmul.bf16.gmra.mxu0 %v580
    %v1544 = vpop.f32.mrf.mxu0
    %v1545 = vadd.f32 %v1441, %v1544
    %v1546 = vpop.f32.mrf.mxu0
    %v1547 = vadd.f32 %v1443, %v1546
    %1548 = vdwg.mxu0
    %1549 = vmatpush.bf16.msra.mxu0 %v1045
    %1550 = vmatpush.bf16.msra.mxu0 %v1043
    %1551 = vmatpush.bf16.msra.mxu0 %v1041
    %1552 = vmatpush.bf16.msra.mxu0 %v1039
    %1553 = vmatpush.bf16.msra.mxu0 %v1037
    %1554 = vmatpush.bf16.msra.mxu0 %v1035
    %1555 = vmatpush.bf16.msra.mxu0 %v1033
    %1556 = vmatpush.bf16.msra.mxu0 %v1031
    %1557 = vmatmul.bf16.gmra.mxu0 %v455
    %v1558 = vpop.f32.mrf.mxu0
    %v1559 = vadd.f32 %v1455, %v1558
    %v1560 = vpop.f32.mrf.mxu0
    %v1561 = vadd.f32 %v1457, %v1560
    %1562 = vmatmul.bf16.gmra.mxu0 %v462
    %v1563 = vpop.f32.mrf.mxu0
    %v1564 = vadd.f32 %v1460, %v1563
    %v1565 = vpop.f32.mrf.mxu0
    %v1566 = vadd.f32 %v1462, %v1565
    %1567 = vmatmul.bf16.gmra.mxu0 %v469
    %v1568 = vpop.f32.mrf.mxu0
    %v1569 = vadd.f32 %v1465, %v1568
    %v1570 = vpop.f32.mrf.mxu0
    %v1571 = vadd.f32 %v1467, %v1570
    %1572 = vmatmul.bf16.gmra.mxu0 %v476
    %v1573 = vpop.f32.mrf.mxu0
    %v1574 = vadd.f32 %v1470, %v1573
    %v1575 = vpop.f32.mrf.mxu0
    %v1576 = vadd.f32 %v1472, %v1575
    %1577 = vmatmul.bf16.gmra.mxu0 %v483
    %v1578 = vpop.f32.mrf.mxu0
    %v1579 = vadd.f32 %v1475, %v1578
    %v1580 = vpop.f32.mrf.mxu0
    %v1581 = vadd.f32 %v1477, %v1580
    %1582 = vmatmul.bf16.gmra.mxu0 %v490
    %v1583 = vpop.f32.mrf.mxu0
    %v1584 = vadd.f32 %v1480, %v1583
    %v1585 = vpop.f32.mrf.mxu0
    %v1586 = vadd.f32 %v1482, %v1585
    %1587 = vmatmul.bf16.gmra.mxu0 %v497
    %v1588 = vpop.f32.mrf.mxu0
    %v1589 = vadd.f32 %v1485, %v1588
    %v1590 = vpop.f32.mrf.mxu0
    %v1591 = vadd.f32 %v1487, %v1590
    %1592 = vmatmul.bf16.gmra.mxu0 %v504
    %v1593 = vpop.f32.mrf.mxu0
    %v1594 = vadd.f32 %v1490, %v1593
    %v1595 = vpop.f32.mrf.mxu0
    %v1596 = vadd.f32 %v1492, %v1595
    %1597 = vmatmul.bf16.gmra.mxu0 %v511
    %v1598 = vpop.f32.mrf.mxu0
    %v1599 = vadd.f32 %v1495, %v1598
    %v1600 = vpop.f32.mrf.mxu0
    %v1601 = vadd.f32 %v1497, %v1600
    %1602 = vmatmul.bf16.gmra.mxu0 %v518
    %v1603 = vpop.f32.mrf.mxu0
    %v1604 = vadd.f32 %v1500, %v1603
    %v1605 = vpop.f32.mrf.mxu0
    %v1606 = vadd.f32 %v1502, %v1605
    %1607 = vmatmul.bf16.gmra.mxu0 %v525
    %v1608 = vpop.f32.mrf.mxu0
    %v1609 = vadd.f32 %v1505, %v1608
    %v1610 = vpop.f32.mrf.mxu0
    %v1611 = vadd.f32 %v1507, %v1610
    %1612 = vmatmul.bf16.gmra.mxu0 %v532
    %v1613 = vpop.f32.mrf.mxu0
    %v1614 = vadd.f32 %v1510, %v1613
    %v1615 = vpop.f32.mrf.mxu0
    %v1616 = vadd.f32 %v1512, %v1615
    %1617 = vmatmul.bf16.gmra.mxu0 %v539
    %v1618 = vpop.f32.mrf.mxu0
    %v1619 = vadd.f32 %v1515, %v1618
    %v1620 = vpop.f32.mrf.mxu0
    %v1621 = vadd.f32 %v1517, %v1620
    %1622 = vmatmul.bf16.gmra.mxu0 %v546
    %v1623 = vpop.f32.mrf.mxu0
    %v1624 = vadd.f32 %v1520, %v1623
    %v1625 = vpop.f32.mrf.mxu0
    %v1626 = vadd.f32 %v1522, %v1625
    %1627 = vmatmul.bf16.gmra.mxu0 %v553
    %v1628 = vpop.f32.mrf.mxu0
    %v1629 = vadd.f32 %v1525, %v1628
    %v1630 = vpop.f32.mrf.mxu0
    %v1631 = vadd.f32 %v1527, %v1630
    %1632 = vmatmul.bf16.gmra.mxu0 %v560
    %v1633 = vpop.f32.mrf.mxu0
    %v1634 = vadd.f32 %v1530, %v1633
    %v1635 = vpop.f32.mrf.mxu0
    %v1636 = vadd.f32 %v1532, %v1635
    %1637 = vmatmul.bf16.gmra.mxu0 %v567
    %v1638 = vpop.f32.mrf.mxu0
    %v1639 = vadd.f32 %v1535, %v1638
    %v1640 = vpop.f32.mrf.mxu0
    %v1641 = vadd.f32 %v1537, %v1640
    %1642 = vmatmul.bf16.gmra.mxu0 %v574
    %v1643 = vpop.f32.mrf.mxu0
    %v1644 = vadd.f32 %v1540, %v1643
    %v1645 = vpop.f32.mrf.mxu0
    %v1646 = vadd.f32 %v1542, %v1645
    %1647 = vmatmul.bf16.gmra.mxu0 %v581
    %v1648 = vpop.f32.mrf.mxu0
    %v1649 = vadd.f32 %v1545, %v1648
    %v1650 = vpop.f32.mrf.mxu0
    %v1651 = vadd.f32 %v1547, %v1650
    %1652 = vdwg.mxu0
    %1653 = vmatpush.bf16.msra.mxu0 %v1061
    %1654 = vmatpush.bf16.msra.mxu0 %v1059
    %1655 = vmatpush.bf16.msra.mxu0 %v1057
    %1656 = vmatpush.bf16.msra.mxu0 %v1055
    %1657 = vmatpush.bf16.msra.mxu0 %v1053
    %1658 = vmatpush.bf16.msra.mxu0 %v1051
    %1659 = vmatpush.bf16.msra.mxu0 %v1049
    %1660 = vmatpush.bf16.msra.mxu0 %v1047
    %1661 = vmatmul.bf16.gmra.mxu0 %v456
    %v1662 = vpop.f32.mrf.mxu0
    %v1663 = vadd.f32 %v1559, %v1662
    %v1664 = vpop.f32.mrf.mxu0
    %v1665 = vadd.f32 %v1561, %v1664
    %1666 = vmatmul.bf16.gmra.mxu0 %v463
    %v1667 = vpop.f32.mrf.mxu0
    %v1668 = vadd.f32 %v1564, %v1667
    %v1669 = vpop.f32.mrf.mxu0
    %v1670 = vadd.f32 %v1566, %v1669
    %1671 = vmatmul.bf16.gmra.mxu0 %v470
    %v1672 = vpop.f32.mrf.mxu0
    %v1673 = vadd.f32 %v1569, %v1672
    %v1674 = vpop.f32.mrf.mxu0
    %v1675 = vadd.f32 %v1571, %v1674
    %1676 = vmatmul.bf16.gmra.mxu0 %v477
    %v1677 = vpop.f32.mrf.mxu0
    %v1678 = vadd.f32 %v1574, %v1677
    %v1679 = vpop.f32.mrf.mxu0
    %v1680 = vadd.f32 %v1576, %v1679
    %1681 = vmatmul.bf16.gmra.mxu0 %v484
    %v1682 = vpop.f32.mrf.mxu0
    %v1683 = vadd.f32 %v1579, %v1682
    %v1684 = vpop.f32.mrf.mxu0
    %v1685 = vadd.f32 %v1581, %v1684
    %1686 = vmatmul.bf16.gmra.mxu0 %v491
    %v1687 = vpop.f32.mrf.mxu0
    %v1688 = vadd.f32 %v1584, %v1687
    %v1689 = vpop.f32.mrf.mxu0
    %v1690 = vadd.f32 %v1586, %v1689
    %1691 = vmatmul.bf16.gmra.mxu0 %v498
    %v1692 = vpop.f32.mrf.mxu0
    %v1693 = vadd.f32 %v1589, %v1692
    %v1694 = vpop.f32.mrf.mxu0
    %v1695 = vadd.f32 %v1591, %v1694
    %1696 = vmatmul.bf16.gmra.mxu0 %v505
    %v1697 = vpop.f32.mrf.mxu0
    %v1698 = vadd.f32 %v1594, %v1697
    %v1699 = vpop.f32.mrf.mxu0
    %v1700 = vadd.f32 %v1596, %v1699
    %1701 = vmatmul.bf16.gmra.mxu0 %v512
    %v1702 = vpop.f32.mrf.mxu0
    %v1703 = vadd.f32 %v1599, %v1702
    %v1704 = vpop.f32.mrf.mxu0
    %v1705 = vadd.f32 %v1601, %v1704
    %1706 = vmatmul.bf16.gmra.mxu0 %v519
    %v1707 = vpop.f32.mrf.mxu0
    %v1708 = vadd.f32 %v1604, %v1707
    %v1709 = vpop.f32.mrf.mxu0
    %v1710 = vadd.f32 %v1606, %v1709
    %1711 = vmatmul.bf16.gmra.mxu0 %v526
    %v1712 = vpop.f32.mrf.mxu0
    %v1713 = vadd.f32 %v1609, %v1712
    %v1714 = vpop.f32.mrf.mxu0
    %v1715 = vadd.f32 %v1611, %v1714
    %1716 = vmatmul.bf16.gmra.mxu0 %v533
    %v1717 = vpop.f32.mrf.mxu0
    %v1718 = vadd.f32 %v1614, %v1717
    %v1719 = vpop.f32.mrf.mxu0
    %v1720 = vadd.f32 %v1616, %v1719
    %1721 = vmatmul.bf16.gmra.mxu0 %v540
    %v1722 = vpop.f32.mrf.mxu0
    %v1723 = vadd.f32 %v1619, %v1722
    %v1724 = vpop.f32.mrf.mxu0
    %v1725 = vadd.f32 %v1621, %v1724
    %1726 = vmatmul.bf16.gmra.mxu0 %v547
    %v1727 = vpop.f32.mrf.mxu0
    %v1728 = vadd.f32 %v1624, %v1727
    %v1729 = vpop.f32.mrf.mxu0
    %v1730 = vadd.f32 %v1626, %v1729
    %1731 = vmatmul.bf16.gmra.mxu0 %v554
    %v1732 = vpop.f32.mrf.mxu0
    %v1733 = vadd.f32 %v1629, %v1732
    %v1734 = vpop.f32.mrf.mxu0
    %v1735 = vadd.f32 %v1631, %v1734
    %1736 = vmatmul.bf16.gmra.mxu0 %v561
    %v1737 = vpop.f32.mrf.mxu0
    %v1738 = vadd.f32 %v1634, %v1737
    %v1739 = vpop.f32.mrf.mxu0
    %v1740 = vadd.f32 %v1636, %v1739
    %1741 = vmatmul.bf16.gmra.mxu0 %v568
    %v1742 = vpop.f32.mrf.mxu0
    %v1743 = vadd.f32 %v1639, %v1742
    %v1744 = vpop.f32.mrf.mxu0
    %v1745 = vadd.f32 %v1641, %v1744
    %1746 = vmatmul.bf16.gmra.mxu0 %v575
    %v1747 = vpop.f32.mrf.mxu0
    %v1748 = vadd.f32 %v1644, %v1747
    %v1749 = vpop.f32.mrf.mxu0
    %v1750 = vadd.f32 %v1646, %v1749
    %1751 = vmatmul.bf16.gmra.mxu0 %v582
    %v1752 = vpop.f32.mrf.mxu0
    %v1753 = vadd.f32 %v1649, %v1752
    %v1754 = vpop.f32.mrf.mxu0
    %v1755 = vadd.f32 %v1651, %v1754
    %1756 = vdwg.mxu0
    %1757 = vmatpush.bf16.msra.mxu0 %v1077
    %1758 = vmatpush.bf16.msra.mxu0 %v1075
    %1759 = vmatpush.bf16.msra.mxu0 %v1073
    %1760 = vmatpush.bf16.msra.mxu0 %v1071
    %1761 = vmatpush.bf16.msra.mxu0 %v1069
    %1762 = vmatpush.bf16.msra.mxu0 %v1067
    %1763 = vmatpush.bf16.msra.mxu0 %v1065
    %1764 = vmatpush.bf16.msra.mxu0 %v1063
    %1765 = vmatmul.bf16.gmra.mxu0 %v457
    %v1766 = vpop.f32.mrf.mxu0
    %v1767 = vadd.f32 %v1663, %v1766
    %v1768 = vpop.f32.mrf.mxu0
    %v1769 = vadd.f32 %v1665, %v1768
    %1770 = vmatmul.bf16.gmra.mxu0 %v464
    %v1771 = vpop.f32.mrf.mxu0
    %v1772 = vadd.f32 %v1668, %v1771
    %v1773 = vpop.f32.mrf.mxu0
    %v1774 = vadd.f32 %v1670, %v1773
    %1775 = vmatmul.bf16.gmra.mxu0 %v471
    %v1776 = vpop.f32.mrf.mxu0
    %v1777 = vadd.f32 %v1673, %v1776
    %v1778 = vpop.f32.mrf.mxu0
    %v1779 = vadd.f32 %v1675, %v1778
    %1780 = vmatmul.bf16.gmra.mxu0 %v478
    %v1781 = vpop.f32.mrf.mxu0
    %v1782 = vadd.f32 %v1678, %v1781
    %v1783 = vpop.f32.mrf.mxu0
    %v1784 = vadd.f32 %v1680, %v1783
    %1785 = vmatmul.bf16.gmra.mxu0 %v485
    %v1786 = vpop.f32.mrf.mxu0
    %v1787 = vadd.f32 %v1683, %v1786
    %v1788 = vpop.f32.mrf.mxu0
    %v1789 = vadd.f32 %v1685, %v1788
    %1790 = vmatmul.bf16.gmra.mxu0 %v492
    %v1791 = vpop.f32.mrf.mxu0
    %v1792 = vadd.f32 %v1688, %v1791
    %v1793 = vpop.f32.mrf.mxu0
    %v1794 = vadd.f32 %v1690, %v1793
    %1795 = vmatmul.bf16.gmra.mxu0 %v499
    %v1796 = vpop.f32.mrf.mxu0
    %v1797 = vadd.f32 %v1693, %v1796
    %v1798 = vpop.f32.mrf.mxu0
    %v1799 = vadd.f32 %v1695, %v1798
    %1800 = vmatmul.bf16.gmra.mxu0 %v506
    %v1801 = vpop.f32.mrf.mxu0
    %v1802 = vadd.f32 %v1698, %v1801
    %v1803 = vpop.f32.mrf.mxu0
    %v1804 = vadd.f32 %v1700, %v1803
    %1805 = vmatmul.bf16.gmra.mxu0 %v513
    %v1806 = vpop.f32.mrf.mxu0
    %v1807 = vadd.f32 %v1703, %v1806
    %v1808 = vpop.f32.mrf.mxu0
    %v1809 = vadd.f32 %v1705, %v1808
    %1810 = vmatmul.bf16.gmra.mxu0 %v520
    %v1811 = vpop.f32.mrf.mxu0
    %v1812 = vadd.f32 %v1708, %v1811
    %v1813 = vpop.f32.mrf.mxu0
    %v1814 = vadd.f32 %v1710, %v1813
    %1815 = vmatmul.bf16.gmra.mxu0 %v527
    %v1816 = vpop.f32.mrf.mxu0
    %v1817 = vadd.f32 %v1713, %v1816
    %v1818 = vpop.f32.mrf.mxu0
    %v1819 = vadd.f32 %v1715, %v1818
    %1820 = vmatmul.bf16.gmra.mxu0 %v534
    %v1821 = vpop.f32.mrf.mxu0
    %v1822 = vadd.f32 %v1718, %v1821
    %v1823 = vpop.f32.mrf.mxu0
    %v1824 = vadd.f32 %v1720, %v1823
    %1825 = vmatmul.bf16.gmra.mxu0 %v541
    %v1826 = vpop.f32.mrf.mxu0
    %v1827 = vadd.f32 %v1723, %v1826
    %v1828 = vpop.f32.mrf.mxu0
    %v1829 = vadd.f32 %v1725, %v1828
    %1830 = vmatmul.bf16.gmra.mxu0 %v548
    %v1831 = vpop.f32.mrf.mxu0
    %v1832 = vadd.f32 %v1728, %v1831
    %v1833 = vpop.f32.mrf.mxu0
    %v1834 = vadd.f32 %v1730, %v1833
    %1835 = vmatmul.bf16.gmra.mxu0 %v555
    %v1836 = vpop.f32.mrf.mxu0
    %v1837 = vadd.f32 %v1733, %v1836
    %v1838 = vpop.f32.mrf.mxu0
    %v1839 = vadd.f32 %v1735, %v1838
    %1840 = vmatmul.bf16.gmra.mxu0 %v562
    %v1841 = vpop.f32.mrf.mxu0
    %v1842 = vadd.f32 %v1738, %v1841
    %v1843 = vpop.f32.mrf.mxu0
    %v1844 = vadd.f32 %v1740, %v1843
    %1845 = vmatmul.bf16.gmra.mxu0 %v569
    %v1846 = vpop.f32.mrf.mxu0
    %v1847 = vadd.f32 %v1743, %v1846
    %v1848 = vpop.f32.mrf.mxu0
    %v1849 = vadd.f32 %v1745, %v1848
    %1850 = vmatmul.bf16.gmra.mxu0 %v576
    %v1851 = vpop.f32.mrf.mxu0
    %v1852 = vadd.f32 %v1748, %v1851
    %v1853 = vpop.f32.mrf.mxu0
    %v1854 = vadd.f32 %v1750, %v1853
    %1855 = vmatmul.bf16.gmra.mxu0 %v583
    %v1856 = vpop.f32.mrf.mxu0
    %v1857 = vadd.f32 %v1753, %v1856
    %v1858 = vpop.f32.mrf.mxu0
    %v1859 = vadd.f32 %v1755, %v1858
    %1860 = vdwg.mxu0
    %1861 = vmatpush.bf16.msra.mxu0 0
    %1862 = vmatpush.bf16.msra.mxu0 0
    %1863 = vmatpush.bf16.msra.mxu0 0
    %1864 = vmatpush.bf16.msra.mxu0 0
    %1865 = vmatpush.bf16.msra.mxu0 0
    %1866 = vmatpush.bf16.msra.mxu0 0
    %1867 = vmatpush.bf16.msra.mxu0 0
    %1868 = vmatpush.bf16.msra.mxu0 %v1079
    %1869 = vmatmul.bf16.gmra.mxu0 %v1181
    %v1870 = vpop.f32.mrf.mxu0
    %v1871 = vadd.f32 %v1767, %v1870
    %v1872 = vpop.f32.mrf.mxu0
    %v1873 = vadd.f32 %v1769, %v1872
    %1874 = vmatmul.bf16.gmra.mxu0 %v1184
    %v1875 = vpop.f32.mrf.mxu0
    %v1876 = vadd.f32 %v1772, %v1875
    %v1877 = vpop.f32.mrf.mxu0
    %v1878 = vadd.f32 %v1774, %v1877
    %1879 = vmatmul.bf16.gmra.mxu0 %v1187
    %v1880 = vpop.f32.mrf.mxu0
    %v1881 = vadd.f32 %v1777, %v1880
    %v1882 = vpop.f32.mrf.mxu0
    %v1883 = vadd.f32 %v1779, %v1882
    %1884 = vmatmul.bf16.gmra.mxu0 %v1190
    %v1885 = vpop.f32.mrf.mxu0
    %v1886 = vadd.f32 %v1782, %v1885
    %v1887 = vpop.f32.mrf.mxu0
    %v1888 = vadd.f32 %v1784, %v1887
    %1889 = vmatmul.bf16.gmra.mxu0 %v1193
    %v1890 = vpop.f32.mrf.mxu0
    %v1891 = vadd.f32 %v1787, %v1890
    %v1892 = vpop.f32.mrf.mxu0
    %v1893 = vadd.f32 %v1789, %v1892
    %1894 = vmatmul.bf16.gmra.mxu0 %v1196
    %v1895 = vpop.f32.mrf.mxu0
    %v1896 = vadd.f32 %v1792, %v1895
    %v1897 = vpop.f32.mrf.mxu0
    %v1898 = vadd.f32 %v1794, %v1897
    %1899 = vmatmul.bf16.gmra.mxu0 %v1199
    %v1900 = vpop.f32.mrf.mxu0
    %v1901 = vadd.f32 %v1797, %v1900
    %v1902 = vpop.f32.mrf.mxu0
    %v1903 = vadd.f32 %v1799, %v1902
    %1904 = vmatmul.bf16.gmra.mxu0 %v1202
    %v1905 = vpop.f32.mrf.mxu0
    %v1906 = vadd.f32 %v1802, %v1905
    %v1907 = vpop.f32.mrf.mxu0
    %v1908 = vadd.f32 %v1804, %v1907
    %1909 = vmatmul.bf16.gmra.mxu0 %v1205
    %v1910 = vpop.f32.mrf.mxu0
    %v1911 = vadd.f32 %v1807, %v1910
    %v1912 = vpop.f32.mrf.mxu0
    %v1913 = vadd.f32 %v1809, %v1912
    %1914 = vmatmul.bf16.gmra.mxu0 %v1208
    %v1915 = vpop.f32.mrf.mxu0
    %v1916 = vadd.f32 %v1812, %v1915
    %v1917 = vpop.f32.mrf.mxu0
    %v1918 = vadd.f32 %v1814, %v1917
    %1919 = vmatmul.bf16.gmra.mxu0 %v1211
    %v1920 = vpop.f32.mrf.mxu0
    %v1921 = vadd.f32 %v1817, %v1920
    %v1922 = vpop.f32.mrf.mxu0
    %v1923 = vadd.f32 %v1819, %v1922
    %1924 = vmatmul.bf16.gmra.mxu0 %v1214
    %v1925 = vpop.f32.mrf.mxu0
    %v1926 = vadd.f32 %v1822, %v1925
    %v1927 = vpop.f32.mrf.mxu0
    %v1928 = vadd.f32 %v1824, %v1927
    %1929 = vmatmul.bf16.gmra.mxu0 %v1217
    %v1930 = vpop.f32.mrf.mxu0
    %v1931 = vadd.f32 %v1827, %v1930
    %v1932 = vpop.f32.mrf.mxu0
    %v1933 = vadd.f32 %v1829, %v1932
    %1934 = vmatmul.bf16.gmra.mxu0 %v1220
    %v1935 = vpop.f32.mrf.mxu0
    %v1936 = vadd.f32 %v1832, %v1935
    %v1937 = vpop.f32.mrf.mxu0
    %v1938 = vadd.f32 %v1834, %v1937
    %1939 = vmatmul.bf16.gmra.mxu0 %v1223
    %v1940 = vpop.f32.mrf.mxu0
    %v1941 = vadd.f32 %v1837, %v1940
    %v1942 = vpop.f32.mrf.mxu0
    %v1943 = vadd.f32 %v1839, %v1942
    %1944 = vmatmul.bf16.gmra.mxu0 %v1226
    %v1945 = vpop.f32.mrf.mxu0
    %v1946 = vadd.f32 %v1842, %v1945
    %v1947 = vpop.f32.mrf.mxu0
    %v1948 = vadd.f32 %v1844, %v1947
    %1949 = vmatmul.bf16.gmra.mxu0 %v1229
    %v1950 = vpop.f32.mrf.mxu0
    %v1951 = vadd.f32 %v1847, %v1950
    %v1952 = vpop.f32.mrf.mxu0
    %v1953 = vadd.f32 %v1849, %v1952
    %1954 = vmatmul.bf16.gmra.mxu0 %v1232
    %v1955 = vpop.f32.mrf.mxu0
    %v1956 = vadd.f32 %v1852, %v1955
    %v1957 = vpop.f32.mrf.mxu0
    %v1958 = vadd.f32 %v1854, %v1957
    %1959 = vmatmul.bf16.gmra.mxu0 %v1235
    %v1960 = vpop.f32.mrf.mxu0
    %v1961 = vadd.f32 %v1857, %v1960
    %v1962 = vpop.f32.mrf.mxu0
    %v1963 = vadd.f32 %v1859, %v1962
    %1964 = vdwg.mxu0
    %1965 = vmatpush.bf16.msra.mxu0 %v998
    %1966 = vmatpush.bf16.msra.mxu0 %v996
    %1967 = vmatpush.bf16.msra.mxu0 %v994
    %1968 = vmatpush.bf16.msra.mxu0 %v992
    %1969 = vmatpush.bf16.msra.mxu0 %v990
    %1970 = vmatpush.bf16.msra.mxu0 %v988
    %1971 = vmatpush.bf16.msra.mxu0 %v986
    %1972 = vmatpush.bf16.msra.mxu0 %v984
    %1973 = vmatmul.bf16.gmra.mxu0 %v452
    %v1974 = vpop.f32.mrf.mxu0
    %v1975 = vadd.f32 %v686, %v1974
    %v1976 = vpop.f32.mrf.mxu0
    %v1977 = vadd.f32 %v686, %v1976
    %1978 = vmatmul.bf16.gmra.mxu0 %v459
    %v1979 = vpop.f32.mrf.mxu0
    %v1980 = vadd.f32 %v686, %v1979
    %v1981 = vpop.f32.mrf.mxu0
    %v1982 = vadd.f32 %v686, %v1981
    %1983 = vmatmul.bf16.gmra.mxu0 %v466
    %v1984 = vpop.f32.mrf.mxu0
    %v1985 = vadd.f32 %v686, %v1984
    %v1986 = vpop.f32.mrf.mxu0
    %v1987 = vadd.f32 %v686, %v1986
    %1988 = vmatmul.bf16.gmra.mxu0 %v473
    %v1989 = vpop.f32.mrf.mxu0
    %v1990 = vadd.f32 %v686, %v1989
    %v1991 = vpop.f32.mrf.mxu0
    %v1992 = vadd.f32 %v686, %v1991
    %1993 = vmatmul.bf16.gmra.mxu0 %v480
    %v1994 = vpop.f32.mrf.mxu0
    %v1995 = vadd.f32 %v686, %v1994
    %v1996 = vpop.f32.mrf.mxu0
    %v1997 = vadd.f32 %v686, %v1996
    %1998 = vmatmul.bf16.gmra.mxu0 %v487
    %v1999 = vpop.f32.mrf.mxu0
    %v2000 = vadd.f32 %v686, %v1999
    %v2001 = vpop.f32.mrf.mxu0
    %v2002 = vadd.f32 %v686, %v2001
    %2003 = vmatmul.bf16.gmra.mxu0 %v494
    %v2004 = vpop.f32.mrf.mxu0
    %v2005 = vadd.f32 %v686, %v2004
    %v2006 = vpop.f32.mrf.mxu0
    %v2007 = vadd.f32 %v686, %v2006
    %2008 = vmatmul.bf16.gmra.mxu0 %v501
    %v2009 = vpop.f32.mrf.mxu0
    %v2010 = vadd.f32 %v686, %v2009
    %v2011 = vpop.f32.mrf.mxu0
    %v2012 = vadd.f32 %v686, %v2011
    %2013 = vmatmul.bf16.gmra.mxu0 %v508
    %v2014 = vpop.f32.mrf.mxu0
    %v2015 = vadd.f32 %v686, %v2014
    %v2016 = vpop.f32.mrf.mxu0
    %v2017 = vadd.f32 %v686, %v2016
    %2018 = vmatmul.bf16.gmra.mxu0 %v515
    %v2019 = vpop.f32.mrf.mxu0
    %v2020 = vadd.f32 %v686, %v2019
    %v2021 = vpop.f32.mrf.mxu0
    %v2022 = vadd.f32 %v686, %v2021
    %2023 = vmatmul.bf16.gmra.mxu0 %v522
    %v2024 = vpop.f32.mrf.mxu0
    %v2025 = vadd.f32 %v686, %v2024
    %v2026 = vpop.f32.mrf.mxu0
    %v2027 = vadd.f32 %v686, %v2026
    %2028 = vmatmul.bf16.gmra.mxu0 %v529
    %v2029 = vpop.f32.mrf.mxu0
    %v2030 = vadd.f32 %v686, %v2029
    %v2031 = vpop.f32.mrf.mxu0
    %v2032 = vadd.f32 %v686, %v2031
    %2033 = vmatmul.bf16.gmra.mxu0 %v536
    %v2034 = vpop.f32.mrf.mxu0
    %v2035 = vadd.f32 %v686, %v2034
    %v2036 = vpop.f32.mrf.mxu0
    %v2037 = vadd.f32 %v686, %v2036
    %2038 = vmatmul.bf16.gmra.mxu0 %v543
    %v2039 = vpop.f32.mrf.mxu0
    %v2040 = vadd.f32 %v686, %v2039
    %v2041 = vpop.f32.mrf.mxu0
    %v2042 = vadd.f32 %v686, %v2041
    %2043 = vmatmul.bf16.gmra.mxu0 %v550
    %v2044 = vpop.f32.mrf.mxu0
    %v2045 = vadd.f32 %v686, %v2044
    %v2046 = vpop.f32.mrf.mxu0
    %v2047 = vadd.f32 %v686, %v2046
    %2048 = vmatmul.bf16.gmra.mxu0 %v557
    %v2049 = vpop.f32.mrf.mxu0
    %v2050 = vadd.f32 %v686, %v2049
    %v2051 = vpop.f32.mrf.mxu0
    %v2052 = vadd.f32 %v686, %v2051
    %2053 = vmatmul.bf16.gmra.mxu0 %v564
    %v2054 = vpop.f32.mrf.mxu0
    %v2055 = vadd.f32 %v686, %v2054
    %v2056 = vpop.f32.mrf.mxu0
    %v2057 = vadd.f32 %v686, %v2056
    %2058 = vmatmul.bf16.gmra.mxu0 %v571
    %v2059 = vpop.f32.mrf.mxu0
    %v2060 = vadd.f32 %v686, %v2059
    %v2061 = vpop.f32.mrf.mxu0
    %v2062 = vadd.f32 %v686, %v2061
    %2063 = vmatmul.bf16.gmra.mxu0 %v578
    %v2064 = vpop.f32.mrf.mxu0
    %v2065 = vadd.f32 %v686, %v2064
    %v2066 = vpop.f32.mrf.mxu0
    %v2067 = vadd.f32 %v686, %v2066
    %2068 = vdwg.mxu0
    %2069 = vmatpush.bf16.msra.mxu0 %v1014
    %2070 = vmatpush.bf16.msra.mxu0 %v1012
    %2071 = vmatpush.bf16.msra.mxu0 %v1010
    %2072 = vmatpush.bf16.msra.mxu0 %v1008
    %2073 = vmatpush.bf16.msra.mxu0 %v1006
    %2074 = vmatpush.bf16.msra.mxu0 %v1004
    %2075 = vmatpush.bf16.msra.mxu0 %v1002
    %2076 = vmatpush.bf16.msra.mxu0 %v1000
    %2077 = vmatmul.bf16.gmra.mxu0 %v453
    %v2078 = vpop.f32.mrf.mxu0
    %v2079 = vadd.f32 %v1975, %v2078
    %v2080 = vpop.f32.mrf.mxu0
    %v2081 = vadd.f32 %v1977, %v2080
    %2082 = vmatmul.bf16.gmra.mxu0 %v460
    %v2083 = vpop.f32.mrf.mxu0
    %v2084 = vadd.f32 %v1980, %v2083
    %v2085 = vpop.f32.mrf.mxu0
    %v2086 = vadd.f32 %v1982, %v2085
    %2087 = vmatmul.bf16.gmra.mxu0 %v467
    %v2088 = vpop.f32.mrf.mxu0
    %v2089 = vadd.f32 %v1985, %v2088
    %v2090 = vpop.f32.mrf.mxu0
    %v2091 = vadd.f32 %v1987, %v2090
    %2092 = vmatmul.bf16.gmra.mxu0 %v474
    %v2093 = vpop.f32.mrf.mxu0
    %v2094 = vadd.f32 %v1990, %v2093
    %v2095 = vpop.f32.mrf.mxu0
    %v2096 = vadd.f32 %v1992, %v2095
    %2097 = vmatmul.bf16.gmra.mxu0 %v481
    %v2098 = vpop.f32.mrf.mxu0
    %v2099 = vadd.f32 %v1995, %v2098
    %v2100 = vpop.f32.mrf.mxu0
    %v2101 = vadd.f32 %v1997, %v2100
    %2102 = vmatmul.bf16.gmra.mxu0 %v488
    %v2103 = vpop.f32.mrf.mxu0
    %v2104 = vadd.f32 %v2000, %v2103
    %v2105 = vpop.f32.mrf.mxu0
    %v2106 = vadd.f32 %v2002, %v2105
    %2107 = vmatmul.bf16.gmra.mxu0 %v495
    %v2108 = vpop.f32.mrf.mxu0
    %v2109 = vadd.f32 %v2005, %v2108
    %v2110 = vpop.f32.mrf.mxu0
    %v2111 = vadd.f32 %v2007, %v2110
    %2112 = vmatmul.bf16.gmra.mxu0 %v502
    %v2113 = vpop.f32.mrf.mxu0
    %v2114 = vadd.f32 %v2010, %v2113
    %v2115 = vpop.f32.mrf.mxu0
    %v2116 = vadd.f32 %v2012, %v2115
    %2117 = vmatmul.bf16.gmra.mxu0 %v509
    %v2118 = vpop.f32.mrf.mxu0
    %v2119 = vadd.f32 %v2015, %v2118
    %v2120 = vpop.f32.mrf.mxu0
    %v2121 = vadd.f32 %v2017, %v2120
    %2122 = vmatmul.bf16.gmra.mxu0 %v516
    %v2123 = vpop.f32.mrf.mxu0
    %v2124 = vadd.f32 %v2020, %v2123
    %v2125 = vpop.f32.mrf.mxu0
    %v2126 = vadd.f32 %v2022, %v2125
    %2127 = vmatmul.bf16.gmra.mxu0 %v523
    %v2128 = vpop.f32.mrf.mxu0
    %v2129 = vadd.f32 %v2025, %v2128
    %v2130 = vpop.f32.mrf.mxu0
    %v2131 = vadd.f32 %v2027, %v2130
    %2132 = vmatmul.bf16.gmra.mxu0 %v530
    %v2133 = vpop.f32.mrf.mxu0
    %v2134 = vadd.f32 %v2030, %v2133
    %v2135 = vpop.f32.mrf.mxu0
    %v2136 = vadd.f32 %v2032, %v2135
    %2137 = vmatmul.bf16.gmra.mxu0 %v537
    %v2138 = vpop.f32.mrf.mxu0
    %v2139 = vadd.f32 %v2035, %v2138
    %v2140 = vpop.f32.mrf.mxu0
    %v2141 = vadd.f32 %v2037, %v2140
    %2142 = vmatmul.bf16.gmra.mxu0 %v544
    %v2143 = vpop.f32.mrf.mxu0
    %v2144 = vadd.f32 %v2040, %v2143
    %v2145 = vpop.f32.mrf.mxu0
    %v2146 = vadd.f32 %v2042, %v2145
    %2147 = vmatmul.bf16.gmra.mxu0 %v551
    %v2148 = vpop.f32.mrf.mxu0
    %v2149 = vadd.f32 %v2045, %v2148
    %v2150 = vpop.f32.mrf.mxu0
    %v2151 = vadd.f32 %v2047, %v2150
    %2152 = vmatmul.bf16.gmra.mxu0 %v558
    %v2153 = vpop.f32.mrf.mxu0
    %v2154 = vadd.f32 %v2050, %v2153
    %v2155 = vpop.f32.mrf.mxu0
    %v2156 = vadd.f32 %v2052, %v2155
    %2157 = vmatmul.bf16.gmra.mxu0 %v565
    %v2158 = vpop.f32.mrf.mxu0
    %v2159 = vadd.f32 %v2055, %v2158
    %v2160 = vpop.f32.mrf.mxu0
    %v2161 = vadd.f32 %v2057, %v2160
    %2162 = vmatmul.bf16.gmra.mxu0 %v572
    %v2163 = vpop.f32.mrf.mxu0
    %v2164 = vadd.f32 %v2060, %v2163
    %v2165 = vpop.f32.mrf.mxu0
    %v2166 = vadd.f32 %v2062, %v2165
    %2167 = vmatmul.bf16.gmra.mxu0 %v579
    %v2168 = vpop.f32.mrf.mxu0
    %v2169 = vadd.f32 %v2065, %v2168
    %v2170 = vpop.f32.mrf.mxu0
    %v2171 = vadd.f32 %v2067, %v2170
    %2172 = vdwg.mxu0
    %2173 = vmatpush.bf16.msra.mxu0 %v1030
    %2174 = vmatpush.bf16.msra.mxu0 %v1028
    %2175 = vmatpush.bf16.msra.mxu0 %v1026
    %2176 = vmatpush.bf16.msra.mxu0 %v1024
    %2177 = vmatpush.bf16.msra.mxu0 %v1022
    %2178 = vmatpush.bf16.msra.mxu0 %v1020
    %2179 = vmatpush.bf16.msra.mxu0 %v1018
    %2180 = vmatpush.bf16.msra.mxu0 %v1016
    %2181 = vmatmul.bf16.gmra.mxu0 %v454
    %v2182 = vpop.f32.mrf.mxu0
    %v2183 = vadd.f32 %v2079, %v2182
    %v2184 = vpop.f32.mrf.mxu0
    %v2185 = vadd.f32 %v2081, %v2184
    %2186 = vmatmul.bf16.gmra.mxu0 %v461
    %v2187 = vpop.f32.mrf.mxu0
    %v2188 = vadd.f32 %v2084, %v2187
    %v2189 = vpop.f32.mrf.mxu0
    %v2190 = vadd.f32 %v2086, %v2189
    %2191 = vmatmul.bf16.gmra.mxu0 %v468
    %v2192 = vpop.f32.mrf.mxu0
    %v2193 = vadd.f32 %v2089, %v2192
    %v2194 = vpop.f32.mrf.mxu0
    %v2195 = vadd.f32 %v2091, %v2194
    %2196 = vmatmul.bf16.gmra.mxu0 %v475
    %v2197 = vpop.f32.mrf.mxu0
    %v2198 = vadd.f32 %v2094, %v2197
    %v2199 = vpop.f32.mrf.mxu0
    %v2200 = vadd.f32 %v2096, %v2199
    %2201 = vmatmul.bf16.gmra.mxu0 %v482
    %v2202 = vpop.f32.mrf.mxu0
    %v2203 = vadd.f32 %v2099, %v2202
    %v2204 = vpop.f32.mrf.mxu0
    %v2205 = vadd.f32 %v2101, %v2204
    %2206 = vmatmul.bf16.gmra.mxu0 %v489
    %v2207 = vpop.f32.mrf.mxu0
    %v2208 = vadd.f32 %v2104, %v2207
    %v2209 = vpop.f32.mrf.mxu0
    %v2210 = vadd.f32 %v2106, %v2209
    %2211 = vmatmul.bf16.gmra.mxu0 %v496
    %v2212 = vpop.f32.mrf.mxu0
    %v2213 = vadd.f32 %v2109, %v2212
    %v2214 = vpop.f32.mrf.mxu0
    %v2215 = vadd.f32 %v2111, %v2214
    %2216 = vmatmul.bf16.gmra.mxu0 %v503
    %v2217 = vpop.f32.mrf.mxu0
    %v2218 = vadd.f32 %v2114, %v2217
    %v2219 = vpop.f32.mrf.mxu0
    %v2220 = vadd.f32 %v2116, %v2219
    %2221 = vmatmul.bf16.gmra.mxu0 %v510
    %v2222 = vpop.f32.mrf.mxu0
    %v2223 = vadd.f32 %v2119, %v2222
    %v2224 = vpop.f32.mrf.mxu0
    %v2225 = vadd.f32 %v2121, %v2224
    %2226 = vmatmul.bf16.gmra.mxu0 %v517
    %v2227 = vpop.f32.mrf.mxu0
    %v2228 = vadd.f32 %v2124, %v2227
    %v2229 = vpop.f32.mrf.mxu0
    %v2230 = vadd.f32 %v2126, %v2229
    %2231 = vmatmul.bf16.gmra.mxu0 %v524
    %v2232 = vpop.f32.mrf.mxu0
    %v2233 = vadd.f32 %v2129, %v2232
    %v2234 = vpop.f32.mrf.mxu0
    %v2235 = vadd.f32 %v2131, %v2234
    %2236 = vmatmul.bf16.gmra.mxu0 %v531
    %v2237 = vpop.f32.mrf.mxu0
    %v2238 = vadd.f32 %v2134, %v2237
    %v2239 = vpop.f32.mrf.mxu0
    %v2240 = vadd.f32 %v2136, %v2239
    %2241 = vmatmul.bf16.gmra.mxu0 %v538
    %v2242 = vpop.f32.mrf.mxu0
    %v2243 = vadd.f32 %v2139, %v2242
    %v2244 = vpop.f32.mrf.mxu0
    %v2245 = vadd.f32 %v2141, %v2244
    %2246 = vmatmul.bf16.gmra.mxu0 %v545
    %v2247 = vpop.f32.mrf.mxu0
    %v2248 = vadd.f32 %v2144, %v2247
    %v2249 = vpop.f32.mrf.mxu0
    %v2250 = vadd.f32 %v2146, %v2249
    %2251 = vmatmul.bf16.gmra.mxu0 %v552
    %v2252 = vpop.f32.mrf.mxu0
    %v2253 = vadd.f32 %v2149, %v2252
    %v2254 = vpop.f32.mrf.mxu0
    %v2255 = vadd.f32 %v2151, %v2254
    %2256 = vmatmul.bf16.gmra.mxu0 %v559
    %v2257 = vpop.f32.mrf.mxu0
    %v2258 = vadd.f32 %v2154, %v2257
    %v2259 = vpop.f32.mrf.mxu0
    %v2260 = vadd.f32 %v2156, %v2259
    %2261 = vmatmul.bf16.gmra.mxu0 %v566
    %v2262 = vpop.f32.mrf.mxu0
    %v2263 = vadd.f32 %v2159, %v2262
    %v2264 = vpop.f32.mrf.mxu0
    %v2265 = vadd.f32 %v2161, %v2264
    %2266 = vmatmul.bf16.gmra.mxu0 %v573
    %v2267 = vpop.f32.mrf.mxu0
    %v2268 = vadd.f32 %v2164, %v2267
    %v2269 = vpop.f32.mrf.mxu0
    %v2270 = vadd.f32 %v2166, %v2269
    %2271 = vmatmul.bf16.gmra.mxu0 %v580
    %v2272 = vpop.f32.mrf.mxu0
    %v2273 = vadd.f32 %v2169, %v2272
    %v2274 = vpop.f32.mrf.mxu0
    %v2275 = vadd.f32 %v2171, %v2274
    %2276 = vdwg.mxu0
    %2277 = vmatpush.bf16.msra.mxu0 %v1046
    %2278 = vmatpush.bf16.msra.mxu0 %v1044
    %2279 = vmatpush.bf16.msra.mxu0 %v1042
    %2280 = vmatpush.bf16.msra.mxu0 %v1040
    %2281 = vmatpush.bf16.msra.mxu0 %v1038
    %2282 = vmatpush.bf16.msra.mxu0 %v1036
    %2283 = vmatpush.bf16.msra.mxu0 %v1034
    %2284 = vmatpush.bf16.msra.mxu0 %v1032
    %2285 = vmatmul.bf16.gmra.mxu0 %v455
    %v2286 = vpop.f32.mrf.mxu0
    %v2287 = vadd.f32 %v2183, %v2286
    %v2288 = vpop.f32.mrf.mxu0
    %v2289 = vadd.f32 %v2185, %v2288
    %2290 = vmatmul.bf16.gmra.mxu0 %v462
    %v2291 = vpop.f32.mrf.mxu0
    %v2292 = vadd.f32 %v2188, %v2291
    %v2293 = vpop.f32.mrf.mxu0
    %v2294 = vadd.f32 %v2190, %v2293
    %2295 = vmatmul.bf16.gmra.mxu0 %v469
    %v2296 = vpop.f32.mrf.mxu0
    %v2297 = vadd.f32 %v2193, %v2296
    %v2298 = vpop.f32.mrf.mxu0
    %v2299 = vadd.f32 %v2195, %v2298
    %2300 = vmatmul.bf16.gmra.mxu0 %v476
    %v2301 = vpop.f32.mrf.mxu0
    %v2302 = vadd.f32 %v2198, %v2301
    %v2303 = vpop.f32.mrf.mxu0
    %v2304 = vadd.f32 %v2200, %v2303
    %2305 = vmatmul.bf16.gmra.mxu0 %v483
    %v2306 = vpop.f32.mrf.mxu0
    %v2307 = vadd.f32 %v2203, %v2306
    %v2308 = vpop.f32.mrf.mxu0
    %v2309 = vadd.f32 %v2205, %v2308
    %2310 = vmatmul.bf16.gmra.mxu0 %v490
    %v2311 = vpop.f32.mrf.mxu0
    %v2312 = vadd.f32 %v2208, %v2311
    %v2313 = vpop.f32.mrf.mxu0
    %v2314 = vadd.f32 %v2210, %v2313
    %2315 = vmatmul.bf16.gmra.mxu0 %v497
    %v2316 = vpop.f32.mrf.mxu0
    %v2317 = vadd.f32 %v2213, %v2316
    %v2318 = vpop.f32.mrf.mxu0
    %v2319 = vadd.f32 %v2215, %v2318
    %2320 = vmatmul.bf16.gmra.mxu0 %v504
    %v2321 = vpop.f32.mrf.mxu0
    %v2322 = vadd.f32 %v2218, %v2321
    %v2323 = vpop.f32.mrf.mxu0
    %v2324 = vadd.f32 %v2220, %v2323
    %2325 = vmatmul.bf16.gmra.mxu0 %v511
    %v2326 = vpop.f32.mrf.mxu0
    %v2327 = vadd.f32 %v2223, %v2326
    %v2328 = vpop.f32.mrf.mxu0
    %v2329 = vadd.f32 %v2225, %v2328
    %2330 = vmatmul.bf16.gmra.mxu0 %v518
    %v2331 = vpop.f32.mrf.mxu0
    %v2332 = vadd.f32 %v2228, %v2331
    %v2333 = vpop.f32.mrf.mxu0
    %v2334 = vadd.f32 %v2230, %v2333
    %2335 = vmatmul.bf16.gmra.mxu0 %v525
    %v2336 = vpop.f32.mrf.mxu0
    %v2337 = vadd.f32 %v2233, %v2336
    %v2338 = vpop.f32.mrf.mxu0
    %v2339 = vadd.f32 %v2235, %v2338
    %2340 = vmatmul.bf16.gmra.mxu0 %v532
    %v2341 = vpop.f32.mrf.mxu0
    %v2342 = vadd.f32 %v2238, %v2341
    %v2343 = vpop.f32.mrf.mxu0
    %v2344 = vadd.f32 %v2240, %v2343
    %2345 = vmatmul.bf16.gmra.mxu0 %v539
    %v2346 = vpop.f32.mrf.mxu0
    %v2347 = vadd.f32 %v2243, %v2346
    %v2348 = vpop.f32.mrf.mxu0
    %v2349 = vadd.f32 %v2245, %v2348
    %2350 = vmatmul.bf16.gmra.mxu0 %v546
    %v2351 = vpop.f32.mrf.mxu0
    %v2352 = vadd.f32 %v2248, %v2351
    %v2353 = vpop.f32.mrf.mxu0
    %v2354 = vadd.f32 %v2250, %v2353
    %2355 = vmatmul.bf16.gmra.mxu0 %v553
    %v2356 = vpop.f32.mrf.mxu0
    %v2357 = vadd.f32 %v2253, %v2356
    %v2358 = vpop.f32.mrf.mxu0
    %v2359 = vadd.f32 %v2255, %v2358
    %2360 = vmatmul.bf16.gmra.mxu0 %v560
    %v2361 = vpop.f32.mrf.mxu0
    %v2362 = vadd.f32 %v2258, %v2361
    %v2363 = vpop.f32.mrf.mxu0
    %v2364 = vadd.f32 %v2260, %v2363
    %2365 = vmatmul.bf16.gmra.mxu0 %v567
    %v2366 = vpop.f32.mrf.mxu0
    %v2367 = vadd.f32 %v2263, %v2366
    %v2368 = vpop.f32.mrf.mxu0
    %v2369 = vadd.f32 %v2265, %v2368
    %2370 = vmatmul.bf16.gmra.mxu0 %v574
    %v2371 = vpop.f32.mrf.mxu0
    %v2372 = vadd.f32 %v2268, %v2371
    %v2373 = vpop.f32.mrf.mxu0
    %v2374 = vadd.f32 %v2270, %v2373
    %2375 = vmatmul.bf16.gmra.mxu0 %v581
    %v2376 = vpop.f32.mrf.mxu0
    %v2377 = vadd.f32 %v2273, %v2376
    %v2378 = vpop.f32.mrf.mxu0
    %v2379 = vadd.f32 %v2275, %v2378
    %2380 = vdwg.mxu0
    %2381 = vmatpush.bf16.msra.mxu0 %v1062
    %2382 = vmatpush.bf16.msra.mxu0 %v1060
    %2383 = vmatpush.bf16.msra.mxu0 %v1058
    %2384 = vmatpush.bf16.msra.mxu0 %v1056
    %2385 = vmatpush.bf16.msra.mxu0 %v1054
    %2386 = vmatpush.bf16.msra.mxu0 %v1052
    %2387 = vmatpush.bf16.msra.mxu0 %v1050
    %2388 = vmatpush.bf16.msra.mxu0 %v1048
    %2389 = vmatmul.bf16.gmra.mxu0 %v456
    %v2390 = vpop.f32.mrf.mxu0
    %v2391 = vadd.f32 %v2287, %v2390
    %v2392 = vpop.f32.mrf.mxu0
    %v2393 = vadd.f32 %v2289, %v2392
    %2394 = vmatmul.bf16.gmra.mxu0 %v463
    %v2395 = vpop.f32.mrf.mxu0
    %v2396 = vadd.f32 %v2292, %v2395
    %v2397 = vpop.f32.mrf.mxu0
    %v2398 = vadd.f32 %v2294, %v2397
    %2399 = vmatmul.bf16.gmra.mxu0 %v470
    %v2400 = vpop.f32.mrf.mxu0
    %v2401 = vadd.f32 %v2297, %v2400
    %v2402 = vpop.f32.mrf.mxu0
    %v2403 = vadd.f32 %v2299, %v2402
    %2404 = vmatmul.bf16.gmra.mxu0 %v477
    %v2405 = vpop.f32.mrf.mxu0
    %v2406 = vadd.f32 %v2302, %v2405
    %v2407 = vpop.f32.mrf.mxu0
    %v2408 = vadd.f32 %v2304, %v2407
    %2409 = vmatmul.bf16.gmra.mxu0 %v484
    %v2410 = vpop.f32.mrf.mxu0
    %v2411 = vadd.f32 %v2307, %v2410
    %v2412 = vpop.f32.mrf.mxu0
    %v2413 = vadd.f32 %v2309, %v2412
    %2414 = vmatmul.bf16.gmra.mxu0 %v491
    %v2415 = vpop.f32.mrf.mxu0
    %v2416 = vadd.f32 %v2312, %v2415
    %v2417 = vpop.f32.mrf.mxu0
    %v2418 = vadd.f32 %v2314, %v2417
    %2419 = vmatmul.bf16.gmra.mxu0 %v498
    %v2420 = vpop.f32.mrf.mxu0
    %v2421 = vadd.f32 %v2317, %v2420
    %v2422 = vpop.f32.mrf.mxu0
    %v2423 = vadd.f32 %v2319, %v2422
    %2424 = vmatmul.bf16.gmra.mxu0 %v505
    %v2425 = vpop.f32.mrf.mxu0
    %v2426 = vadd.f32 %v2322, %v2425
    %v2427 = vpop.f32.mrf.mxu0
    %v2428 = vadd.f32 %v2324, %v2427
    %2429 = vmatmul.bf16.gmra.mxu0 %v512
    %v2430 = vpop.f32.mrf.mxu0
    %v2431 = vadd.f32 %v2327, %v2430
    %v2432 = vpop.f32.mrf.mxu0
    %v2433 = vadd.f32 %v2329, %v2432
    %2434 = vmatmul.bf16.gmra.mxu0 %v519
    %v2435 = vpop.f32.mrf.mxu0
    %v2436 = vadd.f32 %v2332, %v2435
    %v2437 = vpop.f32.mrf.mxu0
    %v2438 = vadd.f32 %v2334, %v2437
    %2439 = vmatmul.bf16.gmra.mxu0 %v526
    %v2440 = vpop.f32.mrf.mxu0
    %v2441 = vadd.f32 %v2337, %v2440
    %v2442 = vpop.f32.mrf.mxu0
    %v2443 = vadd.f32 %v2339, %v2442
    %2444 = vmatmul.bf16.gmra.mxu0 %v533
    %v2445 = vpop.f32.mrf.mxu0
    %v2446 = vadd.f32 %v2342, %v2445
    %v2447 = vpop.f32.mrf.mxu0
    %v2448 = vadd.f32 %v2344, %v2447
    %2449 = vmatmul.bf16.gmra.mxu0 %v540
    %v2450 = vpop.f32.mrf.mxu0
    %v2451 = vadd.f32 %v2347, %v2450
    %v2452 = vpop.f32.mrf.mxu0
    %v2453 = vadd.f32 %v2349, %v2452
    %2454 = vmatmul.bf16.gmra.mxu0 %v547
    %v2455 = vpop.f32.mrf.mxu0
    %v2456 = vadd.f32 %v2352, %v2455
    %v2457 = vpop.f32.mrf.mxu0
    %v2458 = vadd.f32 %v2354, %v2457
    %2459 = vmatmul.bf16.gmra.mxu0 %v554
    %v2460 = vpop.f32.mrf.mxu0
    %v2461 = vadd.f32 %v2357, %v2460
    %v2462 = vpop.f32.mrf.mxu0
    %v2463 = vadd.f32 %v2359, %v2462
    %2464 = vmatmul.bf16.gmra.mxu0 %v561
    %v2465 = vpop.f32.mrf.mxu0
    %v2466 = vadd.f32 %v2362, %v2465
    %v2467 = vpop.f32.mrf.mxu0
    %v2468 = vadd.f32 %v2364, %v2467
    %2469 = vmatmul.bf16.gmra.mxu0 %v568
    %v2470 = vpop.f32.mrf.mxu0
    %v2471 = vadd.f32 %v2367, %v2470
    %v2472 = vpop.f32.mrf.mxu0
    %v2473 = vadd.f32 %v2369, %v2472
    %2474 = vmatmul.bf16.gmra.mxu0 %v575
    %v2475 = vpop.f32.mrf.mxu0
    %v2476 = vadd.f32 %v2372, %v2475
    %v2477 = vpop.f32.mrf.mxu0
    %v2478 = vadd.f32 %v2374, %v2477
    %2479 = vmatmul.bf16.gmra.mxu0 %v582
    %v2480 = vpop.f32.mrf.mxu0
    %v2481 = vadd.f32 %v2377, %v2480
    %v2482 = vpop.f32.mrf.mxu0
    %v2483 = vadd.f32 %v2379, %v2482
    %2484 = vdwg.mxu0
    %2485 = vmatpush.bf16.msra.mxu0 %v1078
    %2486 = vmatpush.bf16.msra.mxu0 %v1076
    %2487 = vmatpush.bf16.msra.mxu0 %v1074
    %2488 = vmatpush.bf16.msra.mxu0 %v1072
    %2489 = vmatpush.bf16.msra.mxu0 %v1070
    %2490 = vmatpush.bf16.msra.mxu0 %v1068
    %2491 = vmatpush.bf16.msra.mxu0 %v1066
    %2492 = vmatpush.bf16.msra.mxu0 %v1064
    %2493 = vmatmul.bf16.gmra.mxu0 %v457
    %v2494 = vpop.f32.mrf.mxu0
    %v2495 = vadd.f32 %v2391, %v2494
    %v2496 = vpop.f32.mrf.mxu0
    %v2497 = vadd.f32 %v2393, %v2496
    %2498 = vmatmul.bf16.gmra.mxu0 %v464
    %v2499 = vpop.f32.mrf.mxu0
    %v2500 = vadd.f32 %v2396, %v2499
    %v2501 = vpop.f32.mrf.mxu0
    %v2502 = vadd.f32 %v2398, %v2501
    %2503 = vmatmul.bf16.gmra.mxu0 %v471
    %v2504 = vpop.f32.mrf.mxu0
    %v2505 = vadd.f32 %v2401, %v2504
    %v2506 = vpop.f32.mrf.mxu0
    %v2507 = vadd.f32 %v2403, %v2506
    %2508 = vmatmul.bf16.gmra.mxu0 %v478
    %v2509 = vpop.f32.mrf.mxu0
    %v2510 = vadd.f32 %v2406, %v2509
    %v2511 = vpop.f32.mrf.mxu0
    %v2512 = vadd.f32 %v2408, %v2511
    %2513 = vmatmul.bf16.gmra.mxu0 %v485
    %v2514 = vpop.f32.mrf.mxu0
    %v2515 = vadd.f32 %v2411, %v2514
    %v2516 = vpop.f32.mrf.mxu0
    %v2517 = vadd.f32 %v2413, %v2516
    %2518 = vmatmul.bf16.gmra.mxu0 %v492
    %v2519 = vpop.f32.mrf.mxu0
    %v2520 = vadd.f32 %v2416, %v2519
    %v2521 = vpop.f32.mrf.mxu0
    %v2522 = vadd.f32 %v2418, %v2521
    %2523 = vmatmul.bf16.gmra.mxu0 %v499
    %v2524 = vpop.f32.mrf.mxu0
    %v2525 = vadd.f32 %v2421, %v2524
    %v2526 = vpop.f32.mrf.mxu0
    %v2527 = vadd.f32 %v2423, %v2526
    %2528 = vmatmul.bf16.gmra.mxu0 %v506
    %v2529 = vpop.f32.mrf.mxu0
    %v2530 = vadd.f32 %v2426, %v2529
    %v2531 = vpop.f32.mrf.mxu0
    %v2532 = vadd.f32 %v2428, %v2531
    %2533 = vmatmul.bf16.gmra.mxu0 %v513
    %v2534 = vpop.f32.mrf.mxu0
    %v2535 = vadd.f32 %v2431, %v2534
    %v2536 = vpop.f32.mrf.mxu0
    %v2537 = vadd.f32 %v2433, %v2536
    %2538 = vmatmul.bf16.gmra.mxu0 %v520
    %v2539 = vpop.f32.mrf.mxu0
    %v2540 = vadd.f32 %v2436, %v2539
    %v2541 = vpop.f32.mrf.mxu0
    %v2542 = vadd.f32 %v2438, %v2541
    %2543 = vmatmul.bf16.gmra.mxu0 %v527
    %v2544 = vpop.f32.mrf.mxu0
    %v2545 = vadd.f32 %v2441, %v2544
    %v2546 = vpop.f32.mrf.mxu0
    %v2547 = vadd.f32 %v2443, %v2546
    %2548 = vmatmul.bf16.gmra.mxu0 %v534
    %v2549 = vpop.f32.mrf.mxu0
    %v2550 = vadd.f32 %v2446, %v2549
    %v2551 = vpop.f32.mrf.mxu0
    %v2552 = vadd.f32 %v2448, %v2551
    %2553 = vmatmul.bf16.gmra.mxu0 %v541
    %v2554 = vpop.f32.mrf.mxu0
    %v2555 = vadd.f32 %v2451, %v2554
    %v2556 = vpop.f32.mrf.mxu0
    %v2557 = vadd.f32 %v2453, %v2556
    %2558 = vmatmul.bf16.gmra.mxu0 %v548
    %v2559 = vpop.f32.mrf.mxu0
    %v2560 = vadd.f32 %v2456, %v2559
    %v2561 = vpop.f32.mrf.mxu0
    %v2562 = vadd.f32 %v2458, %v2561
    %2563 = vmatmul.bf16.gmra.mxu0 %v555
    %v2564 = vpop.f32.mrf.mxu0
    %v2565 = vadd.f32 %v2461, %v2564
    %v2566 = vpop.f32.mrf.mxu0
    %v2567 = vadd.f32 %v2463, %v2566
    %2568 = vmatmul.bf16.gmra.mxu0 %v562
    %v2569 = vpop.f32.mrf.mxu0
    %v2570 = vadd.f32 %v2466, %v2569
    %v2571 = vpop.f32.mrf.mxu0
    %v2572 = vadd.f32 %v2468, %v2571
    %2573 = vmatmul.bf16.gmra.mxu0 %v569
    %v2574 = vpop.f32.mrf.mxu0
    %v2575 = vadd.f32 %v2471, %v2574
    %v2576 = vpop.f32.mrf.mxu0
    %v2577 = vadd.f32 %v2473, %v2576
    %2578 = vmatmul.bf16.gmra.mxu0 %v576
    %v2579 = vpop.f32.mrf.mxu0
    %v2580 = vadd.f32 %v2476, %v2579
    %v2581 = vpop.f32.mrf.mxu0
    %v2582 = vadd.f32 %v2478, %v2581
    %2583 = vmatmul.bf16.gmra.mxu0 %v583
    %v2584 = vpop.f32.mrf.mxu0
    %v2585 = vadd.f32 %v2481, %v2584
    %v2586 = vpop.f32.mrf.mxu0
    %v2587 = vadd.f32 %v2483, %v2586
    %2588 = vdwg.mxu0
    %2589 = vmatpush.bf16.msra.mxu0 0
    %2590 = vmatpush.bf16.msra.mxu0 0
    %2591 = vmatpush.bf16.msra.mxu0 0
    %2592 = vmatpush.bf16.msra.mxu0 0
    %2593 = vmatpush.bf16.msra.mxu0 0
    %2594 = vmatpush.bf16.msra.mxu0 0
    %2595 = vmatpush.bf16.msra.mxu0 0
    %2596 = vmatpush.bf16.msra.mxu0 %v1080
    %2597 = vmatmul.bf16.gmra.mxu0 %v1181
    %v2598 = vpop.f32.mrf.mxu0
    %v2599 = vadd.f32 %v2495, %v2598
    %v2600 = vpop.f32.mrf.mxu0
    %v2601 = vadd.f32 %v2497, %v2600
    %2602 = vmatmul.bf16.gmra.mxu0 %v1184
    %v2603 = vpop.f32.mrf.mxu0
    %v2604 = vadd.f32 %v2500, %v2603
    %v2605 = vpop.f32.mrf.mxu0
    %v2606 = vadd.f32 %v2502, %v2605
    %2607 = vmatmul.bf16.gmra.mxu0 %v1187
    %v2608 = vpop.f32.mrf.mxu0
    %v2609 = vadd.f32 %v2505, %v2608
    %v2610 = vpop.f32.mrf.mxu0
    %v2611 = vadd.f32 %v2507, %v2610
    %2612 = vmatmul.bf16.gmra.mxu0 %v1190
    %v2613 = vpop.f32.mrf.mxu0
    %v2614 = vadd.f32 %v2510, %v2613
    %v2615 = vpop.f32.mrf.mxu0
    %v2616 = vadd.f32 %v2512, %v2615
    %2617 = vmatmul.bf16.gmra.mxu0 %v1193
    %v2618 = vpop.f32.mrf.mxu0
    %v2619 = vadd.f32 %v2515, %v2618
    %v2620 = vpop.f32.mrf.mxu0
    %v2621 = vadd.f32 %v2517, %v2620
    %2622 = vmatmul.bf16.gmra.mxu0 %v1196
    %v2623 = vpop.f32.mrf.mxu0
    %v2624 = vadd.f32 %v2520, %v2623
    %v2625 = vpop.f32.mrf.mxu0
    %v2626 = vadd.f32 %v2522, %v2625
    %2627 = vmatmul.bf16.gmra.mxu0 %v1199
    %v2628 = vpop.f32.mrf.mxu0
    %v2629 = vadd.f32 %v2525, %v2628
    %v2630 = vpop.f32.mrf.mxu0
    %v2631 = vadd.f32 %v2527, %v2630
    %2632 = vmatmul.bf16.gmra.mxu0 %v1202
    %v2633 = vpop.f32.mrf.mxu0
    %v2634 = vadd.f32 %v2530, %v2633
    %v2635 = vpop.f32.mrf.mxu0
    %v2636 = vadd.f32 %v2532, %v2635
    %2637 = vmatmul.bf16.gmra.mxu0 %v1205
    %v2638 = vpop.f32.mrf.mxu0
    %v2639 = vadd.f32 %v2535, %v2638
    %v2640 = vpop.f32.mrf.mxu0
    %v2641 = vadd.f32 %v2537, %v2640
    %2642 = vmatmul.bf16.gmra.mxu0 %v1208
    %v2643 = vpop.f32.mrf.mxu0
    %v2644 = vadd.f32 %v2540, %v2643
    %v2645 = vpop.f32.mrf.mxu0
    %v2646 = vadd.f32 %v2542, %v2645
    %2647 = vmatmul.bf16.gmra.mxu0 %v1211
    %v2648 = vpop.f32.mrf.mxu0
    %v2649 = vadd.f32 %v2545, %v2648
    %v2650 = vpop.f32.mrf.mxu0
    %v2651 = vadd.f32 %v2547, %v2650
    %2652 = vmatmul.bf16.gmra.mxu0 %v1214
    %v2653 = vpop.f32.mrf.mxu0
    %v2654 = vadd.f32 %v2550, %v2653
    %v2655 = vpop.f32.mrf.mxu0
    %v2656 = vadd.f32 %v2552, %v2655
    %2657 = vmatmul.bf16.gmra.mxu0 %v1217
    %v2658 = vpop.f32.mrf.mxu0
    %v2659 = vadd.f32 %v2555, %v2658
    %v2660 = vpop.f32.mrf.mxu0
    %v2661 = vadd.f32 %v2557, %v2660
    %2662 = vmatmul.bf16.gmra.mxu0 %v1220
    %v2663 = vpop.f32.mrf.mxu0
    %v2664 = vadd.f32 %v2560, %v2663
    %v2665 = vpop.f32.mrf.mxu0
    %v2666 = vadd.f32 %v2562, %v2665
    %2667 = vmatmul.bf16.gmra.mxu0 %v1223
    %v2668 = vpop.f32.mrf.mxu0
    %v2669 = vadd.f32 %v2565, %v2668
    %v2670 = vpop.f32.mrf.mxu0
    %v2671 = vadd.f32 %v2567, %v2670
    %2672 = vmatmul.bf16.gmra.mxu0 %v1226
    %v2673 = vpop.f32.mrf.mxu0
    %v2674 = vadd.f32 %v2570, %v2673
    %v2675 = vpop.f32.mrf.mxu0
    %v2676 = vadd.f32 %v2572, %v2675
    %2677 = vmatmul.bf16.gmra.mxu0 %v1229
    %v2678 = vpop.f32.mrf.mxu0
    %v2679 = vadd.f32 %v2575, %v2678
    %v2680 = vpop.f32.mrf.mxu0
    %v2681 = vadd.f32 %v2577, %v2680
    %2682 = vmatmul.bf16.gmra.mxu0 %v1232
    %v2683 = vpop.f32.mrf.mxu0
    %v2684 = vadd.f32 %v2580, %v2683
    %v2685 = vpop.f32.mrf.mxu0
    %v2686 = vadd.f32 %v2582, %v2685
    %2687 = vmatmul.bf16.gmra.mxu0 %v1235
    %v2688 = vpop.f32.mrf.mxu0
    %v2689 = vadd.f32 %v2585, %v2688
    %v2690 = vpop.f32.mrf.mxu0
    %v2691 = vadd.f32 %v2587, %v2690
    %2692 = vdwg.mxu0
    %v2693 = vmax.f32 %v1871, 0.0
    %v2694 = vmax.f32 %v2599, 0.0
    %v2695 = vmax.f32 %v1873, 0.0
    %v2696 = vmax.f32 %v2601, 0.0
    %v2697 = vmax.f32 %v1876, 0.0
    %v2698 = vmax.f32 %v2604, 0.0
    %v2699 = vmax.f32 %v1878, 0.0
    %v2700 = vmax.f32 %v2606, 0.0
    %v2701 = vmax.f32 %v1881, 0.0
    %v2702 = vmax.f32 %v2609, 0.0
    %v2703 = vmax.f32 %v1883, 0.0
    %v2704 = vmax.f32 %v2611, 0.0
    %v2705 = vmax.f32 %v1886, 0.0
    %v2706 = vmax.f32 %v2614, 0.0
    %v2707 = vmax.f32 %v1888, 0.0
    %v2708 = vmax.f32 %v2616, 0.0
    %v2709 = vmax.f32 %v1891, 0.0
    %v2710 = vmax.f32 %v2619, 0.0
    %v2711 = vmax.f32 %v1893, 0.0
    %v2712 = vmax.f32 %v2621, 0.0
    %v2713 = vmax.f32 %v1896, 0.0
    %v2714 = vmax.f32 %v2624, 0.0
    %v2715 = vmax.f32 %v1898, 0.0
    %v2716 = vmax.f32 %v2626, 0.0
    %v2717 = vmax.f32 %v1901, 0.0
    %v2718 = vmax.f32 %v2629, 0.0
    %v2719 = vmax.f32 %v1903, 0.0
    %v2720 = vmax.f32 %v2631, 0.0
    %v2721 = vmax.f32 %v1906, 0.0
    %v2722 = vmax.f32 %v2634, 0.0
    %v2723 = vmax.f32 %v1908, 0.0
    %v2724 = vmax.f32 %v2636, 0.0
    %v2725 = vmax.f32 %v1911, 0.0
    %v2726 = vmax.f32 %v2639, 0.0
    %v2727 = vmax.f32 %v1913, 0.0
    %v2728 = vmax.f32 %v2641, 0.0
    %v2729 = vmax.f32 %v1916, 0.0
    %v2730 = vmax.f32 %v2644, 0.0
    %v2731 = vmax.f32 %v1918, 0.0
    %v2732 = vmax.f32 %v2646, 0.0
    %v2733 = vmax.f32 %v1921, 0.0
    %v2734 = vmax.f32 %v2649, 0.0
    %v2735 = vmax.f32 %v1923, 0.0
    %v2736 = vmax.f32 %v2651, 0.0
    %v2737 = vmax.f32 %v1926, 0.0
    %v2738 = vmax.f32 %v2654, 0.0
    %v2739 = vmax.f32 %v1928, 0.0
    %v2740 = vmax.f32 %v2656, 0.0
    %v2741 = vmax.f32 %v1931, 0.0
    %v2742 = vmax.f32 %v2659, 0.0
    %v2743 = vmax.f32 %v1933, 0.0
    %v2744 = vmax.f32 %v2661, 0.0
    %v2745 = vmax.f32 %v1936, 0.0
    %v2746 = vmax.f32 %v2664, 0.0
    %v2747 = vmax.f32 %v1938, 0.0
    %v2748 = vmax.f32 %v2666, 0.0
    %v2749 = vmax.f32 %v1941, 0.0
    %v2750 = vmax.f32 %v2669, 0.0
    %v2751 = vmax.f32 %v1943, 0.0
    %v2752 = vmax.f32 %v2671, 0.0
    %v2753 = vmax.f32 %v1946, 0.0
    %v2754 = vmax.f32 %v2674, 0.0
    %v2755 = vmax.f32 %v1948, 0.0
    %v2756 = vmax.f32 %v2676, 0.0
    %v2757 = vmax.f32 %v1951, 0.0
    %v2758 = vmax.f32 %v2679, 0.0
    %v2759 = vmax.f32 %v1953, 0.0
    %v2760 = vmax.f32 %v2681, 0.0
    %v2761 = vmax.f32 %v1956, 0.0
    %v2762 = vmax.f32 %v2684, 0.0
    %v2763 = vmax.f32 %v1958, 0.0
    %v2764 = vmax.f32 %v2686, 0.0
    %v2765 = vmax.f32 %v1961, 0.0
    %v2766 = vmax.f32 %v2689, 0.0
    %v2767 = vmax.f32 %v1963, 0.0
    %v2768 = vmax.f32 %v2691, 0.0
    %v2769 = vpack.c.bf16 %v2695, %v2693
    %v2770 = vpack.c.bf16 %v2696, %v2694
    %v2771 = vpack.c.bf16 %v2699, %v2697
    %v2772 = vpack.c.bf16 %v2700, %v2698
    %v2773 = vpack.c.bf16 %v2703, %v2701
    %v2774 = vpack.c.bf16 %v2704, %v2702
    %v2775 = vpack.c.bf16 %v2707, %v2705
    %v2776 = vpack.c.bf16 %v2708, %v2706
    %v2777 = vpack.c.bf16 %v2711, %v2709
    %v2778 = vpack.c.bf16 %v2712, %v2710
    %v2779 = vpack.c.bf16 %v2715, %v2713
    %v2780 = vpack.c.bf16 %v2716, %v2714
    %v2781 = vpack.c.bf16 %v2719, %v2717
    %v2782 = vpack.c.bf16 %v2720, %v2718
    %v2783 = vpack.c.bf16 %v2723, %v2721
    %v2784 = vpack.c.bf16 %v2724, %v2722
    %v2785 = vpack.c.bf16 %v2727, %v2725
    %v2786 = vpack.c.bf16 %v2728, %v2726
    %v2787 = vpack.c.bf16 %v2731, %v2729
    %v2788 = vpack.c.bf16 %v2732, %v2730
    %v2789 = vpack.c.bf16 %v2735, %v2733
    %v2790 = vpack.c.bf16 %v2736, %v2734
    %v2791 = vpack.c.bf16 %v2739, %v2737
    %v2792 = vpack.c.bf16 %v2740, %v2738
    %v2793 = vpack.c.bf16 %v2743, %v2741
    %v2794 = vpack.c.bf16 %v2744, %v2742
    %v2795 = vpack.c.bf16 %v2747, %v2745
    %v2796 = vpack.c.bf16 %v2748, %v2746
    %v2797 = vpack.c.bf16 %v2751, %v2749
    %v2798 = vpack.c.bf16 %v2752, %v2750
    %v2799 = vpack.c.bf16 %v2755, %v2753
    %v2800 = vpack.c.bf16 %v2756, %v2754
    %v2801 = vpack.c.bf16 %v2759, %v2757
    %v2802 = vpack.c.bf16 %v2760, %v2758
    %v2803 = vpack.c.bf16 %v2763, %v2761
    %v2804 = vpack.c.bf16 %v2764, %v2762
    %v2805 = vpack.c.bf16 %v2767, %v2765
    %v2806 = vpack.c.bf16 %v2768, %v2766
    %v2807 = vld [vmem:[#allocation8] sm:$0xf]
    %v2808 = vld [vmem:[#allocation8 + $0x4] sm:$0xf]
    %v2809 = vld [vmem:[#allocation8 + $0x8] sm:$0xf]
    %v2810 = vld [vmem:[#allocation8 + $0xc] sm:$0xf]
    %v2811 = vld [vmem:[#allocation8 + $0x10] sm:$0xf]
    %v2812 = vld [vmem:[#allocation8 + $0x14] sm:$0xf]
    %v2813 = vld [vmem:[#allocation8 + $0x18] sm:$0xf]
    %v2814 = vld [vmem:[#allocation8 + $0x1c] sm:$0xf]
    %v2815 = vld [vmem:[#allocation8 + $0x20] sm:$0xf]
    %v2816 = vld [vmem:[#allocation8 + $0x24] sm:$0xf]
    %v2817 = vld [vmem:[#allocation8 + $0x28] sm:$0xf]
    %v2818 = vld [vmem:[#allocation8 + $0x2c] sm:$0xf]
    %v2819 = vld [vmem:[#allocation8 + $0x30] sm:$0xf]
    %v2820 = vld [vmem:[#allocation8 + $0x34] sm:$0xf]
    %v2821 = vld [vmem:[#allocation8 + $0x38] sm:$0xf]
    %v2822 = vld [vmem:[#allocation8 + $0x3c] sm:$0xf]
    %v2823 = vld [vmem:[#allocation8 + $0x40] sm:$0xf]
    %v2824 = vld [vmem:[#allocation8 + $0x44] sm:$0xf]
    %v2825 = vld [vmem:[#allocation8 + $0x48] sm:$0xf]
    %v2826 = vld [vmem:[#allocation8 + $0x4c] sm:$0xf]
    %v2827 = vld [vmem:[#allocation8 + $0x50] sm:$0xf]
    %v2828 = vld [vmem:[#allocation8 + $0x54] sm:$0xf]
    %v2829 = vld [vmem:[#allocation8 + $0x58] sm:$0xf]
    %v2830 = vld [vmem:[#allocation8 + $0x5c] sm:$0xf]
    %v2831 = vld [vmem:[#allocation8 + $0x60] sm:$0xf]
    %v2832 = vld [vmem:[#allocation8 + $0x64] sm:$0xf]
    %v2833 = vld [vmem:[#allocation8 + $0x68] sm:$0xf]
    %v2834 = vld [vmem:[#allocation8 + $0x6c] sm:$0xf]
    %v2835 = vld [vmem:[#allocation8 + $0x70] sm:$0xf]
    %v2836 = vld [vmem:[#allocation8 + $0x74] sm:$0xf]
    %v2837 = vld [vmem:[#allocation8 + $0x78] sm:$0xf]
    %v2838 = vld [vmem:[#allocation8 + $0x7c] sm:$0xf]
    %v2839 = vld [vmem:[#allocation10] sm:$0x1]
    %v2841 = vperm.slane %v2839, 0
    %v2875 = vunpack.c.l.b16 %v2807
    %v2876 = vunpack.c.l.b16 %v2808
    %v2877 = vunpack.c.l.b16 %v2809
    %v2878 = vunpack.c.l.b16 %v2810
    %v2879 = vunpack.c.l.b16 %v2811
    %v2880 = vunpack.c.l.b16 %v2812
    %v2881 = vunpack.c.l.b16 %v2813
    %v2882 = vunpack.c.l.b16 %v2814
    %v2883 = vunpack.c.l.b16 %v2815
    %v2884 = vunpack.c.l.b16 %v2816
    %v2885 = vunpack.c.l.b16 %v2817
    %v2886 = vunpack.c.l.b16 %v2818
    %v2887 = vunpack.c.l.b16 %v2819
    %v2888 = vunpack.c.l.b16 %v2820
    %v2889 = vunpack.c.l.b16 %v2821
    %v2890 = vunpack.c.l.b16 %v2822
    %v2891 = vunpack.c.l.b16 %v2823
    %v2892 = vunpack.c.l.b16 %v2824
    %v2893 = vunpack.c.l.b16 %v2825
    %v2894 = vunpack.c.l.b16 %v2826
    %v2895 = vunpack.c.l.b16 %v2827
    %v2896 = vunpack.c.l.b16 %v2828
    %v2897 = vunpack.c.l.b16 %v2829
    %v2898 = vunpack.c.l.b16 %v2830
    %v2899 = vunpack.c.l.b16 %v2831
    %v2900 = vunpack.c.l.b16 %v2832
    %v2901 = vunpack.c.l.b16 %v2833
    %v2902 = vunpack.c.l.b16 %v2834
    %v2903 = vunpack.c.l.b16 %v2835
    %v2904 = vunpack.c.l.b16 %v2836
    %v2905 = vunpack.c.l.b16 %v2837
    %v2906 = vunpack.c.l.b16 %v2838
    %v2907 = vpack.c.b16 %v2876, %v2875
    %v2908 = vpack.c.b16 %v2878, %v2877
    %v2909 = vpack.c.b16 %v2880, %v2879
    %v2910 = vpack.c.b16 %v2882, %v2881
    %v2911 = vpack.c.b16 %v2884, %v2883
    %v2912 = vpack.c.b16 %v2886, %v2885
    %v2913 = vpack.c.b16 %v2888, %v2887
    %v2914 = vpack.c.b16 %v2890, %v2889
    %v2915 = vpack.c.b16 %v2892, %v2891
    %v2916 = vpack.c.b16 %v2894, %v2893
    %v2917 = vpack.c.b16 %v2896, %v2895
    %v2918 = vpack.c.b16 %v2898, %v2897
    %v2919 = vpack.c.b16 %v2900, %v2899
    %v2920 = vpack.c.b16 %v2902, %v2901
    %v2921 = vpack.c.b16 %v2904, %v2903
    %v2922 = vpack.c.b16 %v2906, %v2905
    %2939 = vmatpush.bf16.msra.mxu0 %v2914
    %2940 = vmatpush.bf16.msra.mxu0 %v2913
    %2941 = vmatpush.bf16.msra.mxu0 %v2912
    %2942 = vmatpush.bf16.msra.mxu0 %v2911
    %2943 = vmatpush.bf16.msra.mxu0 %v2910
    %2944 = vmatpush.bf16.msra.mxu0 %v2909
    %2945 = vmatpush.bf16.msra.mxu0 %v2908
    %2946 = vmatpush.bf16.msra.mxu0 %v2907
    %2947 = vmatmul.bf16.gmra.mxu0 %v2769
    %v2948 = vpop.f32.mrf.mxu0
    %v2949 = vadd.f32 %v2841, %v2948
    %v2950 = vpop.f32.mrf.mxu0
    %v2951 = vadd.f32 %v2841, %v2950
    %2952 = vmatmul.bf16.gmra.mxu0 %v2771
    %v2953 = vpop.f32.mrf.mxu0
    %v2954 = vadd.f32 %v2841, %v2953
    %v2955 = vpop.f32.mrf.mxu0
    %v2956 = vadd.f32 %v2841, %v2955
    %2957 = vmatmul.bf16.gmra.mxu0 %v2773
    %v2958 = vpop.f32.mrf.mxu0
    %v2959 = vadd.f32 %v2841, %v2958
    %v2960 = vpop.f32.mrf.mxu0
    %v2961 = vadd.f32 %v2841, %v2960
    %2962 = vmatmul.bf16.gmra.mxu0 %v2775
    %v2963 = vpop.f32.mrf.mxu0
    %v2964 = vadd.f32 %v2841, %v2963
    %v2965 = vpop.f32.mrf.mxu0
    %v2966 = vadd.f32 %v2841, %v2965
    %2967 = vmatmul.bf16.gmra.mxu0 %v2777
    %v2968 = vpop.f32.mrf.mxu0
    %v2969 = vadd.f32 %v2841, %v2968
    %v2970 = vpop.f32.mrf.mxu0
    %v2971 = vadd.f32 %v2841, %v2970
    %2972 = vmatmul.bf16.gmra.mxu0 %v2779
    %v2973 = vpop.f32.mrf.mxu0
    %v2974 = vadd.f32 %v2841, %v2973
    %v2975 = vpop.f32.mrf.mxu0
    %v2976 = vadd.f32 %v2841, %v2975
    %2977 = vmatmul.bf16.gmra.mxu0 %v2781
    %v2978 = vpop.f32.mrf.mxu0
    %v2979 = vadd.f32 %v2841, %v2978
    %v2980 = vpop.f32.mrf.mxu0
    %v2981 = vadd.f32 %v2841, %v2980
    %2982 = vmatmul.bf16.gmra.mxu0 %v2783
    %v2983 = vpop.f32.mrf.mxu0
    %v2984 = vadd.f32 %v2841, %v2983
    %v2985 = vpop.f32.mrf.mxu0
    %v2986 = vadd.f32 %v2841, %v2985
    %2987 = vmatmul.bf16.gmra.mxu0 %v2785
    %v2988 = vpop.f32.mrf.mxu0
    %v2989 = vadd.f32 %v2841, %v2988
    %v2990 = vpop.f32.mrf.mxu0
    %v2991 = vadd.f32 %v2841, %v2990
    %2992 = vmatmul.bf16.gmra.mxu0 %v2787
    %v2993 = vpop.f32.mrf.mxu0
    %v2994 = vadd.f32 %v2841, %v2993
    %v2995 = vpop.f32.mrf.mxu0
    %v2996 = vadd.f32 %v2841, %v2995
    %2997 = vmatmul.bf16.gmra.mxu0 %v2789
    %v2998 = vpop.f32.mrf.mxu0
    %v2999 = vadd.f32 %v2841, %v2998
    %v3000 = vpop.f32.mrf.mxu0
    %v3001 = vadd.f32 %v2841, %v3000
    %3002 = vmatmul.bf16.gmra.mxu0 %v2791
    %v3003 = vpop.f32.mrf.mxu0
    %v3004 = vadd.f32 %v2841, %v3003
    %v3005 = vpop.f32.mrf.mxu0
    %v3006 = vadd.f32 %v2841, %v3005
    %3007 = vmatmul.bf16.gmra.mxu0 %v2793
    %v3008 = vpop.f32.mrf.mxu0
    %v3009 = vadd.f32 %v2841, %v3008
    %v3010 = vpop.f32.mrf.mxu0
    %v3011 = vadd.f32 %v2841, %v3010
    %3012 = vmatmul.bf16.gmra.mxu0 %v2795
    %v3013 = vpop.f32.mrf.mxu0
    %v3014 = vadd.f32 %v2841, %v3013
    %v3015 = vpop.f32.mrf.mxu0
    %v3016 = vadd.f32 %v2841, %v3015
    %3017 = vmatmul.bf16.gmra.mxu0 %v2797
    %v3018 = vpop.f32.mrf.mxu0
    %v3019 = vadd.f32 %v2841, %v3018
    %v3020 = vpop.f32.mrf.mxu0
    %v3021 = vadd.f32 %v2841, %v3020
    %3022 = vmatmul.bf16.gmra.mxu0 %v2799
    %v3023 = vpop.f32.mrf.mxu0
    %v3024 = vadd.f32 %v2841, %v3023
    %v3025 = vpop.f32.mrf.mxu0
    %v3026 = vadd.f32 %v2841, %v3025
    %3027 = vmatmul.bf16.gmra.mxu0 %v2801
    %v3028 = vpop.f32.mrf.mxu0
    %v3029 = vadd.f32 %v2841, %v3028
    %v3030 = vpop.f32.mrf.mxu0
    %v3031 = vadd.f32 %v2841, %v3030
    %3032 = vmatmul.bf16.gmra.mxu0 %v2803
    %v3033 = vpop.f32.mrf.mxu0
    %v3034 = vadd.f32 %v2841, %v3033
    %v3035 = vpop.f32.mrf.mxu0
    %v3036 = vadd.f32 %v2841, %v3035
    %3037 = vmatmul.bf16.gmra.mxu0 %v2805
    %v3038 = vpop.f32.mrf.mxu0
    %v3039 = vadd.f32 %v2841, %v3038
    %v3040 = vpop.f32.mrf.mxu0
    %v3041 = vadd.f32 %v2841, %v3040
    %3042 = vdwg.mxu0
    %3043 = vmatpush.bf16.msra.mxu0 %v2922
    %3044 = vmatpush.bf16.msra.mxu0 %v2921
    %3045 = vmatpush.bf16.msra.mxu0 %v2920
    %3046 = vmatpush.bf16.msra.mxu0 %v2919
    %3047 = vmatpush.bf16.msra.mxu0 %v2918
    %3048 = vmatpush.bf16.msra.mxu0 %v2917
    %3049 = vmatpush.bf16.msra.mxu0 %v2916
    %3050 = vmatpush.bf16.msra.mxu0 %v2915
    %3051 = vmatmul.bf16.gmra.mxu0 %v2770
    %v3052 = vpop.f32.mrf.mxu0
    %v3053 = vadd.f32 %v2949, %v3052
    %v3054 = vpop.f32.mrf.mxu0
    %v3055 = vadd.f32 %v2951, %v3054
    %3056 = vmatmul.bf16.gmra.mxu0 %v2772
    %v3057 = vpop.f32.mrf.mxu0
    %v3058 = vadd.f32 %v2954, %v3057
    %v3059 = vpop.f32.mrf.mxu0
    %v3060 = vadd.f32 %v2956, %v3059
    %3061 = vmatmul.bf16.gmra.mxu0 %v2774
    %v3062 = vpop.f32.mrf.mxu0
    %v3063 = vadd.f32 %v2959, %v3062
    %v3064 = vpop.f32.mrf.mxu0
    %v3065 = vadd.f32 %v2961, %v3064
    %3066 = vmatmul.bf16.gmra.mxu0 %v2776
    %v3067 = vpop.f32.mrf.mxu0
    %v3068 = vadd.f32 %v2964, %v3067
    %v3069 = vpop.f32.mrf.mxu0
    %v3070 = vadd.f32 %v2966, %v3069
    %3071 = vmatmul.bf16.gmra.mxu0 %v2778
    %v3072 = vpop.f32.mrf.mxu0
    %v3073 = vadd.f32 %v2969, %v3072
    %v3074 = vpop.f32.mrf.mxu0
    %v3075 = vadd.f32 %v2971, %v3074
    %3076 = vmatmul.bf16.gmra.mxu0 %v2780
    %v3077 = vpop.f32.mrf.mxu0
    %v3078 = vadd.f32 %v2974, %v3077
    %v3079 = vpop.f32.mrf.mxu0
    %v3080 = vadd.f32 %v2976, %v3079
    %3081 = vmatmul.bf16.gmra.mxu0 %v2782
    %v3082 = vpop.f32.mrf.mxu0
    %v3083 = vadd.f32 %v2979, %v3082
    %v3084 = vpop.f32.mrf.mxu0
    %v3085 = vadd.f32 %v2981, %v3084
    %3086 = vmatmul.bf16.gmra.mxu0 %v2784
    %v3087 = vpop.f32.mrf.mxu0
    %v3088 = vadd.f32 %v2984, %v3087
    %v3089 = vpop.f32.mrf.mxu0
    %v3090 = vadd.f32 %v2986, %v3089
    %3091 = vmatmul.bf16.gmra.mxu0 %v2786
    %v3092 = vpop.f32.mrf.mxu0
    %v3093 = vadd.f32 %v2989, %v3092
    %v3094 = vpop.f32.mrf.mxu0
    %v3095 = vadd.f32 %v2991, %v3094
    %3096 = vmatmul.bf16.gmra.mxu0 %v2788
    %v3097 = vpop.f32.mrf.mxu0
    %v3098 = vadd.f32 %v2994, %v3097
    %v3099 = vpop.f32.mrf.mxu0
    %v3100 = vadd.f32 %v2996, %v3099
    %3101 = vmatmul.bf16.gmra.mxu0 %v2790
    %v3102 = vpop.f32.mrf.mxu0
    %v3103 = vadd.f32 %v2999, %v3102
    %v3104 = vpop.f32.mrf.mxu0
    %v3105 = vadd.f32 %v3001, %v3104
    %3106 = vmatmul.bf16.gmra.mxu0 %v2792
    %v3107 = vpop.f32.mrf.mxu0
    %v3108 = vadd.f32 %v3004, %v3107
    %v3109 = vpop.f32.mrf.mxu0
    %v3110 = vadd.f32 %v3006, %v3109
    %3111 = vmatmul.bf16.gmra.mxu0 %v2794
    %v3112 = vpop.f32.mrf.mxu0
    %v3113 = vadd.f32 %v3009, %v3112
    %v3114 = vpop.f32.mrf.mxu0
    %v3115 = vadd.f32 %v3011, %v3114
    %3116 = vmatmul.bf16.gmra.mxu0 %v2796
    %v3117 = vpop.f32.mrf.mxu0
    %v3118 = vadd.f32 %v3014, %v3117
    %v3119 = vpop.f32.mrf.mxu0
    %v3120 = vadd.f32 %v3016, %v3119
    %3121 = vmatmul.bf16.gmra.mxu0 %v2798
    %v3122 = vpop.f32.mrf.mxu0
    %v3123 = vadd.f32 %v3019, %v3122
    %v3124 = vpop.f32.mrf.mxu0
    %v3125 = vadd.f32 %v3021, %v3124
    %3126 = vmatmul.bf16.gmra.mxu0 %v2800
    %v3127 = vpop.f32.mrf.mxu0
    %v3128 = vadd.f32 %v3024, %v3127
    %v3129 = vpop.f32.mrf.mxu0
    %v3130 = vadd.f32 %v3026, %v3129
    %3131 = vmatmul.bf16.gmra.mxu0 %v2802
    %v3132 = vpop.f32.mrf.mxu0
    %v3133 = vadd.f32 %v3029, %v3132
    %v3134 = vpop.f32.mrf.mxu0
    %v3135 = vadd.f32 %v3031, %v3134
    %3136 = vmatmul.bf16.gmra.mxu0 %v2804
    %v3137 = vpop.f32.mrf.mxu0
    %v3138 = vadd.f32 %v3034, %v3137
    %v3139 = vpop.f32.mrf.mxu0
    %v3140 = vadd.f32 %v3036, %v3139
    %3141 = vmatmul.bf16.gmra.mxu0 %v2806
    %v3142 = vpop.f32.mrf.mxu0
    %v3143 = vadd.f32 %v3039, %v3142
    %v3144 = vpop.f32.mrf.mxu0
    %v3145 = vadd.f32 %v3041, %v3144
    %3146 = vdwg.mxu0
    %v3147 = vmax.f32 %v3053, 0.0
    %v3148 = vmax.f32 %v3055, 0.0
    %v3149 = vmax.f32 %v3058, 0.0
    %v3150 = vmax.f32 %v3060, 0.0
    %v3151 = vmax.f32 %v3063, 0.0
    %v3152 = vmax.f32 %v3065, 0.0
    %v3153 = vmax.f32 %v3068, 0.0
    %v3154 = vmax.f32 %v3070, 0.0
    %v3155 = vmax.f32 %v3073, 0.0
    %v3156 = vmax.f32 %v3075, 0.0
    %v3157 = vmax.f32 %v3078, 0.0
    %v3158 = vmax.f32 %v3080, 0.0
    %v3159 = vmax.f32 %v3083, 0.0
    %v3160 = vmax.f32 %v3085, 0.0
    %v3161 = vmax.f32 %v3088, 0.0
    %v3162 = vmax.f32 %v3090, 0.0
    %v3163 = vmax.f32 %v3093, 0.0
    %v3164 = vmax.f32 %v3095, 0.0
    %v3165 = vmax.f32 %v3098, 0.0
    %v3166 = vmax.f32 %v3100, 0.0
    %v3167 = vmax.f32 %v3103, 0.0
    %v3168 = vmax.f32 %v3105, 0.0
    %v3169 = vmax.f32 %v3108, 0.0
    %v3170 = vmax.f32 %v3110, 0.0
    %v3171 = vmax.f32 %v3113, 0.0
    %v3172 = vmax.f32 %v3115, 0.0
    %v3173 = vmax.f32 %v3118, 0.0
    %v3174 = vmax.f32 %v3120, 0.0
    %v3175 = vmax.f32 %v3123, 0.0
    %v3176 = vmax.f32 %v3125, 0.0
    %v3177 = vmax.f32 %v3128, 0.0
    %v3178 = vmax.f32 %v3130, 0.0
    %v3179 = vmax.f32 %v3133, 0.0
    %v3180 = vmax.f32 %v3135, 0.0
    %v3181 = vmax.f32 %v3138, 0.0
    %v3182 = vmax.f32 %v3140, 0.0
    %v3183 = vmax.f32 %v3143, 0.0
    %v3184 = vmax.f32 %v3145, 0.0
    %v3185 = vpack.c.bf16 %v3148, %v3147
    %v3186 = vpack.c.bf16 %v3150, %v3149
    %v3187 = vpack.c.bf16 %v3152, %v3151
    %v3188 = vpack.c.bf16 %v3154, %v3153
    %v3189 = vpack.c.bf16 %v3156, %v3155
    %v3190 = vpack.c.bf16 %v3158, %v3157
    %v3191 = vpack.c.bf16 %v3160, %v3159
    %v3192 = vpack.c.bf16 %v3162, %v3161
    %v3193 = vpack.c.bf16 %v3164, %v3163
    %v3194 = vpack.c.bf16 %v3166, %v3165
    %v3195 = vpack.c.bf16 %v3168, %v3167
    %v3196 = vpack.c.bf16 %v3170, %v3169
    %v3197 = vpack.c.bf16 %v3172, %v3171
    %v3198 = vpack.c.bf16 %v3174, %v3173
    %v3199 = vpack.c.bf16 %v3176, %v3175
    %v3200 = vpack.c.bf16 %v3178, %v3177
    %v3201 = vpack.c.bf16 %v3180, %v3179
    %v3202 = vpack.c.bf16 %v3182, %v3181
    %v3203 = vpack.c.bf16 %v3184, %v3183
    %v3204 = vld [vmem:[#allocation11] sm:$0xf]
    %v3205 = vld [vmem:[#allocation11 + $0x4] sm:$0xf]
    %v3206 = vld [vmem:[#allocation11 + $0x8] sm:$0xf]
    %v3207 = vld [vmem:[#allocation11 + $0xc] sm:$0xf]
    %v3208 = vld [vmem:[#allocation11 + $0x10] sm:$0xf]
    %v3209 = vld [vmem:[#allocation11 + $0x14] sm:$0xf]
    %v3210 = vld [vmem:[#allocation11 + $0x18] sm:$0xf]
    %v3211 = vld [vmem:[#allocation11 + $0x1c] sm:$0xf]
    %v3212 = vld [vmem:[#allocation11 + $0x20] sm:$0xf]
    %v3213 = vld [vmem:[#allocation11 + $0x24] sm:$0xf]
    %v3214 = vld [vmem:[#allocation11 + $0x28] sm:$0xf]
    %v3215 = vld [vmem:[#allocation11 + $0x2c] sm:$0xf]
    %v3216 = vld [vmem:[#allocation11 + $0x30] sm:$0xf]
    %v3217 = vld [vmem:[#allocation11 + $0x34] sm:$0xf]
    %v3218 = vld [vmem:[#allocation11 + $0x38] sm:$0xf]
    %v3219 = vld [vmem:[#allocation11 + $0x3c] sm:$0xf]
    %v3220 = vld [vmem:[#allocation13] sm:$0x1]
    %v3222 = vperm.slane %v3220, 0
    %v3240 = vunpack.c.l.b16 %v3204
    %v3241 = vunpack.c.l.b16 %v3205
    %v3242 = vunpack.c.l.b16 %v3206
    %v3243 = vunpack.c.l.b16 %v3207
    %v3244 = vunpack.c.l.b16 %v3208
    %v3245 = vunpack.c.l.b16 %v3209
    %v3246 = vunpack.c.l.b16 %v3210
    %v3247 = vunpack.c.l.b16 %v3211
    %v3248 = vunpack.c.l.b16 %v3212
    %v3249 = vunpack.c.l.b16 %v3213
    %v3250 = vunpack.c.l.b16 %v3214
    %v3251 = vunpack.c.l.b16 %v3215
    %v3252 = vunpack.c.l.b16 %v3216
    %v3253 = vunpack.c.l.b16 %v3217
    %v3254 = vunpack.c.l.b16 %v3218
    %v3255 = vunpack.c.l.b16 %v3219
    %v3256 = vpack.c.b16 %v3241, %v3240
    %v3257 = vpack.c.b16 %v3243, %v3242
    %v3258 = vpack.c.b16 %v3245, %v3244
    %v3259 = vpack.c.b16 %v3247, %v3246
    %v3260 = vpack.c.b16 %v3249, %v3248
    %v3261 = vpack.c.b16 %v3251, %v3250
    %v3262 = vpack.c.b16 %v3253, %v3252
    %v3263 = vpack.c.b16 %v3255, %v3254
    %3272 = vmatpush.bf16.msra.mxu0 %v3263
    %3273 = vmatpush.bf16.msra.mxu0 %v3262
    %3274 = vmatpush.bf16.msra.mxu0 %v3261
    %3275 = vmatpush.bf16.msra.mxu0 %v3260
    %3276 = vmatpush.bf16.msra.mxu0 %v3259
    %3277 = vmatpush.bf16.msra.mxu0 %v3258
    %3278 = vmatpush.bf16.msra.mxu0 %v3257
    %3279 = vmatpush.bf16.msra.mxu0 %v3256
    %3280 = vmatmul.bf16.gmra.mxu0 %v3185
    %v3281 = vpop.f32.mrf.mxu0
    %v3282 = vadd.f32 %v3222, %v3281
    %v3283 = vpop.f32.mrf.mxu0
    %v3284 = vadd.f32 %v3222, %v3283
    %3285 = vmatmul.bf16.gmra.mxu0 %v3186
    %v3286 = vpop.f32.mrf.mxu0
    %v3287 = vadd.f32 %v3222, %v3286
    %v3288 = vpop.f32.mrf.mxu0
    %v3289 = vadd.f32 %v3222, %v3288
    %3290 = vmatmul.bf16.gmra.mxu0 %v3187
    %v3291 = vpop.f32.mrf.mxu0
    %v3292 = vadd.f32 %v3222, %v3291
    %v3293 = vpop.f32.mrf.mxu0
    %v3294 = vadd.f32 %v3222, %v3293
    %3295 = vmatmul.bf16.gmra.mxu0 %v3188
    %v3296 = vpop.f32.mrf.mxu0
    %v3297 = vadd.f32 %v3222, %v3296
    %v3298 = vpop.f32.mrf.mxu0
    %v3299 = vadd.f32 %v3222, %v3298
    %3300 = vmatmul.bf16.gmra.mxu0 %v3189
    %v3301 = vpop.f32.mrf.mxu0
    %v3302 = vadd.f32 %v3222, %v3301
    %v3303 = vpop.f32.mrf.mxu0
    %v3304 = vadd.f32 %v3222, %v3303
    %3305 = vmatmul.bf16.gmra.mxu0 %v3190
    %v3306 = vpop.f32.mrf.mxu0
    %v3307 = vadd.f32 %v3222, %v3306
    %v3308 = vpop.f32.mrf.mxu0
    %v3309 = vadd.f32 %v3222, %v3308
    %3310 = vmatmul.bf16.gmra.mxu0 %v3191
    %v3311 = vpop.f32.mrf.mxu0
    %v3312 = vadd.f32 %v3222, %v3311
    %v3313 = vpop.f32.mrf.mxu0
    %v3314 = vadd.f32 %v3222, %v3313
    %3315 = vmatmul.bf16.gmra.mxu0 %v3192
    %v3316 = vpop.f32.mrf.mxu0
    %v3317 = vadd.f32 %v3222, %v3316
    %v3318 = vpop.f32.mrf.mxu0
    %v3319 = vadd.f32 %v3222, %v3318
    %3320 = vmatmul.bf16.gmra.mxu0 %v3193
    %v3321 = vpop.f32.mrf.mxu0
    %v3322 = vadd.f32 %v3222, %v3321
    %v3323 = vpop.f32.mrf.mxu0
    %v3324 = vadd.f32 %v3222, %v3323
    %3325 = vmatmul.bf16.gmra.mxu0 %v3194
    %v3326 = vpop.f32.mrf.mxu0
    %v3327 = vadd.f32 %v3222, %v3326
    %v3328 = vpop.f32.mrf.mxu0
    %v3329 = vadd.f32 %v3222, %v3328
    %3330 = vmatmul.bf16.gmra.mxu0 %v3195
    %v3331 = vpop.f32.mrf.mxu0
    %v3332 = vadd.f32 %v3222, %v3331
    %v3333 = vpop.f32.mrf.mxu0
    %v3334 = vadd.f32 %v3222, %v3333
    %3335 = vmatmul.bf16.gmra.mxu0 %v3196
    %v3336 = vpop.f32.mrf.mxu0
    %v3337 = vadd.f32 %v3222, %v3336
    %v3338 = vpop.f32.mrf.mxu0
    %v3339 = vadd.f32 %v3222, %v3338
    %3340 = vmatmul.bf16.gmra.mxu0 %v3197
    %v3341 = vpop.f32.mrf.mxu0
    %v3342 = vadd.f32 %v3222, %v3341
    %v3343 = vpop.f32.mrf.mxu0
    %v3344 = vadd.f32 %v3222, %v3343
    %3345 = vmatmul.bf16.gmra.mxu0 %v3198
    %v3346 = vpop.f32.mrf.mxu0
    %v3347 = vadd.f32 %v3222, %v3346
    %v3348 = vpop.f32.mrf.mxu0
    %v3349 = vadd.f32 %v3222, %v3348
    %3350 = vmatmul.bf16.gmra.mxu0 %v3199
    %v3351 = vpop.f32.mrf.mxu0
    %v3352 = vadd.f32 %v3222, %v3351
    %v3353 = vpop.f32.mrf.mxu0
    %v3354 = vadd.f32 %v3222, %v3353
    %3355 = vmatmul.bf16.gmra.mxu0 %v3200
    %v3356 = vpop.f32.mrf.mxu0
    %v3357 = vadd.f32 %v3222, %v3356
    %v3358 = vpop.f32.mrf.mxu0
    %v3359 = vadd.f32 %v3222, %v3358
    %3360 = vmatmul.bf16.gmra.mxu0 %v3201
    %v3361 = vpop.f32.mrf.mxu0
    %v3362 = vadd.f32 %v3222, %v3361
    %v3363 = vpop.f32.mrf.mxu0
    %v3364 = vadd.f32 %v3222, %v3363
    %3365 = vmatmul.bf16.gmra.mxu0 %v3202
    %v3366 = vpop.f32.mrf.mxu0
    %v3367 = vadd.f32 %v3222, %v3366
    %v3368 = vpop.f32.mrf.mxu0
    %v3369 = vadd.f32 %v3222, %v3368
    %3370 = vmatmul.bf16.gmra.mxu0 %v3203
    %v3371 = vpop.f32.mrf.mxu0
    %v3372 = vadd.f32 %v3222, %v3371
    %v3373 = vpop.f32.mrf.mxu0
    %v3374 = vadd.f32 %v3222, %v3373
    %3375 = vdwg.mxu0
    %v3376 = vmax.f32 %v3282, 0.0
    %v3377 = vmax.f32 %v3284, 0.0
    %v3378 = vmax.f32 %v3287, 0.0
    %v3379 = vmax.f32 %v3289, 0.0
    %v3380 = vmax.f32 %v3292, 0.0
    %v3381 = vmax.f32 %v3294, 0.0
    %v3382 = vmax.f32 %v3297, 0.0
    %v3383 = vmax.f32 %v3299, 0.0
    %v3384 = vmax.f32 %v3302, 0.0
    %v3385 = vmax.f32 %v3304, 0.0
    %v3386 = vmax.f32 %v3307, 0.0
    %v3387 = vmax.f32 %v3309, 0.0
    %v3388 = vmax.f32 %v3312, 0.0
    %v3389 = vmax.f32 %v3314, 0.0
    %v3390 = vmax.f32 %v3317, 0.0
    %v3391 = vmax.f32 %v3319, 0.0
    %v3392 = vmax.f32 %v3322, 0.0
    %v3393 = vmax.f32 %v3324, 0.0
    %v3394 = vmax.f32 %v3327, 0.0
    %v3395 = vmax.f32 %v3329, 0.0
    %v3396 = vmax.f32 %v3332, 0.0
    %v3397 = vmax.f32 %v3334, 0.0
    %v3398 = vmax.f32 %v3337, 0.0
    %v3399 = vmax.f32 %v3339, 0.0
    %v3400 = vmax.f32 %v3342, 0.0
    %v3401 = vmax.f32 %v3344, 0.0
    %v3402 = vmax.f32 %v3347, 0.0
    %v3403 = vmax.f32 %v3349, 0.0
    %v3404 = vmax.f32 %v3352, 0.0
    %v3405 = vmax.f32 %v3354, 0.0
    %v3406 = vmax.f32 %v3357, 0.0
    %v3407 = vmax.f32 %v3359, 0.0
    %v3408 = vmax.f32 %v3362, 0.0
    %v3409 = vmax.f32 %v3364, 0.0
    %v3410 = vmax.f32 %v3367, 0.0
    %v3411 = vmax.f32 %v3369, 0.0
    %v3412 = vmax.f32 %v3372, 0.0
    %v3413 = vmax.f32 %v3374, 0.0
    %v3414 = vpack.c.bf16 %v3377, %v3376
    %v3415 = vpack.c.bf16 %v3379, %v3378
    %v3416 = vpack.c.bf16 %v3381, %v3380
    %v3417 = vpack.c.bf16 %v3383, %v3382
    %v3418 = vpack.c.bf16 %v3385, %v3384
    %v3419 = vpack.c.bf16 %v3387, %v3386
    %v3420 = vpack.c.bf16 %v3389, %v3388
    %v3421 = vpack.c.bf16 %v3391, %v3390
    %v3422 = vpack.c.bf16 %v3393, %v3392
    %v3423 = vpack.c.bf16 %v3395, %v3394
    %v3424 = vpack.c.bf16 %v3397, %v3396
    %v3425 = vpack.c.bf16 %v3399, %v3398
    %v3426 = vpack.c.bf16 %v3401, %v3400
    %v3427 = vpack.c.bf16 %v3403, %v3402
    %v3428 = vpack.c.bf16 %v3405, %v3404
    %v3429 = vpack.c.bf16 %v3407, %v3406
    %v3430 = vpack.c.bf16 %v3409, %v3408
    %v3431 = vpack.c.bf16 %v3411, %v3410
    %v3432 = vpack.c.bf16 %v3413, %v3412
    %v3433 = vld [vmem:[#allocation14] sm:$0xff]
    %v3434 = vld [vmem:[#allocation14 + $0x8] sm:$0xff]
    %v3435 = vld [vmem:[#allocation14 + $0x10] sm:$0xff]
    %v3436 = vld [vmem:[#allocation14 + $0x18] sm:$0xff]
    %v3437 = vld [vmem:[#allocation14 + $0x20] sm:$0xff]
    %v3438 = vld [vmem:[#allocation14 + $0x28] sm:$0xff]
    %v3439 = vld [vmem:[#allocation14 + $0x30] sm:$0xff]
    %v3440 = vld [vmem:[#allocation14 + $0x38] sm:$0xff]
    %v3441 = vld [vmem:[#allocation14 + $0x40] sm:$0xff]
    %v3442 = vld [vmem:[#allocation14 + $0x48] sm:$0xff]
    %v3443 = vld [vmem:[#allocation14 + $0x50] sm:$0xff]
    %v3444 = vld [vmem:[#allocation14 + $0x58] sm:$0xff]
    %v3445 = vld [vmem:[#allocation14 + $0x60] sm:$0xff]
    %v3446 = vld [vmem:[#allocation14 + $0x68] sm:$0xff]
    %v3447 = vld [vmem:[#allocation14 + $0x70] sm:$0xff]
    %v3448 = vld [vmem:[#allocation14 + $0x78] sm:$0xff]
    %v3449 = vld [vmem:[#allocation16] sm:$0x3]
    %v3451 = vperm.slane %v3449, 0
    %v3452 = vperm.slane %v3449, 1
    %v3471 = vunpack.c.l.b16 %v3433
    %v3472 = vunpack.c.h.b16 %v3433
    %v3473 = vunpack.c.l.b16 %v3434
    %v3474 = vunpack.c.h.b16 %v3434
    %v3475 = vunpack.c.l.b16 %v3435
    %v3476 = vunpack.c.h.b16 %v3435
    %v3477 = vunpack.c.l.b16 %v3436
    %v3478 = vunpack.c.h.b16 %v3436
    %v3479 = vunpack.c.l.b16 %v3437
    %v3480 = vunpack.c.h.b16 %v3437
    %v3481 = vunpack.c.l.b16 %v3438
    %v3482 = vunpack.c.h.b16 %v3438
    %v3483 = vunpack.c.l.b16 %v3439
    %v3484 = vunpack.c.h.b16 %v3439
    %v3485 = vunpack.c.l.b16 %v3440
    %v3486 = vunpack.c.h.b16 %v3440
    %v3487 = vunpack.c.l.b16 %v3441
    %v3488 = vunpack.c.h.b16 %v3441
    %v3489 = vunpack.c.l.b16 %v3442
    %v3490 = vunpack.c.h.b16 %v3442
    %v3491 = vunpack.c.l.b16 %v3443
    %v3492 = vunpack.c.h.b16 %v3443
    %v3493 = vunpack.c.l.b16 %v3444
    %v3494 = vunpack.c.h.b16 %v3444
    %v3495 = vunpack.c.l.b16 %v3445
    %v3496 = vunpack.c.h.b16 %v3445
    %v3497 = vunpack.c.l.b16 %v3446
    %v3498 = vunpack.c.h.b16 %v3446
    %v3499 = vunpack.c.l.b16 %v3447
    %v3500 = vunpack.c.h.b16 %v3447
    %v3501 = vunpack.c.l.b16 %v3448
    %v3502 = vunpack.c.h.b16 %v3448
    %v3503 = vpack.c.b16 %v3473, %v3471
    %v3504 = vpack.c.b16 %v3474, %v3472
    %v3505 = vpack.c.b16 %v3477, %v3475
    %v3506 = vpack.c.b16 %v3478, %v3476
    %v3507 = vpack.c.b16 %v3481, %v3479
    %v3508 = vpack.c.b16 %v3482, %v3480
    %v3509 = vpack.c.b16 %v3485, %v3483
    %v3510 = vpack.c.b16 %v3486, %v3484
    %v3511 = vpack.c.b16 %v3489, %v3487
    %v3512 = vpack.c.b16 %v3490, %v3488
    %v3513 = vpack.c.b16 %v3493, %v3491
    %v3514 = vpack.c.b16 %v3494, %v3492
    %v3515 = vpack.c.b16 %v3497, %v3495
    %v3516 = vpack.c.b16 %v3498, %v3496
    %v3517 = vpack.c.b16 %v3501, %v3499
    %v3518 = vpack.c.b16 %v3502, %v3500
    %3535 = vmatpush.bf16.msra.mxu0 %v3517
    %3536 = vmatpush.bf16.msra.mxu0 %v3515
    %3537 = vmatpush.bf16.msra.mxu0 %v3513
    %3538 = vmatpush.bf16.msra.mxu0 %v3511
    %3539 = vmatpush.bf16.msra.mxu0 %v3509
    %3540 = vmatpush.bf16.msra.mxu0 %v3507
    %3541 = vmatpush.bf16.msra.mxu0 %v3505
    %3542 = vmatpush.bf16.msra.mxu0 %v3503
    %3543 = vmatmul.bf16.gmra.mxu0 %v3414
    %v3544 = vpop.f32.mrf.mxu0
    %v3545 = vadd.f32 %v3451, %v3544
    %v3546 = vpop.f32.mrf.mxu0
    %v3547 = vadd.f32 %v3451, %v3546
    %3548 = vmatmul.bf16.gmra.mxu0 %v3415
    %v3549 = vpop.f32.mrf.mxu0
    %v3550 = vadd.f32 %v3451, %v3549
    %v3551 = vpop.f32.mrf.mxu0
    %v3552 = vadd.f32 %v3451, %v3551
    %3553 = vmatmul.bf16.gmra.mxu0 %v3416
    %v3554 = vpop.f32.mrf.mxu0
    %v3555 = vadd.f32 %v3451, %v3554
    %v3556 = vpop.f32.mrf.mxu0
    %v3557 = vadd.f32 %v3451, %v3556
    %3558 = vmatmul.bf16.gmra.mxu0 %v3417
    %v3559 = vpop.f32.mrf.mxu0
    %v3560 = vadd.f32 %v3451, %v3559
    %v3561 = vpop.f32.mrf.mxu0
    %v3562 = vadd.f32 %v3451, %v3561
    %3563 = vmatmul.bf16.gmra.mxu0 %v3418
    %v3564 = vpop.f32.mrf.mxu0
    %v3565 = vadd.f32 %v3451, %v3564
    %v3566 = vpop.f32.mrf.mxu0
    %v3567 = vadd.f32 %v3451, %v3566
    %3568 = vmatmul.bf16.gmra.mxu0 %v3419
    %v3569 = vpop.f32.mrf.mxu0
    %v3570 = vadd.f32 %v3451, %v3569
    %v3571 = vpop.f32.mrf.mxu0
    %v3572 = vadd.f32 %v3451, %v3571
    %3573 = vmatmul.bf16.gmra.mxu0 %v3420
    %v3574 = vpop.f32.mrf.mxu0
    %v3575 = vadd.f32 %v3451, %v3574
    %v3576 = vpop.f32.mrf.mxu0
    %v3577 = vadd.f32 %v3451, %v3576
    %3578 = vmatmul.bf16.gmra.mxu0 %v3421
    %v3579 = vpop.f32.mrf.mxu0
    %v3580 = vadd.f32 %v3451, %v3579
    %v3581 = vpop.f32.mrf.mxu0
    %v3582 = vadd.f32 %v3451, %v3581
    %3583 = vmatmul.bf16.gmra.mxu0 %v3422
    %v3584 = vpop.f32.mrf.mxu0
    %v3585 = vadd.f32 %v3451, %v3584
    %v3586 = vpop.f32.mrf.mxu0
    %v3587 = vadd.f32 %v3451, %v3586
    %3588 = vmatmul.bf16.gmra.mxu0 %v3423
    %v3589 = vpop.f32.mrf.mxu0
    %v3590 = vadd.f32 %v3451, %v3589
    %v3591 = vpop.f32.mrf.mxu0
    %v3592 = vadd.f32 %v3451, %v3591
    %3593 = vmatmul.bf16.gmra.mxu0 %v3424
    %v3594 = vpop.f32.mrf.mxu0
    %v3595 = vadd.f32 %v3451, %v3594
    %v3596 = vpop.f32.mrf.mxu0
    %v3597 = vadd.f32 %v3451, %v3596
    %3598 = vmatmul.bf16.gmra.mxu0 %v3425
    %v3599 = vpop.f32.mrf.mxu0
    %v3600 = vadd.f32 %v3451, %v3599
    %v3601 = vpop.f32.mrf.mxu0
    %v3602 = vadd.f32 %v3451, %v3601
    %3603 = vmatmul.bf16.gmra.mxu0 %v3426
    %v3604 = vpop.f32.mrf.mxu0
    %v3605 = vadd.f32 %v3451, %v3604
    %v3606 = vpop.f32.mrf.mxu0
    %v3607 = vadd.f32 %v3451, %v3606
    %3608 = vmatmul.bf16.gmra.mxu0 %v3427
    %v3609 = vpop.f32.mrf.mxu0
    %v3610 = vadd.f32 %v3451, %v3609
    %v3611 = vpop.f32.mrf.mxu0
    %v3612 = vadd.f32 %v3451, %v3611
    %3613 = vmatmul.bf16.gmra.mxu0 %v3428
    %v3614 = vpop.f32.mrf.mxu0
    %v3615 = vadd.f32 %v3451, %v3614
    %v3616 = vpop.f32.mrf.mxu0
    %v3617 = vadd.f32 %v3451, %v3616
    %3618 = vmatmul.bf16.gmra.mxu0 %v3429
    %v3619 = vpop.f32.mrf.mxu0
    %v3620 = vadd.f32 %v3451, %v3619
    %v3621 = vpop.f32.mrf.mxu0
    %v3622 = vadd.f32 %v3451, %v3621
    %3623 = vmatmul.bf16.gmra.mxu0 %v3430
    %v3624 = vpop.f32.mrf.mxu0
    %v3625 = vadd.f32 %v3451, %v3624
    %v3626 = vpop.f32.mrf.mxu0
    %v3627 = vadd.f32 %v3451, %v3626
    %3628 = vmatmul.bf16.gmra.mxu0 %v3431
    %v3629 = vpop.f32.mrf.mxu0
    %v3630 = vadd.f32 %v3451, %v3629
    %v3631 = vpop.f32.mrf.mxu0
    %v3632 = vadd.f32 %v3451, %v3631
    %3633 = vmatmul.bf16.gmra.mxu0 %v3432
    %v3634 = vpop.f32.mrf.mxu0
    %v3635 = vadd.f32 %v3451, %v3634
    %v3636 = vpop.f32.mrf.mxu0
    %v3637 = vadd.f32 %v3451, %v3636
    %3638 = vdwg.mxu0
    %3639 = vmatpush.bf16.msra.mxu0 %v3518
    %3640 = vmatpush.bf16.msra.mxu0 %v3516
    %3641 = vmatpush.bf16.msra.mxu0 %v3514
    %3642 = vmatpush.bf16.msra.mxu0 %v3512
    %3643 = vmatpush.bf16.msra.mxu0 %v3510
    %3644 = vmatpush.bf16.msra.mxu0 %v3508
    %3645 = vmatpush.bf16.msra.mxu0 %v3506
    %3646 = vmatpush.bf16.msra.mxu0 %v3504
    %3647 = vmatmul.bf16.gmra.mxu0 %v3414
    %v3648 = vpop.f32.mrf.mxu0
    %v3649 = vadd.f32 %v3452, %v3648
    %v3650 = vpop.f32.mrf.mxu0
    %v3651 = vadd.f32 %v3452, %v3650
    %3652 = vmatmul.bf16.gmra.mxu0 %v3415
    %v3653 = vpop.f32.mrf.mxu0
    %v3654 = vadd.f32 %v3452, %v3653
    %v3655 = vpop.f32.mrf.mxu0
    %v3656 = vadd.f32 %v3452, %v3655
    %3657 = vmatmul.bf16.gmra.mxu0 %v3416
    %v3658 = vpop.f32.mrf.mxu0
    %v3659 = vadd.f32 %v3452, %v3658
    %v3660 = vpop.f32.mrf.mxu0
    %v3661 = vadd.f32 %v3452, %v3660
    %3662 = vmatmul.bf16.gmra.mxu0 %v3417
    %v3663 = vpop.f32.mrf.mxu0
    %v3664 = vadd.f32 %v3452, %v3663
    %v3665 = vpop.f32.mrf.mxu0
    %v3666 = vadd.f32 %v3452, %v3665
    %3667 = vmatmul.bf16.gmra.mxu0 %v3418
    %v3668 = vpop.f32.mrf.mxu0
    %v3669 = vadd.f32 %v3452, %v3668
    %v3670 = vpop.f32.mrf.mxu0
    %v3671 = vadd.f32 %v3452, %v3670
    %3672 = vmatmul.bf16.gmra.mxu0 %v3419
    %v3673 = vpop.f32.mrf.mxu0
    %v3674 = vadd.f32 %v3452, %v3673
    %v3675 = vpop.f32.mrf.mxu0
    %v3676 = vadd.f32 %v3452, %v3675
    %3677 = vmatmul.bf16.gmra.mxu0 %v3420
    %v3678 = vpop.f32.mrf.mxu0
    %v3679 = vadd.f32 %v3452, %v3678
    %v3680 = vpop.f32.mrf.mxu0
    %v3681 = vadd.f32 %v3452, %v3680
    %3682 = vmatmul.bf16.gmra.mxu0 %v3421
    %v3683 = vpop.f32.mrf.mxu0
    %v3684 = vadd.f32 %v3452, %v3683
    %v3685 = vpop.f32.mrf.mxu0
    %v3686 = vadd.f32 %v3452, %v3685
    %3687 = vmatmul.bf16.gmra.mxu0 %v3422
    %v3688 = vpop.f32.mrf.mxu0
    %v3689 = vadd.f32 %v3452, %v3688
    %v3690 = vpop.f32.mrf.mxu0
    %v3691 = vadd.f32 %v3452, %v3690
    %3692 = vmatmul.bf16.gmra.mxu0 %v3423
    %v3693 = vpop.f32.mrf.mxu0
    %v3694 = vadd.f32 %v3452, %v3693
    %v3695 = vpop.f32.mrf.mxu0
    %v3696 = vadd.f32 %v3452, %v3695
    %3697 = vmatmul.bf16.gmra.mxu0 %v3424
    %v3698 = vpop.f32.mrf.mxu0
    %v3699 = vadd.f32 %v3452, %v3698
    %v3700 = vpop.f32.mrf.mxu0
    %v3701 = vadd.f32 %v3452, %v3700
    %3702 = vmatmul.bf16.gmra.mxu0 %v3425
    %v3703 = vpop.f32.mrf.mxu0
    %v3704 = vadd.f32 %v3452, %v3703
    %v3705 = vpop.f32.mrf.mxu0
    %v3706 = vadd.f32 %v3452, %v3705
    %3707 = vmatmul.bf16.gmra.mxu0 %v3426
    %v3708 = vpop.f32.mrf.mxu0
    %v3709 = vadd.f32 %v3452, %v3708
    %v3710 = vpop.f32.mrf.mxu0
    %v3711 = vadd.f32 %v3452, %v3710
    %3712 = vmatmul.bf16.gmra.mxu0 %v3427
    %v3713 = vpop.f32.mrf.mxu0
    %v3714 = vadd.f32 %v3452, %v3713
    %v3715 = vpop.f32.mrf.mxu0
    %v3716 = vadd.f32 %v3452, %v3715
    %3717 = vmatmul.bf16.gmra.mxu0 %v3428
    %v3718 = vpop.f32.mrf.mxu0
    %v3719 = vadd.f32 %v3452, %v3718
    %v3720 = vpop.f32.mrf.mxu0
    %v3721 = vadd.f32 %v3452, %v3720
    %3722 = vmatmul.bf16.gmra.mxu0 %v3429
    %v3723 = vpop.f32.mrf.mxu0
    %v3724 = vadd.f32 %v3452, %v3723
    %v3725 = vpop.f32.mrf.mxu0
    %v3726 = vadd.f32 %v3452, %v3725
    %3727 = vmatmul.bf16.gmra.mxu0 %v3430
    %v3728 = vpop.f32.mrf.mxu0
    %v3729 = vadd.f32 %v3452, %v3728
    %v3730 = vpop.f32.mrf.mxu0
    %v3731 = vadd.f32 %v3452, %v3730
    %3732 = vmatmul.bf16.gmra.mxu0 %v3431
    %v3733 = vpop.f32.mrf.mxu0
    %v3734 = vadd.f32 %v3452, %v3733
    %v3735 = vpop.f32.mrf.mxu0
    %v3736 = vadd.f32 %v3452, %v3735
    %3737 = vmatmul.bf16.gmra.mxu0 %v3432
    %v3738 = vpop.f32.mrf.mxu0
    %v3739 = vadd.f32 %v3452, %v3738
    %v3740 = vpop.f32.mrf.mxu0
    %v3741 = vadd.f32 %v3452, %v3740
    %3742 = vdwg.mxu0
    %v3743 = vmax.f32 %v3545, 0.0
    %v3744 = vmax.f32 %v3649, 0.0
    %v3745 = vmax.f32 %v3547, 0.0
    %v3746 = vmax.f32 %v3651, 0.0
    %v3747 = vmax.f32 %v3550, 0.0
    %v3748 = vmax.f32 %v3654, 0.0
    %v3749 = vmax.f32 %v3552, 0.0
    %v3750 = vmax.f32 %v3656, 0.0
    %v3751 = vmax.f32 %v3555, 0.0
    %v3752 = vmax.f32 %v3659, 0.0
    %v3753 = vmax.f32 %v3557, 0.0
    %v3754 = vmax.f32 %v3661, 0.0
    %v3755 = vmax.f32 %v3560, 0.0
    %v3756 = vmax.f32 %v3664, 0.0
    %v3757 = vmax.f32 %v3562, 0.0
    %v3758 = vmax.f32 %v3666, 0.0
    %v3759 = vmax.f32 %v3565, 0.0
    %v3760 = vmax.f32 %v3669, 0.0
    %v3761 = vmax.f32 %v3567, 0.0
    %v3762 = vmax.f32 %v3671, 0.0
    %v3763 = vmax.f32 %v3570, 0.0
    %v3764 = vmax.f32 %v3674, 0.0
    %v3765 = vmax.f32 %v3572, 0.0
    %v3766 = vmax.f32 %v3676, 0.0
    %v3767 = vmax.f32 %v3575, 0.0
    %v3768 = vmax.f32 %v3679, 0.0
    %v3769 = vmax.f32 %v3577, 0.0
    %v3770 = vmax.f32 %v3681, 0.0
    %v3771 = vmax.f32 %v3580, 0.0
    %v3772 = vmax.f32 %v3684, 0.0
    %v3773 = vmax.f32 %v3582, 0.0
    %v3774 = vmax.f32 %v3686, 0.0
    %v3775 = vmax.f32 %v3585, 0.0
    %v3776 = vmax.f32 %v3689, 0.0
    %v3777 = vmax.f32 %v3587, 0.0
    %v3778 = vmax.f32 %v3691, 0.0
    %v3779 = vmax.f32 %v3590, 0.0
    %v3780 = vmax.f32 %v3694, 0.0
    %v3781 = vmax.f32 %v3592, 0.0
    %v3782 = vmax.f32 %v3696, 0.0
    %v3783 = vmax.f32 %v3595, 0.0
    %v3784 = vmax.f32 %v3699, 0.0
    %v3785 = vmax.f32 %v3597, 0.0
    %v3786 = vmax.f32 %v3701, 0.0
    %v3787 = vmax.f32 %v3600, 0.0
    %v3788 = vmax.f32 %v3704, 0.0
    %v3789 = vmax.f32 %v3602, 0.0
    %v3790 = vmax.f32 %v3706, 0.0
    %v3791 = vmax.f32 %v3605, 0.0
    %v3792 = vmax.f32 %v3709, 0.0
    %v3793 = vmax.f32 %v3607, 0.0
    %v3794 = vmax.f32 %v3711, 0.0
    %v3795 = vmax.f32 %v3610, 0.0
    %v3796 = vmax.f32 %v3714, 0.0
    %v3797 = vmax.f32 %v3612, 0.0
    %v3798 = vmax.f32 %v3716, 0.0
    %v3799 = vmax.f32 %v3615, 0.0
    %v3800 = vmax.f32 %v3719, 0.0
    %v3801 = vmax.f32 %v3617, 0.0
    %v3802 = vmax.f32 %v3721, 0.0
    %v3803 = vmax.f32 %v3620, 0.0
    %v3804 = vmax.f32 %v3724, 0.0
    %v3805 = vmax.f32 %v3622, 0.0
    %v3806 = vmax.f32 %v3726, 0.0
    %v3807 = vmax.f32 %v3625, 0.0
    %v3808 = vmax.f32 %v3729, 0.0
    %v3809 = vmax.f32 %v3627, 0.0
    %v3810 = vmax.f32 %v3731, 0.0
    %v3811 = vmax.f32 %v3630, 0.0
    %v3812 = vmax.f32 %v3734, 0.0
    %v3813 = vmax.f32 %v3632, 0.0
    %v3814 = vmax.f32 %v3736, 0.0
    %v3815 = vmax.f32 %v3635, 0.0
    %v3816 = vmax.f32 %v3739, 0.0
    %v3817 = vmax.f32 %v3637, 0.0
    %v3818 = vmax.f32 %v3741, 0.0
    %v3819 = vpack.c.bf16 %v3745, %v3743
    %v3820 = vpack.c.bf16 %v3746, %v3744
    %v3821 = vpack.c.bf16 %v3749, %v3747
    %v3822 = vpack.c.bf16 %v3750, %v3748
    %v3823 = vpack.c.bf16 %v3753, %v3751
    %v3824 = vpack.c.bf16 %v3754, %v3752
    %v3825 = vpack.c.bf16 %v3757, %v3755
    %v3826 = vpack.c.bf16 %v3758, %v3756
    %v3827 = vpack.c.bf16 %v3761, %v3759
    %v3828 = vpack.c.bf16 %v3762, %v3760
    %v3829 = vpack.c.bf16 %v3765, %v3763
    %v3830 = vpack.c.bf16 %v3766, %v3764
    %v3831 = vpack.c.bf16 %v3769, %v3767
    %v3832 = vpack.c.bf16 %v3770, %v3768
    %v3833 = vpack.c.bf16 %v3773, %v3771
    %v3834 = vpack.c.bf16 %v3774, %v3772
    %v3835 = vpack.c.bf16 %v3777, %v3775
    %v3836 = vpack.c.bf16 %v3778, %v3776
    %v3837 = vpack.c.bf16 %v3781, %v3779
    %v3838 = vpack.c.bf16 %v3782, %v3780
    %v3839 = vpack.c.bf16 %v3785, %v3783
    %v3840 = vpack.c.bf16 %v3786, %v3784
    %v3841 = vpack.c.bf16 %v3789, %v3787
    %v3842 = vpack.c.bf16 %v3790, %v3788
    %v3843 = vpack.c.bf16 %v3793, %v3791
    %v3844 = vpack.c.bf16 %v3794, %v3792
    %v3845 = vpack.c.bf16 %v3797, %v3795
    %v3846 = vpack.c.bf16 %v3798, %v3796
    %v3847 = vpack.c.bf16 %v3801, %v3799
    %v3848 = vpack.c.bf16 %v3802, %v3800
    %v3849 = vpack.c.bf16 %v3805, %v3803
    %v3850 = vpack.c.bf16 %v3806, %v3804
    %v3851 = vpack.c.bf16 %v3809, %v3807
    %v3852 = vpack.c.bf16 %v3810, %v3808
    %v3853 = vpack.c.bf16 %v3813, %v3811
    %v3854 = vpack.c.bf16 %v3814, %v3812
    %v3855 = vpack.c.bf16 %v3817, %v3815
    %v3856 = vpack.c.bf16 %v3818, %v3816
    %v3857 = vld [vmem:[%s9] sm:$0xff]
    %v3858 = vld [vmem:[%s9 + $0x8] sm:$0xff]
    %v3859 = vld [vmem:[%s9 + $0x10] sm:$0xff]
    %v3860 = vld [vmem:[%s9 + $0x18] sm:$0xf]
    %v3861 = vld [vmem:[%s9 + $0x1c] sm:$0xff]
    %v3862 = vld [vmem:[%s9 + $0x24] sm:$0xff]
    %v3863 = vld [vmem:[%s9 + $0x2c] sm:$0xff]
    %v3864 = vld [vmem:[%s9 + $0x34] sm:$0xf]
    %v3865 = vld [vmem:[%s9 + $0x38] sm:$0xff]
    %v3866 = vld [vmem:[%s9 + $0x40] sm:$0xff]
    %v3867 = vld [vmem:[%s9 + $0x48] sm:$0xff]
    %v3868 = vld [vmem:[%s9 + $0x50] sm:$0xf]
    %v3869 = vld [vmem:[%s9 + $0x54] sm:$0xff]
    %v3870 = vld [vmem:[%s9 + $0x5c] sm:$0xff]
    %v3871 = vld [vmem:[%s9 + $0x64] sm:$0xff]
    %v3872 = vld [vmem:[%s9 + $0x6c] sm:$0xf]
    %v3873 = vld [vmem:[%s9 + $0x70] sm:$0xff]
    %v3874 = vld [vmem:[%s9 + $0x78] sm:$0xff]
    %v3875 = vld [vmem:[%s9 + $0x80] sm:$0xff]
    %v3876 = vld [vmem:[%s9 + $0x88] sm:$0xf]
    %v3877 = vld [vmem:[%s9 + $0x8c] sm:$0xff]
    %v3878 = vld [vmem:[%s9 + $0x94] sm:$0xff]
    %v3879 = vld [vmem:[%s9 + $0x9c] sm:$0xff]
    %v3880 = vld [vmem:[%s9 + $0xa4] sm:$0xf]
    %v3881 = vld [vmem:[%s9 + $0xa8] sm:$0xff]
    %v3882 = vld [vmem:[%s9 + $0xb0] sm:$0xff]
    %v3883 = vld [vmem:[%s9 + $0xb8] sm:$0xff]
    %v3884 = vld [vmem:[%s9 + $0xc0] sm:$0xf]
    %v3885 = vld [vmem:[%s9 + $0xc4] sm:$0xff]
    %v3886 = vld [vmem:[%s9 + $0xcc] sm:$0xff]
    %v3887 = vld [vmem:[%s9 + $0xd4] sm:$0xff]
    %v3888 = vld [vmem:[%s9 + $0xdc] sm:$0xf]
    %v3889 = vld [vmem:[%s9 + $0xe0] sm:$0xff]
    %v3890 = vld [vmem:[%s9 + $0xe8] sm:$0xff]
    %v3891 = vld [vmem:[%s9 + $0xf0] sm:$0xff]
    %v3892 = vld [vmem:[%s9 + $0xf8] sm:$0xf]
    %v3893 = vld [vmem:[%s9 + $0xfc] sm:$0xff]
    %v3894 = vld [vmem:[%s9 + $0x104] sm:$0xff]
    %v3895 = vld [vmem:[%s9 + $0x10c] sm:$0xff]
    %v3896 = vld [vmem:[%s9 + $0x114] sm:$0xf]
    %v3897 = vld [vmem:[%s9 + $0x118] sm:$0xff]
    %v3898 = vld [vmem:[%s9 + $0x120] sm:$0xff]
    %v3899 = vld [vmem:[%s9 + $0x128] sm:$0xff]
    %v3900 = vld [vmem:[%s9 + $0x130] sm:$0xf]
    %v3901 = vld [vmem:[%s9 + $0x134] sm:$0xff]
    %v3902 = vld [vmem:[%s9 + $0x13c] sm:$0xff]
    %v3903 = vld [vmem:[%s9 + $0x144] sm:$0xff]
    %v3904 = vld [vmem:[%s9 + $0x14c] sm:$0xf]
    %v3905 = vld [vmem:[%s9 + $0x150] sm:$0xff]
    %v3906 = vld [vmem:[%s9 + $0x158] sm:$0xff]
    %v3907 = vld [vmem:[%s9 + $0x160] sm:$0xff]
    %v3908 = vld [vmem:[%s9 + $0x168] sm:$0xf]
    %v3909 = vld [vmem:[%s9 + $0x16c] sm:$0xff]
    %v3910 = vld [vmem:[%s9 + $0x174] sm:$0xff]
    %v3911 = vld [vmem:[%s9 + $0x17c] sm:$0xff]
    %v3912 = vld [vmem:[%s9 + $0x184] sm:$0xf]
    %v3913 = vld [vmem:[%s9 + $0x188] sm:$0xff]
    %v3914 = vld [vmem:[%s9 + $0x190] sm:$0xff]
    %v3915 = vld [vmem:[%s9 + $0x198] sm:$0xff]
    %v3916 = vld [vmem:[%s9 + $0x1a0] sm:$0xf]
    %v3917 = vld [vmem:[%s9 + $0x1a4] sm:$0xff]
    %v3918 = vld [vmem:[%s9 + $0x1ac] sm:$0xff]
    %v3919 = vld [vmem:[%s9 + $0x1b4] sm:$0xff]
    %v3920 = vld [vmem:[%s9 + $0x1bc] sm:$0xf]
    %v3921 = vld [vmem:[%s9 + $0x1c0] sm:$0xff]
    %v3922 = vld [vmem:[%s9 + $0x1c8] sm:$0xff]
    %v3923 = vld [vmem:[%s9 + $0x1d0] sm:$0xff]
    %v3924 = vld [vmem:[%s9 + $0x1d8] sm:$0xf]
    %v3925 = vld [vmem:[%s9 + $0x1dc] sm:$0xff]
    %v3926 = vld [vmem:[%s9 + $0x1e4] sm:$0xff]
    %v3927 = vld [vmem:[%s9 + $0x1ec] sm:$0xff]
    %v3928 = vld [vmem:[%s9 + $0x1f4] sm:$0xf]
    %v3929 = vld [vmem:[%s9 + $0x1f8] sm:$0xff]
    %v3930 = vld [vmem:[%s9 + $0x200] sm:$0xff]
    %v3931 = vld [vmem:[%s9 + $0x208] sm:$0xff]
    %v3932 = vld [vmem:[%s9 + $0x210] sm:$0xf]
    %v3933 = vld [vmem:[%s9 + $0x214] sm:$0xff]
    %v3934 = vld [vmem:[%s9 + $0x21c] sm:$0xff]
    %v3935 = vld [vmem:[%s9 + $0x224] sm:$0xff]
    %v3936 = vld [vmem:[%s9 + $0x22c] sm:$0xf]
    %v3937 = vld [vmem:[%s9 + $0x230] sm:$0xff]
    %v3938 = vld [vmem:[%s9 + $0x238] sm:$0xff]
    %v3939 = vld [vmem:[%s9 + $0x240] sm:$0xff]
    %v3940 = vld [vmem:[%s9 + $0x248] sm:$0xf]
    %v3941 = vld [vmem:[%s9 + $0x24c] sm:$0xff]
    %v3942 = vld [vmem:[%s9 + $0x254] sm:$0xff]
    %v3943 = vld [vmem:[%s9 + $0x25c] sm:$0xff]
    %v3944 = vld [vmem:[%s9 + $0x264] sm:$0xf]
    %v3945 = vld [vmem:[%s9 + $0x268] sm:$0xff]
    %v3946 = vld [vmem:[%s9 + $0x270] sm:$0xff]
    %v3947 = vld [vmem:[%s9 + $0x278] sm:$0xff]
    %v3948 = vld [vmem:[%s9 + $0x280] sm:$0xf]
    %v3949 = vld [vmem:[%s9 + $0x284] sm:$0xff]
    %v3950 = vld [vmem:[%s9 + $0x28c] sm:$0xff]
    %v3951 = vld [vmem:[%s9 + $0x294] sm:$0xff]
    %v3952 = vld [vmem:[%s9 + $0x29c] sm:$0xf]
    %v3953 = vld [vmem:[%s9 + $0x2a0] sm:$0xff]
    %v3954 = vld [vmem:[%s9 + $0x2a8] sm:$0xff]
    %v3955 = vld [vmem:[%s9 + $0x2b0] sm:$0xff]
    %v3956 = vld [vmem:[%s9 + $0x2b8] sm:$0xf]
    %v3957 = vld [vmem:[%s9 + $0x2bc] sm:$0xff]
    %v3958 = vld [vmem:[%s9 + $0x2c4] sm:$0xff]
    %v3959 = vld [vmem:[%s9 + $0x2cc] sm:$0xff]
    %v3960 = vld [vmem:[%s9 + $0x2d4] sm:$0xf]
    %v3961 = vld [vmem:[%s9 + $0x2d8] sm:$0xff]
    %v3962 = vld [vmem:[%s9 + $0x2e0] sm:$0xff]
    %v3963 = vld [vmem:[%s9 + $0x2e8] sm:$0xff]
    %v3964 = vld [vmem:[%s9 + $0x2f0] sm:$0xf]
    %v3965 = vld [vmem:[%s9 + $0x2f4] sm:$0xff]
    %v3966 = vld [vmem:[%s9 + $0x2fc] sm:$0xff]
    %v3967 = vld [vmem:[%s9 + $0x304] sm:$0xff]
    %v3968 = vld [vmem:[%s9 + $0x30c] sm:$0xf]
    %v3969 = vld [vmem:[%s9 + $0x310] sm:$0xff]
    %v3970 = vld [vmem:[%s9 + $0x318] sm:$0xff]
    %v3971 = vld [vmem:[%s9 + $0x320] sm:$0xff]
    %v3972 = vld [vmem:[%s9 + $0x328] sm:$0xf]
    %v3973 = vld [vmem:[%s9 + $0x32c] sm:$0xff]
    %v3974 = vld [vmem:[%s9 + $0x334] sm:$0xff]
    %v3975 = vld [vmem:[%s9 + $0x33c] sm:$0xff]
    %v3976 = vld [vmem:[%s9 + $0x344] sm:$0xf]
    %v3977 = vld [vmem:[%s9 + $0x348] sm:$0xff]
    %v3978 = vld [vmem:[%s9 + $0x350] sm:$0xff]
    %v3979 = vld [vmem:[%s9 + $0x358] sm:$0xff]
    %v3980 = vld [vmem:[%s9 + $0x360] sm:$0xf]
    %v3981 = vld [vmem:[%s9 + $0x364] sm:$0xff]
    %v3982 = vld [vmem:[%s9 + $0x36c] sm:$0xff]
    %v3983 = vld [vmem:[%s9 + $0x374] sm:$0xff]
    %v3984 = vld [vmem:[%s9 + $0x37c] sm:$0xf]
    %v3985 = vld [vmem:[#allocation17] sm:$0x7f]
    %v3987 = vperm.slane %v3985, 0
    %v3988 = vperm.slane %v3985, 1
    %v3989 = vperm.slane %v3985, 2
    %v3990 = vperm.slane %v3985, 3
    %v3991 = vperm.slane %v3985, 4
    %v3992 = vperm.slane %v3985, 5
    %v3993 = vperm.slane %v3985, 6
    %v4129 = vunpack.c.l.b16 %v3857
    %v4130 = vunpack.c.h.b16 %v3857
    %v4131 = vunpack.c.l.b16 %v3858
    %v4132 = vunpack.c.h.b16 %v3858
    %v4133 = vunpack.c.l.b16 %v3859
    %v4134 = vunpack.c.h.b16 %v3859
    %v4135 = vunpack.c.l.b16 %v3860
    %v4136 = vunpack.c.l.b16 %v3861
    %v4137 = vunpack.c.h.b16 %v3861
    %v4138 = vunpack.c.l.b16 %v3862
    %v4139 = vunpack.c.h.b16 %v3862
    %v4140 = vunpack.c.l.b16 %v3863
    %v4141 = vunpack.c.h.b16 %v3863
    %v4142 = vunpack.c.l.b16 %v3864
    %v4143 = vunpack.c.l.b16 %v3865
    %v4144 = vunpack.c.h.b16 %v3865
    %v4145 = vunpack.c.l.b16 %v3866
    %v4146 = vunpack.c.h.b16 %v3866
    %v4147 = vunpack.c.l.b16 %v3867
    %v4148 = vunpack.c.h.b16 %v3867
    %v4149 = vunpack.c.l.b16 %v3868
    %v4150 = vunpack.c.l.b16 %v3869
    %v4151 = vunpack.c.h.b16 %v3869
    %v4152 = vunpack.c.l.b16 %v3870
    %v4153 = vunpack.c.h.b16 %v3870
    %v4154 = vunpack.c.l.b16 %v3871
    %v4155 = vunpack.c.h.b16 %v3871
    %v4156 = vunpack.c.l.b16 %v3872
    %v4157 = vunpack.c.l.b16 %v3873
    %v4158 = vunpack.c.h.b16 %v3873
    %v4159 = vunpack.c.l.b16 %v3874
    %v4160 = vunpack.c.h.b16 %v3874
    %v4161 = vunpack.c.l.b16 %v3875
    %v4162 = vunpack.c.h.b16 %v3875
    %v4163 = vunpack.c.l.b16 %v3876
    %v4164 = vunpack.c.l.b16 %v3877
    %v4165 = vunpack.c.h.b16 %v3877
    %v4166 = vunpack.c.l.b16 %v3878
    %v4167 = vunpack.c.h.b16 %v3878
    %v4168 = vunpack.c.l.b16 %v3879
    %v4169 = vunpack.c.h.b16 %v3879
    %v4170 = vunpack.c.l.b16 %v3880
    %v4171 = vunpack.c.l.b16 %v3881
    %v4172 = vunpack.c.h.b16 %v3881
    %v4173 = vunpack.c.l.b16 %v3882
    %v4174 = vunpack.c.h.b16 %v3882
    %v4175 = vunpack.c.l.b16 %v3883
    %v4176 = vunpack.c.h.b16 %v3883
    %v4177 = vunpack.c.l.b16 %v3884
    %v4178 = vunpack.c.l.b16 %v3885
    %v4179 = vunpack.c.h.b16 %v3885
    %v4180 = vunpack.c.l.b16 %v3886
    %v4181 = vunpack.c.h.b16 %v3886
    %v4182 = vunpack.c.l.b16 %v3887
    %v4183 = vunpack.c.h.b16 %v3887
    %v4184 = vunpack.c.l.b16 %v3888
    %v4185 = vunpack.c.l.b16 %v3889
    %v4186 = vunpack.c.h.b16 %v3889
    %v4187 = vunpack.c.l.b16 %v3890
    %v4188 = vunpack.c.h.b16 %v3890
    %v4189 = vunpack.c.l.b16 %v3891
    %v4190 = vunpack.c.h.b16 %v3891
    %v4191 = vunpack.c.l.b16 %v3892
    %v4192 = vunpack.c.l.b16 %v3893
    %v4193 = vunpack.c.h.b16 %v3893
    %v4194 = vunpack.c.l.b16 %v3894
    %v4195 = vunpack.c.h.b16 %v3894
    %v4196 = vunpack.c.l.b16 %v3895
    %v4197 = vunpack.c.h.b16 %v3895
    %v4198 = vunpack.c.l.b16 %v3896
    %v4199 = vunpack.c.l.b16 %v3897
    %v4200 = vunpack.c.h.b16 %v3897
    %v4201 = vunpack.c.l.b16 %v3898
    %v4202 = vunpack.c.h.b16 %v3898
    %v4203 = vunpack.c.l.b16 %v3899
    %v4204 = vunpack.c.h.b16 %v3899
    %v4205 = vunpack.c.l.b16 %v3900
    %v4206 = vunpack.c.l.b16 %v3901
    %v4207 = vunpack.c.h.b16 %v3901
    %v4208 = vunpack.c.l.b16 %v3902
    %v4209 = vunpack.c.h.b16 %v3902
    %v4210 = vunpack.c.l.b16 %v3903
    %v4211 = vunpack.c.h.b16 %v3903
    %v4212 = vunpack.c.l.b16 %v3904
    %v4213 = vunpack.c.l.b16 %v3905
    %v4214 = vunpack.c.h.b16 %v3905
    %v4215 = vunpack.c.l.b16 %v3906
    %v4216 = vunpack.c.h.b16 %v3906
    %v4217 = vunpack.c.l.b16 %v3907
    %v4218 = vunpack.c.h.b16 %v3907
    %v4219 = vunpack.c.l.b16 %v3908
    %v4220 = vunpack.c.l.b16 %v3909
    %v4221 = vunpack.c.h.b16 %v3909
    %v4222 = vunpack.c.l.b16 %v3910
    %v4223 = vunpack.c.h.b16 %v3910
    %v4224 = vunpack.c.l.b16 %v3911
    %v4225 = vunpack.c.h.b16 %v3911
    %v4226 = vunpack.c.l.b16 %v3912
    %v4227 = vunpack.c.l.b16 %v3913
    %v4228 = vunpack.c.h.b16 %v3913
    %v4229 = vunpack.c.l.b16 %v3914
    %v4230 = vunpack.c.h.b16 %v3914
    %v4231 = vunpack.c.l.b16 %v3915
    %v4232 = vunpack.c.h.b16 %v3915
    %v4233 = vunpack.c.l.b16 %v3916
    %v4234 = vunpack.c.l.b16 %v3917
    %v4235 = vunpack.c.h.b16 %v3917
    %v4236 = vunpack.c.l.b16 %v3918
    %v4237 = vunpack.c.h.b16 %v3918
    %v4238 = vunpack.c.l.b16 %v3919
    %v4239 = vunpack.c.h.b16 %v3919
    %v4240 = vunpack.c.l.b16 %v3920
    %v4241 = vunpack.c.l.b16 %v3921
    %v4242 = vunpack.c.h.b16 %v3921
    %v4243 = vunpack.c.l.b16 %v3922
    %v4244 = vunpack.c.h.b16 %v3922
    %v4245 = vunpack.c.l.b16 %v3923
    %v4246 = vunpack.c.h.b16 %v3923
    %v4247 = vunpack.c.l.b16 %v3924
    %v4248 = vunpack.c.l.b16 %v3925
    %v4249 = vunpack.c.h.b16 %v3925
    %v4250 = vunpack.c.l.b16 %v3926
    %v4251 = vunpack.c.h.b16 %v3926
    %v4252 = vunpack.c.l.b16 %v3927
    %v4253 = vunpack.c.h.b16 %v3927
    %v4254 = vunpack.c.l.b16 %v3928
    %v4255 = vunpack.c.l.b16 %v3929
    %v4256 = vunpack.c.h.b16 %v3929
    %v4257 = vunpack.c.l.b16 %v3930
    %v4258 = vunpack.c.h.b16 %v3930
    %v4259 = vunpack.c.l.b16 %v3931
    %v4260 = vunpack.c.h.b16 %v3931
    %v4261 = vunpack.c.l.b16 %v3932
    %v4262 = vunpack.c.l.b16 %v3933
    %v4263 = vunpack.c.h.b16 %v3933
    %v4264 = vunpack.c.l.b16 %v3934
    %v4265 = vunpack.c.h.b16 %v3934
    %v4266 = vunpack.c.l.b16 %v3935
    %v4267 = vunpack.c.h.b16 %v3935
    %v4268 = vunpack.c.l.b16 %v3936
    %v4269 = vunpack.c.l.b16 %v3937
    %v4270 = vunpack.c.h.b16 %v3937
    %v4271 = vunpack.c.l.b16 %v3938
    %v4272 = vunpack.c.h.b16 %v3938
    %v4273 = vunpack.c.l.b16 %v3939
    %v4274 = vunpack.c.h.b16 %v3939
    %v4275 = vunpack.c.l.b16 %v3940
    %v4276 = vunpack.c.l.b16 %v3941
    %v4277 = vunpack.c.h.b16 %v3941
    %v4278 = vunpack.c.l.b16 %v3942
    %v4279 = vunpack.c.h.b16 %v3942
    %v4280 = vunpack.c.l.b16 %v3943
    %v4281 = vunpack.c.h.b16 %v3943
    %v4282 = vunpack.c.l.b16 %v3944
    %v4283 = vunpack.c.l.b16 %v3945
    %v4284 = vunpack.c.h.b16 %v3945
    %v4285 = vunpack.c.l.b16 %v3946
    %v4286 = vunpack.c.h.b16 %v3946
    %v4287 = vunpack.c.l.b16 %v3947
    %v4288 = vunpack.c.h.b16 %v3947
    %v4289 = vunpack.c.l.b16 %v3948
    %v4290 = vunpack.c.l.b16 %v3949
    %v4291 = vunpack.c.h.b16 %v3949
    %v4292 = vunpack.c.l.b16 %v3950
    %v4293 = vunpack.c.h.b16 %v3950
    %v4294 = vunpack.c.l.b16 %v3951
    %v4295 = vunpack.c.h.b16 %v3951
    %v4296 = vunpack.c.l.b16 %v3952
    %v4297 = vunpack.c.l.b16 %v3953
    %v4298 = vunpack.c.h.b16 %v3953
    %v4299 = vunpack.c.l.b16 %v3954
    %v4300 = vunpack.c.h.b16 %v3954
    %v4301 = vunpack.c.l.b16 %v3955
    %v4302 = vunpack.c.h.b16 %v3955
    %v4303 = vunpack.c.l.b16 %v3956
    %v4304 = vunpack.c.l.b16 %v3957
    %v4305 = vunpack.c.h.b16 %v3957
    %v4306 = vunpack.c.l.b16 %v3958
    %v4307 = vunpack.c.h.b16 %v3958
    %v4308 = vunpack.c.l.b16 %v3959
    %v4309 = vunpack.c.h.b16 %v3959
    %v4310 = vunpack.c.l.b16 %v3960
    %v4311 = vunpack.c.l.b16 %v3961
    %v4312 = vunpack.c.h.b16 %v3961
    %v4313 = vunpack.c.l.b16 %v3962
    %v4314 = vunpack.c.h.b16 %v3962
    %v4315 = vunpack.c.l.b16 %v3963
    %v4316 = vunpack.c.h.b16 %v3963
    %v4317 = vunpack.c.l.b16 %v3964
    %v4318 = vunpack.c.l.b16 %v3965
    %v4319 = vunpack.c.h.b16 %v3965
    %v4320 = vunpack.c.l.b16 %v3966
    %v4321 = vunpack.c.h.b16 %v3966
    %v4322 = vunpack.c.l.b16 %v3967
    %v4323 = vunpack.c.h.b16 %v3967
    %v4324 = vunpack.c.l.b16 %v3968
    %v4325 = vunpack.c.l.b16 %v3969
    %v4326 = vunpack.c.h.b16 %v3969
    %v4327 = vunpack.c.l.b16 %v3970
    %v4328 = vunpack.c.h.b16 %v3970
    %v4329 = vunpack.c.l.b16 %v3971
    %v4330 = vunpack.c.h.b16 %v3971
    %v4331 = vunpack.c.l.b16 %v3972
    %v4332 = vunpack.c.l.b16 %v3973
    %v4333 = vunpack.c.h.b16 %v3973
    %v4334 = vunpack.c.l.b16 %v3974
    %v4335 = vunpack.c.h.b16 %v3974
    %v4336 = vunpack.c.l.b16 %v3975
    %v4337 = vunpack.c.h.b16 %v3975
    %v4338 = vunpack.c.l.b16 %v3976
    %v4339 = vunpack.c.l.b16 %v3977
    %v4340 = vunpack.c.h.b16 %v3977
    %v4341 = vunpack.c.l.b16 %v3978
    %v4342 = vunpack.c.h.b16 %v3978
    %v4343 = vunpack.c.l.b16 %v3979
    %v4344 = vunpack.c.h.b16 %v3979
    %v4345 = vunpack.c.l.b16 %v3980
    %v4346 = vunpack.c.l.b16 %v3981
    %v4347 = vunpack.c.h.b16 %v3981
    %v4348 = vunpack.c.l.b16 %v3982
    %v4349 = vunpack.c.h.b16 %v3982
    %v4350 = vunpack.c.l.b16 %v3983
    %v4351 = vunpack.c.h.b16 %v3983
    %v4352 = vunpack.c.l.b16 %v3984
    %v4353 = vpack.c.b16 %v4136, %v4129
    %v4354 = vpack.c.b16 %v4137, %v4130
    %v4355 = vpack.c.b16 %v4138, %v4131
    %v4356 = vpack.c.b16 %v4139, %v4132
    %v4357 = vpack.c.b16 %v4140, %v4133
    %v4358 = vpack.c.b16 %v4141, %v4134
    %v4359 = vpack.c.b16 %v4142, %v4135
    %v4360 = vpack.c.b16 %v4150, %v4143
    %v4361 = vpack.c.b16 %v4151, %v4144
    %v4362 = vpack.c.b16 %v4152, %v4145
    %v4363 = vpack.c.b16 %v4153, %v4146
    %v4364 = vpack.c.b16 %v4154, %v4147
    %v4365 = vpack.c.b16 %v4155, %v4148
    %v4366 = vpack.c.b16 %v4156, %v4149
    %v4367 = vpack.c.b16 %v4164, %v4157
    %v4368 = vpack.c.b16 %v4165, %v4158
    %v4369 = vpack.c.b16 %v4166, %v4159
    %v4370 = vpack.c.b16 %v4167, %v4160
    %v4371 = vpack.c.b16 %v4168, %v4161
    %v4372 = vpack.c.b16 %v4169, %v4162
    %v4373 = vpack.c.b16 %v4170, %v4163
    %v4374 = vpack.c.b16 %v4178, %v4171
    %v4375 = vpack.c.b16 %v4179, %v4172
    %v4376 = vpack.c.b16 %v4180, %v4173
    %v4377 = vpack.c.b16 %v4181, %v4174
    %v4378 = vpack.c.b16 %v4182, %v4175
    %v4379 = vpack.c.b16 %v4183, %v4176
    %v4380 = vpack.c.b16 %v4184, %v4177
    %v4381 = vpack.c.b16 %v4192, %v4185
    %v4382 = vpack.c.b16 %v4193, %v4186
    %v4383 = vpack.c.b16 %v4194, %v4187
    %v4384 = vpack.c.b16 %v4195, %v4188
    %v4385 = vpack.c.b16 %v4196, %v4189
    %v4386 = vpack.c.b16 %v4197, %v4190
    %v4387 = vpack.c.b16 %v4198, %v4191
    %v4388 = vpack.c.b16 %v4206, %v4199
    %v4389 = vpack.c.b16 %v4207, %v4200
    %v4390 = vpack.c.b16 %v4208, %v4201
    %v4391 = vpack.c.b16 %v4209, %v4202
    %v4392 = vpack.c.b16 %v4210, %v4203
    %v4393 = vpack.c.b16 %v4211, %v4204
    %v4394 = vpack.c.b16 %v4212, %v4205
    %v4395 = vpack.c.b16 %v4220, %v4213
    %v4396 = vpack.c.b16 %v4221, %v4214
    %v4397 = vpack.c.b16 %v4222, %v4215
    %v4398 = vpack.c.b16 %v4223, %v4216
    %v4399 = vpack.c.b16 %v4224, %v4217
    %v4400 = vpack.c.b16 %v4225, %v4218
    %v4401 = vpack.c.b16 %v4226, %v4219
    %v4402 = vpack.c.b16 %v4234, %v4227
    %v4403 = vpack.c.b16 %v4235, %v4228
    %v4404 = vpack.c.b16 %v4236, %v4229
    %v4405 = vpack.c.b16 %v4237, %v4230
    %v4406 = vpack.c.b16 %v4238, %v4231
    %v4407 = vpack.c.b16 %v4239, %v4232
    %v4408 = vpack.c.b16 %v4240, %v4233
    %v4409 = vpack.c.b16 %v4248, %v4241
    %v4410 = vpack.c.b16 %v4249, %v4242
    %v4411 = vpack.c.b16 %v4250, %v4243
    %v4412 = vpack.c.b16 %v4251, %v4244
    %v4413 = vpack.c.b16 %v4252, %v4245
    %v4414 = vpack.c.b16 %v4253, %v4246
    %v4415 = vpack.c.b16 %v4254, %v4247
    %v4416 = vpack.c.b16 %v4262, %v4255
    %v4417 = vpack.c.b16 %v4263, %v4256
    %v4418 = vpack.c.b16 %v4264, %v4257
    %v4419 = vpack.c.b16 %v4265, %v4258
    %v4420 = vpack.c.b16 %v4266, %v4259
    %v4421 = vpack.c.b16 %v4267, %v4260
    %v4422 = vpack.c.b16 %v4268, %v4261
    %v4423 = vpack.c.b16 %v4276, %v4269
    %v4424 = vpack.c.b16 %v4277, %v4270
    %v4425 = vpack.c.b16 %v4278, %v4271
    %v4426 = vpack.c.b16 %v4279, %v4272
    %v4427 = vpack.c.b16 %v4280, %v4273
    %v4428 = vpack.c.b16 %v4281, %v4274
    %v4429 = vpack.c.b16 %v4282, %v4275
    %v4430 = vpack.c.b16 %v4290, %v4283
    %v4431 = vpack.c.b16 %v4291, %v4284
    %v4432 = vpack.c.b16 %v4292, %v4285
    %v4433 = vpack.c.b16 %v4293, %v4286
    %v4434 = vpack.c.b16 %v4294, %v4287
    %v4435 = vpack.c.b16 %v4295, %v4288
    %v4436 = vpack.c.b16 %v4296, %v4289
    %v4437 = vpack.c.b16 %v4304, %v4297
    %v4438 = vpack.c.b16 %v4305, %v4298
    %v4439 = vpack.c.b16 %v4306, %v4299
    %v4440 = vpack.c.b16 %v4307, %v4300
    %v4441 = vpack.c.b16 %v4308, %v4301
    %v4442 = vpack.c.b16 %v4309, %v4302
    %v4443 = vpack.c.b16 %v4310, %v4303
    %v4444 = vpack.c.b16 %v4318, %v4311
    %v4445 = vpack.c.b16 %v4319, %v4312
    %v4446 = vpack.c.b16 %v4320, %v4313
    %v4447 = vpack.c.b16 %v4321, %v4314
    %v4448 = vpack.c.b16 %v4322, %v4315
    %v4449 = vpack.c.b16 %v4323, %v4316
    %v4450 = vpack.c.b16 %v4324, %v4317
    %v4451 = vpack.c.b16 %v4332, %v4325
    %v4452 = vpack.c.b16 %v4333, %v4326
    %v4453 = vpack.c.b16 %v4334, %v4327
    %v4454 = vpack.c.b16 %v4335, %v4328
    %v4455 = vpack.c.b16 %v4336, %v4329
    %v4456 = vpack.c.b16 %v4337, %v4330
    %v4457 = vpack.c.b16 %v4338, %v4331
    %v4458 = vpack.c.b16 %v4346, %v4339
    %v4459 = vpack.c.b16 %v4347, %v4340
    %v4460 = vpack.c.b16 %v4348, %v4341
    %v4461 = vpack.c.b16 %v4349, %v4342
    %v4462 = vpack.c.b16 %v4350, %v4343
    %v4463 = vpack.c.b16 %v4351, %v4344
    %v4464 = vpack.c.b16 %v4352, %v4345
    %4577 = vmatpush.bf16.msra.mxu0 %v4402
    %4578 = vmatpush.bf16.msra.mxu0 %v4395
    %4579 = vmatpush.bf16.msra.mxu0 %v4388
    %4580 = vmatpush.bf16.msra.mxu0 %v4381
    %4581 = vmatpush.bf16.msra.mxu0 %v4374
    %4582 = vmatpush.bf16.msra.mxu0 %v4367
    %4583 = vmatpush.bf16.msra.mxu0 %v4360
    %4584 = vmatpush.bf16.msra.mxu0 %v4353
    %4585 = vmatmul.bf16.gmra.mxu0 %v3819
    %v4586 = vpop.f32.mrf.mxu0
    %v4587 = vadd.f32 %v3987, %v4586
    %v4588 = vpop.f32.mrf.mxu0
    %v4589 = vadd.f32 %v3987, %v4588
    %4590 = vmatmul.bf16.gmra.mxu0 %v3821
    %v4591 = vpop.f32.mrf.mxu0
    %v4592 = vadd.f32 %v3987, %v4591
    %v4593 = vpop.f32.mrf.mxu0
    %v4594 = vadd.f32 %v3987, %v4593
    %4595 = vmatmul.bf16.gmra.mxu0 %v3823
    %v4596 = vpop.f32.mrf.mxu0
    %v4597 = vadd.f32 %v3987, %v4596
    %v4598 = vpop.f32.mrf.mxu0
    %v4599 = vadd.f32 %v3987, %v4598
    %4600 = vmatmul.bf16.gmra.mxu0 %v3825
    %v4601 = vpop.f32.mrf.mxu0
    %v4602 = vadd.f32 %v3987, %v4601
    %v4603 = vpop.f32.mrf.mxu0
    %v4604 = vadd.f32 %v3987, %v4603
    %4605 = vmatmul.bf16.gmra.mxu0 %v3827
    %v4606 = vpop.f32.mrf.mxu0
    %v4607 = vadd.f32 %v3987, %v4606
    %v4608 = vpop.f32.mrf.mxu0
    %v4609 = vadd.f32 %v3987, %v4608
    %4610 = vmatmul.bf16.gmra.mxu0 %v3829
    %v4611 = vpop.f32.mrf.mxu0
    %v4612 = vadd.f32 %v3987, %v4611
    %v4613 = vpop.f32.mrf.mxu0
    %v4614 = vadd.f32 %v3987, %v4613
    %4615 = vmatmul.bf16.gmra.mxu0 %v3831
    %v4616 = vpop.f32.mrf.mxu0
    %v4617 = vadd.f32 %v3987, %v4616
    %v4618 = vpop.f32.mrf.mxu0
    %v4619 = vadd.f32 %v3987, %v4618
    %4620 = vmatmul.bf16.gmra.mxu0 %v3833
    %v4621 = vpop.f32.mrf.mxu0
    %v4622 = vadd.f32 %v3987, %v4621
    %v4623 = vpop.f32.mrf.mxu0
    %v4624 = vadd.f32 %v3987, %v4623
    %4625 = vmatmul.bf16.gmra.mxu0 %v3835
    %v4626 = vpop.f32.mrf.mxu0
    %v4627 = vadd.f32 %v3987, %v4626
    %v4628 = vpop.f32.mrf.mxu0
    %v4629 = vadd.f32 %v3987, %v4628
    %4630 = vmatmul.bf16.gmra.mxu0 %v3837
    %v4631 = vpop.f32.mrf.mxu0
    %v4632 = vadd.f32 %v3987, %v4631
    %v4633 = vpop.f32.mrf.mxu0
    %v4634 = vadd.f32 %v3987, %v4633
    %4635 = vmatmul.bf16.gmra.mxu0 %v3839
    %v4636 = vpop.f32.mrf.mxu0
    %v4637 = vadd.f32 %v3987, %v4636
    %v4638 = vpop.f32.mrf.mxu0
    %v4639 = vadd.f32 %v3987, %v4638
    %4640 = vmatmul.bf16.gmra.mxu0 %v3841
    %v4641 = vpop.f32.mrf.mxu0
    %v4642 = vadd.f32 %v3987, %v4641
    %v4643 = vpop.f32.mrf.mxu0
    %v4644 = vadd.f32 %v3987, %v4643
    %4645 = vmatmul.bf16.gmra.mxu0 %v3843
    %v4646 = vpop.f32.mrf.mxu0
    %v4647 = vadd.f32 %v3987, %v4646
    %v4648 = vpop.f32.mrf.mxu0
    %v4649 = vadd.f32 %v3987, %v4648
    %4650 = vmatmul.bf16.gmra.mxu0 %v3845
    %v4651 = vpop.f32.mrf.mxu0
    %v4652 = vadd.f32 %v3987, %v4651
    %v4653 = vpop.f32.mrf.mxu0
    %v4654 = vadd.f32 %v3987, %v4653
    %4655 = vmatmul.bf16.gmra.mxu0 %v3847
    %v4656 = vpop.f32.mrf.mxu0
    %v4657 = vadd.f32 %v3987, %v4656
    %v4658 = vpop.f32.mrf.mxu0
    %v4659 = vadd.f32 %v3987, %v4658
    %4660 = vmatmul.bf16.gmra.mxu0 %v3849
    %v4661 = vpop.f32.mrf.mxu0
    %v4662 = vadd.f32 %v3987, %v4661
    %v4663 = vpop.f32.mrf.mxu0
    %v4664 = vadd.f32 %v3987, %v4663
    %4665 = vmatmul.bf16.gmra.mxu0 %v3851
    %v4666 = vpop.f32.mrf.mxu0
    %v4667 = vadd.f32 %v3987, %v4666
    %v4668 = vpop.f32.mrf.mxu0
    %v4669 = vadd.f32 %v3987, %v4668
    %4670 = vmatmul.bf16.gmra.mxu0 %v3853
    %v4671 = vpop.f32.mrf.mxu0
    %v4672 = vadd.f32 %v3987, %v4671
    %v4673 = vpop.f32.mrf.mxu0
    %v4674 = vadd.f32 %v3987, %v4673
    %4675 = vmatmul.bf16.gmra.mxu0 %v3855
    %v4676 = vpop.f32.mrf.mxu0
    %v4677 = vadd.f32 %v3987, %v4676
    %v4678 = vpop.f32.mrf.mxu0
    %v4679 = vadd.f32 %v3987, %v4678
    %4680 = vdwg.mxu0
    %4681 = vmatpush.bf16.msra.mxu0 %v4458
    %4682 = vmatpush.bf16.msra.mxu0 %v4451
    %4683 = vmatpush.bf16.msra.mxu0 %v4444
    %4684 = vmatpush.bf16.msra.mxu0 %v4437
    %4685 = vmatpush.bf16.msra.mxu0 %v4430
    %4686 = vmatpush.bf16.msra.mxu0 %v4423
    %4687 = vmatpush.bf16.msra.mxu0 %v4416
    %4688 = vmatpush.bf16.msra.mxu0 %v4409
    %4689 = vmatmul.bf16.gmra.mxu0 %v3820
    %v4690 = vpop.f32.mrf.mxu0
    %v4691 = vadd.f32 %v4587, %v4690
    %v4692 = vpop.f32.mrf.mxu0
    %v4693 = vadd.f32 %v4589, %v4692
    %4694 = vmatmul.bf16.gmra.mxu0 %v3822
    %v4695 = vpop.f32.mrf.mxu0
    %v4696 = vadd.f32 %v4592, %v4695
    %v4697 = vpop.f32.mrf.mxu0
    %v4698 = vadd.f32 %v4594, %v4697
    %4699 = vmatmul.bf16.gmra.mxu0 %v3824
    %v4700 = vpop.f32.mrf.mxu0
    %v4701 = vadd.f32 %v4597, %v4700
    %v4702 = vpop.f32.mrf.mxu0
    %v4703 = vadd.f32 %v4599, %v4702
    %4704 = vmatmul.bf16.gmra.mxu0 %v3826
    %v4705 = vpop.f32.mrf.mxu0
    %v4706 = vadd.f32 %v4602, %v4705
    %v4707 = vpop.f32.mrf.mxu0
    %v4708 = vadd.f32 %v4604, %v4707
    %4709 = vmatmul.bf16.gmra.mxu0 %v3828
    %v4710 = vpop.f32.mrf.mxu0
    %v4711 = vadd.f32 %v4607, %v4710
    %v4712 = vpop.f32.mrf.mxu0
    %v4713 = vadd.f32 %v4609, %v4712
    %4714 = vmatmul.bf16.gmra.mxu0 %v3830
    %v4715 = vpop.f32.mrf.mxu0
    %v4716 = vadd.f32 %v4612, %v4715
    %v4717 = vpop.f32.mrf.mxu0
    %v4718 = vadd.f32 %v4614, %v4717
    %4719 = vmatmul.bf16.gmra.mxu0 %v3832
    %v4720 = vpop.f32.mrf.mxu0
    %v4721 = vadd.f32 %v4617, %v4720
    %v4722 = vpop.f32.mrf.mxu0
    %v4723 = vadd.f32 %v4619, %v4722
    %4724 = vmatmul.bf16.gmra.mxu0 %v3834
    %v4725 = vpop.f32.mrf.mxu0
    %v4726 = vadd.f32 %v4622, %v4725
    %v4727 = vpop.f32.mrf.mxu0
    %v4728 = vadd.f32 %v4624, %v4727
    %4729 = vmatmul.bf16.gmra.mxu0 %v3836
    %v4730 = vpop.f32.mrf.mxu0
    %v4731 = vadd.f32 %v4627, %v4730
    %v4732 = vpop.f32.mrf.mxu0
    %v4733 = vadd.f32 %v4629, %v4732
    %4734 = vmatmul.bf16.gmra.mxu0 %v3838
    %v4735 = vpop.f32.mrf.mxu0
    %v4736 = vadd.f32 %v4632, %v4735
    %v4737 = vpop.f32.mrf.mxu0
    %v4738 = vadd.f32 %v4634, %v4737
    %4739 = vmatmul.bf16.gmra.mxu0 %v3840
    %v4740 = vpop.f32.mrf.mxu0
    %v4741 = vadd.f32 %v4637, %v4740
    %v4742 = vpop.f32.mrf.mxu0
    %v4743 = vadd.f32 %v4639, %v4742
    %4744 = vmatmul.bf16.gmra.mxu0 %v3842
    %v4745 = vpop.f32.mrf.mxu0
    %v4746 = vadd.f32 %v4642, %v4745
    %v4747 = vpop.f32.mrf.mxu0
    %v4748 = vadd.f32 %v4644, %v4747
    %4749 = vmatmul.bf16.gmra.mxu0 %v3844
    %v4750 = vpop.f32.mrf.mxu0
    %v4751 = vadd.f32 %v4647, %v4750
    %v4752 = vpop.f32.mrf.mxu0
    %v4753 = vadd.f32 %v4649, %v4752
    %4754 = vmatmul.bf16.gmra.mxu0 %v3846
    %v4755 = vpop.f32.mrf.mxu0
    %v4756 = vadd.f32 %v4652, %v4755
    %v4757 = vpop.f32.mrf.mxu0
    %v4758 = vadd.f32 %v4654, %v4757
    %4759 = vmatmul.bf16.gmra.mxu0 %v3848
    %v4760 = vpop.f32.mrf.mxu0
    %v4761 = vadd.f32 %v4657, %v4760
    %v4762 = vpop.f32.mrf.mxu0
    %v4763 = vadd.f32 %v4659, %v4762
    %4764 = vmatmul.bf16.gmra.mxu0 %v3850
    %v4765 = vpop.f32.mrf.mxu0
    %v4766 = vadd.f32 %v4662, %v4765
    %v4767 = vpop.f32.mrf.mxu0
    %v4768 = vadd.f32 %v4664, %v4767
    %4769 = vmatmul.bf16.gmra.mxu0 %v3852
    %v4770 = vpop.f32.mrf.mxu0
    %v4771 = vadd.f32 %v4667, %v4770
    %v4772 = vpop.f32.mrf.mxu0
    %v4773 = vadd.f32 %v4669, %v4772
    %4774 = vmatmul.bf16.gmra.mxu0 %v3854
    %v4775 = vpop.f32.mrf.mxu0
    %v4776 = vadd.f32 %v4672, %v4775
    %v4777 = vpop.f32.mrf.mxu0
    %v4778 = vadd.f32 %v4674, %v4777
    %4779 = vmatmul.bf16.gmra.mxu0 %v3856
    %v4780 = vpop.f32.mrf.mxu0
    %v4781 = vadd.f32 %v4677, %v4780
    %v4782 = vpop.f32.mrf.mxu0
    %v4783 = vadd.f32 %v4679, %v4782
    %4784 = vdwg.mxu0
    %4785 = vmatpush.bf16.msra.mxu0 %v4403
    %4786 = vmatpush.bf16.msra.mxu0 %v4396
    %4787 = vmatpush.bf16.msra.mxu0 %v4389
    %4788 = vmatpush.bf16.msra.mxu0 %v4382
    %4789 = vmatpush.bf16.msra.mxu0 %v4375
    %4790 = vmatpush.bf16.msra.mxu0 %v4368
    %4791 = vmatpush.bf16.msra.mxu0 %v4361
    %4792 = vmatpush.bf16.msra.mxu0 %v4354
    %4793 = vmatmul.bf16.gmra.mxu0 %v3819
    %v4794 = vpop.f32.mrf.mxu0
    %v4795 = vadd.f32 %v3988, %v4794
    %v4796 = vpop.f32.mrf.mxu0
    %v4797 = vadd.f32 %v3988, %v4796
    %4798 = vmatmul.bf16.gmra.mxu0 %v3821
    %v4799 = vpop.f32.mrf.mxu0
    %v4800 = vadd.f32 %v3988, %v4799
    %v4801 = vpop.f32.mrf.mxu0
    %v4802 = vadd.f32 %v3988, %v4801
    %4803 = vmatmul.bf16.gmra.mxu0 %v3823
    %v4804 = vpop.f32.mrf.mxu0
    %v4805 = vadd.f32 %v3988, %v4804
    %v4806 = vpop.f32.mrf.mxu0
    %v4807 = vadd.f32 %v3988, %v4806
    %4808 = vmatmul.bf16.gmra.mxu0 %v3825
    %v4809 = vpop.f32.mrf.mxu0
    %v4810 = vadd.f32 %v3988, %v4809
    %v4811 = vpop.f32.mrf.mxu0
    %v4812 = vadd.f32 %v3988, %v4811
    %4813 = vmatmul.bf16.gmra.mxu0 %v3827
    %v4814 = vpop.f32.mrf.mxu0
    %v4815 = vadd.f32 %v3988, %v4814
    %v4816 = vpop.f32.mrf.mxu0
    %v4817 = vadd.f32 %v3988, %v4816
    %4818 = vmatmul.bf16.gmra.mxu0 %v3829
    %v4819 = vpop.f32.mrf.mxu0
    %v4820 = vadd.f32 %v3988, %v4819
    %v4821 = vpop.f32.mrf.mxu0
    %v4822 = vadd.f32 %v3988, %v4821
    %4823 = vmatmul.bf16.gmra.mxu0 %v3831
    %v4824 = vpop.f32.mrf.mxu0
    %v4825 = vadd.f32 %v3988, %v4824
    %v4826 = vpop.f32.mrf.mxu0
    %v4827 = vadd.f32 %v3988, %v4826
    %4828 = vmatmul.bf16.gmra.mxu0 %v3833
    %v4829 = vpop.f32.mrf.mxu0
    %v4830 = vadd.f32 %v3988, %v4829
    %v4831 = vpop.f32.mrf.mxu0
    %v4832 = vadd.f32 %v3988, %v4831
    %4833 = vmatmul.bf16.gmra.mxu0 %v3835
    %v4834 = vpop.f32.mrf.mxu0
    %v4835 = vadd.f32 %v3988, %v4834
    %v4836 = vpop.f32.mrf.mxu0
    %v4837 = vadd.f32 %v3988, %v4836
    %4838 = vmatmul.bf16.gmra.mxu0 %v3837
    %v4839 = vpop.f32.mrf.mxu0
    %v4840 = vadd.f32 %v3988, %v4839
    %v4841 = vpop.f32.mrf.mxu0
    %v4842 = vadd.f32 %v3988, %v4841
    %4843 = vmatmul.bf16.gmra.mxu0 %v3839
    %v4844 = vpop.f32.mrf.mxu0
    %v4845 = vadd.f32 %v3988, %v4844
    %v4846 = vpop.f32.mrf.mxu0
    %v4847 = vadd.f32 %v3988, %v4846
    %4848 = vmatmul.bf16.gmra.mxu0 %v3841
    %v4849 = vpop.f32.mrf.mxu0
    %v4850 = vadd.f32 %v3988, %v4849
    %v4851 = vpop.f32.mrf.mxu0
    %v4852 = vadd.f32 %v3988, %v4851
    %4853 = vmatmul.bf16.gmra.mxu0 %v3843
    %v4854 = vpop.f32.mrf.mxu0
    %v4855 = vadd.f32 %v3988, %v4854
    %v4856 = vpop.f32.mrf.mxu0
    %v4857 = vadd.f32 %v3988, %v4856
    %4858 = vmatmul.bf16.gmra.mxu0 %v3845
    %v4859 = vpop.f32.mrf.mxu0
    %v4860 = vadd.f32 %v3988, %v4859
    %v4861 = vpop.f32.mrf.mxu0
    %v4862 = vadd.f32 %v3988, %v4861
    %4863 = vmatmul.bf16.gmra.mxu0 %v3847
    %v4864 = vpop.f32.mrf.mxu0
    %v4865 = vadd.f32 %v3988, %v4864
    %v4866 = vpop.f32.mrf.mxu0
    %v4867 = vadd.f32 %v3988, %v4866
    %4868 = vmatmul.bf16.gmra.mxu0 %v3849
    %v4869 = vpop.f32.mrf.mxu0
    %v4870 = vadd.f32 %v3988, %v4869
    %v4871 = vpop.f32.mrf.mxu0
    %v4872 = vadd.f32 %v3988, %v4871
    %4873 = vmatmul.bf16.gmra.mxu0 %v3851
    %v4874 = vpop.f32.mrf.mxu0
    %v4875 = vadd.f32 %v3988, %v4874
    %v4876 = vpop.f32.mrf.mxu0
    %v4877 = vadd.f32 %v3988, %v4876
    %4878 = vmatmul.bf16.gmra.mxu0 %v3853
    %v4879 = vpop.f32.mrf.mxu0
    %v4880 = vadd.f32 %v3988, %v4879
    %v4881 = vpop.f32.mrf.mxu0
    %v4882 = vadd.f32 %v3988, %v4881
    %4883 = vmatmul.bf16.gmra.mxu0 %v3855
    %v4884 = vpop.f32.mrf.mxu0
    %v4885 = vadd.f32 %v3988, %v4884
    %v4886 = vpop.f32.mrf.mxu0
    %v4887 = vadd.f32 %v3988, %v4886
    %4888 = vdwg.mxu0
    %4889 = vmatpush.bf16.msra.mxu0 %v4459
    %4890 = vmatpush.bf16.msra.mxu0 %v4452
    %4891 = vmatpush.bf16.msra.mxu0 %v4445
    %4892 = vmatpush.bf16.msra.mxu0 %v4438
    %4893 = vmatpush.bf16.msra.mxu0 %v4431
    %4894 = vmatpush.bf16.msra.mxu0 %v4424
    %4895 = vmatpush.bf16.msra.mxu0 %v4417
    %4896 = vmatpush.bf16.msra.mxu0 %v4410
    %4897 = vmatmul.bf16.gmra.mxu0 %v3820
    %v4898 = vpop.f32.mrf.mxu0
    %v4899 = vadd.f32 %v4795, %v4898
    %v4900 = vpop.f32.mrf.mxu0
    %v4901 = vadd.f32 %v4797, %v4900
    %4902 = vmatmul.bf16.gmra.mxu0 %v3822
    %v4903 = vpop.f32.mrf.mxu0
    %v4904 = vadd.f32 %v4800, %v4903
    %v4905 = vpop.f32.mrf.mxu0
    %v4906 = vadd.f32 %v4802, %v4905
    %4907 = vmatmul.bf16.gmra.mxu0 %v3824
    %v4908 = vpop.f32.mrf.mxu0
    %v4909 = vadd.f32 %v4805, %v4908
    %v4910 = vpop.f32.mrf.mxu0
    %v4911 = vadd.f32 %v4807, %v4910
    %4912 = vmatmul.bf16.gmra.mxu0 %v3826
    %v4913 = vpop.f32.mrf.mxu0
    %v4914 = vadd.f32 %v4810, %v4913
    %v4915 = vpop.f32.mrf.mxu0
    %v4916 = vadd.f32 %v4812, %v4915
    %4917 = vmatmul.bf16.gmra.mxu0 %v3828
    %v4918 = vpop.f32.mrf.mxu0
    %v4919 = vadd.f32 %v4815, %v4918
    %v4920 = vpop.f32.mrf.mxu0
    %v4921 = vadd.f32 %v4817, %v4920
    %4922 = vmatmul.bf16.gmra.mxu0 %v3830
    %v4923 = vpop.f32.mrf.mxu0
    %v4924 = vadd.f32 %v4820, %v4923
    %v4925 = vpop.f32.mrf.mxu0
    %v4926 = vadd.f32 %v4822, %v4925
    %4927 = vmatmul.bf16.gmra.mxu0 %v3832
    %v4928 = vpop.f32.mrf.mxu0
    %v4929 = vadd.f32 %v4825, %v4928
    %v4930 = vpop.f32.mrf.mxu0
    %v4931 = vadd.f32 %v4827, %v4930
    %4932 = vmatmul.bf16.gmra.mxu0 %v3834
    %v4933 = vpop.f32.mrf.mxu0
    %v4934 = vadd.f32 %v4830, %v4933
    %v4935 = vpop.f32.mrf.mxu0
    %v4936 = vadd.f32 %v4832, %v4935
    %4937 = vmatmul.bf16.gmra.mxu0 %v3836
    %v4938 = vpop.f32.mrf.mxu0
    %v4939 = vadd.f32 %v4835, %v4938
    %v4940 = vpop.f32.mrf.mxu0
    %v4941 = vadd.f32 %v4837, %v4940
    %4942 = vmatmul.bf16.gmra.mxu0 %v3838
    %v4943 = vpop.f32.mrf.mxu0
    %v4944 = vadd.f32 %v4840, %v4943
    %v4945 = vpop.f32.mrf.mxu0
    %v4946 = vadd.f32 %v4842, %v4945
    %4947 = vmatmul.bf16.gmra.mxu0 %v3840
    %v4948 = vpop.f32.mrf.mxu0
    %v4949 = vadd.f32 %v4845, %v4948
    %v4950 = vpop.f32.mrf.mxu0
    %v4951 = vadd.f32 %v4847, %v4950
    %4952 = vmatmul.bf16.gmra.mxu0 %v3842
    %v4953 = vpop.f32.mrf.mxu0
    %v4954 = vadd.f32 %v4850, %v4953
    %v4955 = vpop.f32.mrf.mxu0
    %v4956 = vadd.f32 %v4852, %v4955
    %4957 = vmatmul.bf16.gmra.mxu0 %v3844
    %v4958 = vpop.f32.mrf.mxu0
    %v4959 = vadd.f32 %v4855, %v4958
    %v4960 = vpop.f32.mrf.mxu0
    %v4961 = vadd.f32 %v4857, %v4960
    %4962 = vmatmul.bf16.gmra.mxu0 %v3846
    %v4963 = vpop.f32.mrf.mxu0
    %v4964 = vadd.f32 %v4860, %v4963
    %v4965 = vpop.f32.mrf.mxu0
    %v4966 = vadd.f32 %v4862, %v4965
    %4967 = vmatmul.bf16.gmra.mxu0 %v3848
    %v4968 = vpop.f32.mrf.mxu0
    %v4969 = vadd.f32 %v4865, %v4968
    %v4970 = vpop.f32.mrf.mxu0
    %v4971 = vadd.f32 %v4867, %v4970
    %4972 = vmatmul.bf16.gmra.mxu0 %v3850
    %v4973 = vpop.f32.mrf.mxu0
    %v4974 = vadd.f32 %v4870, %v4973
    %v4975 = vpop.f32.mrf.mxu0
    %v4976 = vadd.f32 %v4872, %v4975
    %4977 = vmatmul.bf16.gmra.mxu0 %v3852
    %v4978 = vpop.f32.mrf.mxu0
    %v4979 = vadd.f32 %v4875, %v4978
    %v4980 = vpop.f32.mrf.mxu0
    %v4981 = vadd.f32 %v4877, %v4980
    %4982 = vmatmul.bf16.gmra.mxu0 %v3854
    %v4983 = vpop.f32.mrf.mxu0
    %v4984 = vadd.f32 %v4880, %v4983
    %v4985 = vpop.f32.mrf.mxu0
    %v4986 = vadd.f32 %v4882, %v4985
    %4987 = vmatmul.bf16.gmra.mxu0 %v3856
    %v4988 = vpop.f32.mrf.mxu0
    %v4989 = vadd.f32 %v4885, %v4988
    %v4990 = vpop.f32.mrf.mxu0
    %v4991 = vadd.f32 %v4887, %v4990
    %4992 = vdwg.mxu0
    %4993 = vmatpush.bf16.msra.mxu0 %v4404
    %4994 = vmatpush.bf16.msra.mxu0 %v4397
    %4995 = vmatpush.bf16.msra.mxu0 %v4390
    %4996 = vmatpush.bf16.msra.mxu0 %v4383
    %4997 = vmatpush.bf16.msra.mxu0 %v4376
    %4998 = vmatpush.bf16.msra.mxu0 %v4369
    %4999 = vmatpush.bf16.msra.mxu0 %v4362
    %5000 = vmatpush.bf16.msra.mxu0 %v4355
    %5001 = vmatmul.bf16.gmra.mxu0 %v3819
    %v5002 = vpop.f32.mrf.mxu0
    %v5003 = vadd.f32 %v3989, %v5002
    %v5004 = vpop.f32.mrf.mxu0
    %v5005 = vadd.f32 %v3989, %v5004
    %5006 = vmatmul.bf16.gmra.mxu0 %v3821
    %v5007 = vpop.f32.mrf.mxu0
    %v5008 = vadd.f32 %v3989, %v5007
    %v5009 = vpop.f32.mrf.mxu0
    %v5010 = vadd.f32 %v3989, %v5009
    %5011 = vmatmul.bf16.gmra.mxu0 %v3823
    %v5012 = vpop.f32.mrf.mxu0
    %v5013 = vadd.f32 %v3989, %v5012
    %v5014 = vpop.f32.mrf.mxu0
    %v5015 = vadd.f32 %v3989, %v5014
    %5016 = vmatmul.bf16.gmra.mxu0 %v3825
    %v5017 = vpop.f32.mrf.mxu0
    %v5018 = vadd.f32 %v3989, %v5017
    %v5019 = vpop.f32.mrf.mxu0
    %v5020 = vadd.f32 %v3989, %v5019
    %5021 = vmatmul.bf16.gmra.mxu0 %v3827
    %v5022 = vpop.f32.mrf.mxu0
    %v5023 = vadd.f32 %v3989, %v5022
    %v5024 = vpop.f32.mrf.mxu0
    %v5025 = vadd.f32 %v3989, %v5024
    %5026 = vmatmul.bf16.gmra.mxu0 %v3829
    %v5027 = vpop.f32.mrf.mxu0
    %v5028 = vadd.f32 %v3989, %v5027
    %v5029 = vpop.f32.mrf.mxu0
    %v5030 = vadd.f32 %v3989, %v5029
    %5031 = vmatmul.bf16.gmra.mxu0 %v3831
    %v5032 = vpop.f32.mrf.mxu0
    %v5033 = vadd.f32 %v3989, %v5032
    %v5034 = vpop.f32.mrf.mxu0
    %v5035 = vadd.f32 %v3989, %v5034
    %5036 = vmatmul.bf16.gmra.mxu0 %v3833
    %v5037 = vpop.f32.mrf.mxu0
    %v5038 = vadd.f32 %v3989, %v5037
    %v5039 = vpop.f32.mrf.mxu0
    %v5040 = vadd.f32 %v3989, %v5039
    %5041 = vmatmul.bf16.gmra.mxu0 %v3835
    %v5042 = vpop.f32.mrf.mxu0
    %v5043 = vadd.f32 %v3989, %v5042
    %v5044 = vpop.f32.mrf.mxu0
    %v5045 = vadd.f32 %v3989, %v5044
    %5046 = vmatmul.bf16.gmra.mxu0 %v3837
    %v5047 = vpop.f32.mrf.mxu0
    %v5048 = vadd.f32 %v3989, %v5047
    %v5049 = vpop.f32.mrf.mxu0
    %v5050 = vadd.f32 %v3989, %v5049
    %5051 = vmatmul.bf16.gmra.mxu0 %v3839
    %v5052 = vpop.f32.mrf.mxu0
    %v5053 = vadd.f32 %v3989, %v5052
    %v5054 = vpop.f32.mrf.mxu0
    %v5055 = vadd.f32 %v3989, %v5054
    %5056 = vmatmul.bf16.gmra.mxu0 %v3841
    %v5057 = vpop.f32.mrf.mxu0
    %v5058 = vadd.f32 %v3989, %v5057
    %v5059 = vpop.f32.mrf.mxu0
    %v5060 = vadd.f32 %v3989, %v5059
    %5061 = vmatmul.bf16.gmra.mxu0 %v3843
    %v5062 = vpop.f32.mrf.mxu0
    %v5063 = vadd.f32 %v3989, %v5062
    %v5064 = vpop.f32.mrf.mxu0
    %v5065 = vadd.f32 %v3989, %v5064
    %5066 = vmatmul.bf16.gmra.mxu0 %v3845
    %v5067 = vpop.f32.mrf.mxu0
    %v5068 = vadd.f32 %v3989, %v5067
    %v5069 = vpop.f32.mrf.mxu0
    %v5070 = vadd.f32 %v3989, %v5069
    %5071 = vmatmul.bf16.gmra.mxu0 %v3847
    %v5072 = vpop.f32.mrf.mxu0
    %v5073 = vadd.f32 %v3989, %v5072
    %v5074 = vpop.f32.mrf.mxu0
    %v5075 = vadd.f32 %v3989, %v5074
    %5076 = vmatmul.bf16.gmra.mxu0 %v3849
    %v5077 = vpop.f32.mrf.mxu0
    %v5078 = vadd.f32 %v3989, %v5077
    %v5079 = vpop.f32.mrf.mxu0
    %v5080 = vadd.f32 %v3989, %v5079
    %5081 = vmatmul.bf16.gmra.mxu0 %v3851
    %v5082 = vpop.f32.mrf.mxu0
    %v5083 = vadd.f32 %v3989, %v5082
    %v5084 = vpop.f32.mrf.mxu0
    %v5085 = vadd.f32 %v3989, %v5084
    %5086 = vmatmul.bf16.gmra.mxu0 %v3853
    %v5087 = vpop.f32.mrf.mxu0
    %v5088 = vadd.f32 %v3989, %v5087
    %v5089 = vpop.f32.mrf.mxu0
    %v5090 = vadd.f32 %v3989, %v5089
    %5091 = vmatmul.bf16.gmra.mxu0 %v3855
    %v5092 = vpop.f32.mrf.mxu0
    %v5093 = vadd.f32 %v3989, %v5092
    %v5094 = vpop.f32.mrf.mxu0
    %v5095 = vadd.f32 %v3989, %v5094
    %5096 = vdwg.mxu0
    %5097 = vmatpush.bf16.msra.mxu0 %v4460
    %5098 = vmatpush.bf16.msra.mxu0 %v4453
    %5099 = vmatpush.bf16.msra.mxu0 %v4446
    %5100 = vmatpush.bf16.msra.mxu0 %v4439
    %5101 = vmatpush.bf16.msra.mxu0 %v4432
    %5102 = vmatpush.bf16.msra.mxu0 %v4425
    %5103 = vmatpush.bf16.msra.mxu0 %v4418
    %5104 = vmatpush.bf16.msra.mxu0 %v4411
    %5105 = vmatmul.bf16.gmra.mxu0 %v3820
    %v5106 = vpop.f32.mrf.mxu0
    %v5107 = vadd.f32 %v5003, %v5106
    %v5108 = vpop.f32.mrf.mxu0
    %v5109 = vadd.f32 %v5005, %v5108
    %5110 = vmatmul.bf16.gmra.mxu0 %v3822
    %v5111 = vpop.f32.mrf.mxu0
    %v5112 = vadd.f32 %v5008, %v5111
    %v5113 = vpop.f32.mrf.mxu0
    %v5114 = vadd.f32 %v5010, %v5113
    %5115 = vmatmul.bf16.gmra.mxu0 %v3824
    %v5116 = vpop.f32.mrf.mxu0
    %v5117 = vadd.f32 %v5013, %v5116
    %v5118 = vpop.f32.mrf.mxu0
    %v5119 = vadd.f32 %v5015, %v5118
    %5120 = vmatmul.bf16.gmra.mxu0 %v3826
    %v5121 = vpop.f32.mrf.mxu0
    %v5122 = vadd.f32 %v5018, %v5121
    %v5123 = vpop.f32.mrf.mxu0
    %v5124 = vadd.f32 %v5020, %v5123
    %5125 = vmatmul.bf16.gmra.mxu0 %v3828
    %v5126 = vpop.f32.mrf.mxu0
    %v5127 = vadd.f32 %v5023, %v5126
    %v5128 = vpop.f32.mrf.mxu0
    %v5129 = vadd.f32 %v5025, %v5128
    %5130 = vmatmul.bf16.gmra.mxu0 %v3830
    %v5131 = vpop.f32.mrf.mxu0
    %v5132 = vadd.f32 %v5028, %v5131
    %v5133 = vpop.f32.mrf.mxu0
    %v5134 = vadd.f32 %v5030, %v5133
    %5135 = vmatmul.bf16.gmra.mxu0 %v3832
    %v5136 = vpop.f32.mrf.mxu0
    %v5137 = vadd.f32 %v5033, %v5136
    %v5138 = vpop.f32.mrf.mxu0
    %v5139 = vadd.f32 %v5035, %v5138
    %5140 = vmatmul.bf16.gmra.mxu0 %v3834
    %v5141 = vpop.f32.mrf.mxu0
    %v5142 = vadd.f32 %v5038, %v5141
    %v5143 = vpop.f32.mrf.mxu0
    %v5144 = vadd.f32 %v5040, %v5143
    %5145 = vmatmul.bf16.gmra.mxu0 %v3836
    %v5146 = vpop.f32.mrf.mxu0
    %v5147 = vadd.f32 %v5043, %v5146
    %v5148 = vpop.f32.mrf.mxu0
    %v5149 = vadd.f32 %v5045, %v5148
    %5150 = vmatmul.bf16.gmra.mxu0 %v3838
    %v5151 = vpop.f32.mrf.mxu0
    %v5152 = vadd.f32 %v5048, %v5151
    %v5153 = vpop.f32.mrf.mxu0
    %v5154 = vadd.f32 %v5050, %v5153
    %5155 = vmatmul.bf16.gmra.mxu0 %v3840
    %v5156 = vpop.f32.mrf.mxu0
    %v5157 = vadd.f32 %v5053, %v5156
    %v5158 = vpop.f32.mrf.mxu0
    %v5159 = vadd.f32 %v5055, %v5158
    %5160 = vmatmul.bf16.gmra.mxu0 %v3842
    %v5161 = vpop.f32.mrf.mxu0
    %v5162 = vadd.f32 %v5058, %v5161
    %v5163 = vpop.f32.mrf.mxu0
    %v5164 = vadd.f32 %v5060, %v5163
    %5165 = vmatmul.bf16.gmra.mxu0 %v3844
    %v5166 = vpop.f32.mrf.mxu0
    %v5167 = vadd.f32 %v5063, %v5166
    %v5168 = vpop.f32.mrf.mxu0
    %v5169 = vadd.f32 %v5065, %v5168
    %5170 = vmatmul.bf16.gmra.mxu0 %v3846
    %v5171 = vpop.f32.mrf.mxu0
    %v5172 = vadd.f32 %v5068, %v5171
    %v5173 = vpop.f32.mrf.mxu0
    %v5174 = vadd.f32 %v5070, %v5173
    %5175 = vmatmul.bf16.gmra.mxu0 %v3848
    %v5176 = vpop.f32.mrf.mxu0
    %v5177 = vadd.f32 %v5073, %v5176
    %v5178 = vpop.f32.mrf.mxu0
    %v5179 = vadd.f32 %v5075, %v5178
    %5180 = vmatmul.bf16.gmra.mxu0 %v3850
    %v5181 = vpop.f32.mrf.mxu0
    %v5182 = vadd.f32 %v5078, %v5181
    %v5183 = vpop.f32.mrf.mxu0
    %v5184 = vadd.f32 %v5080, %v5183
    %5185 = vmatmul.bf16.gmra.mxu0 %v3852
    %v5186 = vpop.f32.mrf.mxu0
    %v5187 = vadd.f32 %v5083, %v5186
    %v5188 = vpop.f32.mrf.mxu0
    %v5189 = vadd.f32 %v5085, %v5188
    %5190 = vmatmul.bf16.gmra.mxu0 %v3854
    %v5191 = vpop.f32.mrf.mxu0
    %v5192 = vadd.f32 %v5088, %v5191
    %v5193 = vpop.f32.mrf.mxu0
    %v5194 = vadd.f32 %v5090, %v5193
    %5195 = vmatmul.bf16.gmra.mxu0 %v3856
    %v5196 = vpop.f32.mrf.mxu0
    %v5197 = vadd.f32 %v5093, %v5196
    %v5198 = vpop.f32.mrf.mxu0
    %v5199 = vadd.f32 %v5095, %v5198
    %5200 = vdwg.mxu0
    %5201 = vmatpush.bf16.msra.mxu0 %v4405
    %5202 = vmatpush.bf16.msra.mxu0 %v4398
    %5203 = vmatpush.bf16.msra.mxu0 %v4391
    %5204 = vmatpush.bf16.msra.mxu0 %v4384
    %5205 = vmatpush.bf16.msra.mxu0 %v4377
    %5206 = vmatpush.bf16.msra.mxu0 %v4370
    %5207 = vmatpush.bf16.msra.mxu0 %v4363
    %5208 = vmatpush.bf16.msra.mxu0 %v4356
    %5209 = vmatmul.bf16.gmra.mxu0 %v3819
    %v5210 = vpop.f32.mrf.mxu0
    %v5211 = vadd.f32 %v3990, %v5210
    %v5212 = vpop.f32.mrf.mxu0
    %v5213 = vadd.f32 %v3990, %v5212
    %5214 = vmatmul.bf16.gmra.mxu0 %v3821
    %v5215 = vpop.f32.mrf.mxu0
    %v5216 = vadd.f32 %v3990, %v5215
    %v5217 = vpop.f32.mrf.mxu0
    %v5218 = vadd.f32 %v3990, %v5217
    %5219 = vmatmul.bf16.gmra.mxu0 %v3823
    %v5220 = vpop.f32.mrf.mxu0
    %v5221 = vadd.f32 %v3990, %v5220
    %v5222 = vpop.f32.mrf.mxu0
    %v5223 = vadd.f32 %v3990, %v5222
    %5224 = vmatmul.bf16.gmra.mxu0 %v3825
    %v5225 = vpop.f32.mrf.mxu0
    %v5226 = vadd.f32 %v3990, %v5225
    %v5227 = vpop.f32.mrf.mxu0
    %v5228 = vadd.f32 %v3990, %v5227
    %5229 = vmatmul.bf16.gmra.mxu0 %v3827
    %v5230 = vpop.f32.mrf.mxu0
    %v5231 = vadd.f32 %v3990, %v5230
    %v5232 = vpop.f32.mrf.mxu0
    %v5233 = vadd.f32 %v3990, %v5232
    %5234 = vmatmul.bf16.gmra.mxu0 %v3829
    %v5235 = vpop.f32.mrf.mxu0
    %v5236 = vadd.f32 %v3990, %v5235
    %v5237 = vpop.f32.mrf.mxu0
    %v5238 = vadd.f32 %v3990, %v5237
    %5239 = vmatmul.bf16.gmra.mxu0 %v3831
    %v5240 = vpop.f32.mrf.mxu0
    %v5241 = vadd.f32 %v3990, %v5240
    %v5242 = vpop.f32.mrf.mxu0
    %v5243 = vadd.f32 %v3990, %v5242
    %5244 = vmatmul.bf16.gmra.mxu0 %v3833
    %v5245 = vpop.f32.mrf.mxu0
    %v5246 = vadd.f32 %v3990, %v5245
    %v5247 = vpop.f32.mrf.mxu0
    %v5248 = vadd.f32 %v3990, %v5247
    %5249 = vmatmul.bf16.gmra.mxu0 %v3835
    %v5250 = vpop.f32.mrf.mxu0
    %v5251 = vadd.f32 %v3990, %v5250
    %v5252 = vpop.f32.mrf.mxu0
    %v5253 = vadd.f32 %v3990, %v5252
    %5254 = vmatmul.bf16.gmra.mxu0 %v3837
    %v5255 = vpop.f32.mrf.mxu0
    %v5256 = vadd.f32 %v3990, %v5255
    %v5257 = vpop.f32.mrf.mxu0
    %v5258 = vadd.f32 %v3990, %v5257
    %5259 = vmatmul.bf16.gmra.mxu0 %v3839
    %v5260 = vpop.f32.mrf.mxu0
    %v5261 = vadd.f32 %v3990, %v5260
    %v5262 = vpop.f32.mrf.mxu0
    %v5263 = vadd.f32 %v3990, %v5262
    %5264 = vmatmul.bf16.gmra.mxu0 %v3841
    %v5265 = vpop.f32.mrf.mxu0
    %v5266 = vadd.f32 %v3990, %v5265
    %v5267 = vpop.f32.mrf.mxu0
    %v5268 = vadd.f32 %v3990, %v5267
    %5269 = vmatmul.bf16.gmra.mxu0 %v3843
    %v5270 = vpop.f32.mrf.mxu0
    %v5271 = vadd.f32 %v3990, %v5270
    %v5272 = vpop.f32.mrf.mxu0
    %v5273 = vadd.f32 %v3990, %v5272
    %5274 = vmatmul.bf16.gmra.mxu0 %v3845
    %v5275 = vpop.f32.mrf.mxu0
    %v5276 = vadd.f32 %v3990, %v5275
    %v5277 = vpop.f32.mrf.mxu0
    %v5278 = vadd.f32 %v3990, %v5277
    %5279 = vmatmul.bf16.gmra.mxu0 %v3847
    %v5280 = vpop.f32.mrf.mxu0
    %v5281 = vadd.f32 %v3990, %v5280
    %v5282 = vpop.f32.mrf.mxu0
    %v5283 = vadd.f32 %v3990, %v5282
    %5284 = vmatmul.bf16.gmra.mxu0 %v3849
    %v5285 = vpop.f32.mrf.mxu0
    %v5286 = vadd.f32 %v3990, %v5285
    %v5287 = vpop.f32.mrf.mxu0
    %v5288 = vadd.f32 %v3990, %v5287
    %5289 = vmatmul.bf16.gmra.mxu0 %v3851
    %v5290 = vpop.f32.mrf.mxu0
    %v5291 = vadd.f32 %v3990, %v5290
    %v5292 = vpop.f32.mrf.mxu0
    %v5293 = vadd.f32 %v3990, %v5292
    %5294 = vmatmul.bf16.gmra.mxu0 %v3853
    %v5295 = vpop.f32.mrf.mxu0
    %v5296 = vadd.f32 %v3990, %v5295
    %v5297 = vpop.f32.mrf.mxu0
    %v5298 = vadd.f32 %v3990, %v5297
    %5299 = vmatmul.bf16.gmra.mxu0 %v3855
    %v5300 = vpop.f32.mrf.mxu0
    %v5301 = vadd.f32 %v3990, %v5300
    %v5302 = vpop.f32.mrf.mxu0
    %v5303 = vadd.f32 %v3990, %v5302
    %5304 = vdwg.mxu0
    %5305 = vmatpush.bf16.msra.mxu0 %v4461
    %5306 = vmatpush.bf16.msra.mxu0 %v4454
    %5307 = vmatpush.bf16.msra.mxu0 %v4447
    %5308 = vmatpush.bf16.msra.mxu0 %v4440
    %5309 = vmatpush.bf16.msra.mxu0 %v4433
    %5310 = vmatpush.bf16.msra.mxu0 %v4426
    %5311 = vmatpush.bf16.msra.mxu0 %v4419
    %5312 = vmatpush.bf16.msra.mxu0 %v4412
    %5313 = vmatmul.bf16.gmra.mxu0 %v3820
    %v5314 = vpop.f32.mrf.mxu0
    %v5315 = vadd.f32 %v5211, %v5314
    %v5316 = vpop.f32.mrf.mxu0
    %v5317 = vadd.f32 %v5213, %v5316
    %5318 = vmatmul.bf16.gmra.mxu0 %v3822
    %v5319 = vpop.f32.mrf.mxu0
    %v5320 = vadd.f32 %v5216, %v5319
    %v5321 = vpop.f32.mrf.mxu0
    %v5322 = vadd.f32 %v5218, %v5321
    %5323 = vmatmul.bf16.gmra.mxu0 %v3824
    %v5324 = vpop.f32.mrf.mxu0
    %v5325 = vadd.f32 %v5221, %v5324
    %v5326 = vpop.f32.mrf.mxu0
    %v5327 = vadd.f32 %v5223, %v5326
    %5328 = vmatmul.bf16.gmra.mxu0 %v3826
    %v5329 = vpop.f32.mrf.mxu0
    %v5330 = vadd.f32 %v5226, %v5329
    %v5331 = vpop.f32.mrf.mxu0
    %v5332 = vadd.f32 %v5228, %v5331
    %5333 = vmatmul.bf16.gmra.mxu0 %v3828
    %v5334 = vpop.f32.mrf.mxu0
    %v5335 = vadd.f32 %v5231, %v5334
    %v5336 = vpop.f32.mrf.mxu0
    %v5337 = vadd.f32 %v5233, %v5336
    %5338 = vmatmul.bf16.gmra.mxu0 %v3830
    %v5339 = vpop.f32.mrf.mxu0
    %v5340 = vadd.f32 %v5236, %v5339
    %v5341 = vpop.f32.mrf.mxu0
    %v5342 = vadd.f32 %v5238, %v5341
    %5343 = vmatmul.bf16.gmra.mxu0 %v3832
    %v5344 = vpop.f32.mrf.mxu0
    %v5345 = vadd.f32 %v5241, %v5344
    %v5346 = vpop.f32.mrf.mxu0
    %v5347 = vadd.f32 %v5243, %v5346
    %5348 = vmatmul.bf16.gmra.mxu0 %v3834
    %v5349 = vpop.f32.mrf.mxu0
    %v5350 = vadd.f32 %v5246, %v5349
    %v5351 = vpop.f32.mrf.mxu0
    %v5352 = vadd.f32 %v5248, %v5351
    %5353 = vmatmul.bf16.gmra.mxu0 %v3836
    %v5354 = vpop.f32.mrf.mxu0
    %v5355 = vadd.f32 %v5251, %v5354
    %v5356 = vpop.f32.mrf.mxu0
    %v5357 = vadd.f32 %v5253, %v5356
    %5358 = vmatmul.bf16.gmra.mxu0 %v3838
    %v5359 = vpop.f32.mrf.mxu0
    %v5360 = vadd.f32 %v5256, %v5359
    %v5361 = vpop.f32.mrf.mxu0
    %v5362 = vadd.f32 %v5258, %v5361
    %5363 = vmatmul.bf16.gmra.mxu0 %v3840
    %v5364 = vpop.f32.mrf.mxu0
    %v5365 = vadd.f32 %v5261, %v5364
    %v5366 = vpop.f32.mrf.mxu0
    %v5367 = vadd.f32 %v5263, %v5366
    %5368 = vmatmul.bf16.gmra.mxu0 %v3842
    %v5369 = vpop.f32.mrf.mxu0
    %v5370 = vadd.f32 %v5266, %v5369
    %v5371 = vpop.f32.mrf.mxu0
    %v5372 = vadd.f32 %v5268, %v5371
    %5373 = vmatmul.bf16.gmra.mxu0 %v3844
    %v5374 = vpop.f32.mrf.mxu0
    %v5375 = vadd.f32 %v5271, %v5374
    %v5376 = vpop.f32.mrf.mxu0
    %v5377 = vadd.f32 %v5273, %v5376
    %5378 = vmatmul.bf16.gmra.mxu0 %v3846
    %v5379 = vpop.f32.mrf.mxu0
    %v5380 = vadd.f32 %v5276, %v5379
    %v5381 = vpop.f32.mrf.mxu0
    %v5382 = vadd.f32 %v5278, %v5381
    %5383 = vmatmul.bf16.gmra.mxu0 %v3848
    %v5384 = vpop.f32.mrf.mxu0
    %v5385 = vadd.f32 %v5281, %v5384
    %v5386 = vpop.f32.mrf.mxu0
    %v5387 = vadd.f32 %v5283, %v5386
    %5388 = vmatmul.bf16.gmra.mxu0 %v3850
    %v5389 = vpop.f32.mrf.mxu0
    %v5390 = vadd.f32 %v5286, %v5389
    %v5391 = vpop.f32.mrf.mxu0
    %v5392 = vadd.f32 %v5288, %v5391
    %5393 = vmatmul.bf16.gmra.mxu0 %v3852
    %v5394 = vpop.f32.mrf.mxu0
    %v5395 = vadd.f32 %v5291, %v5394
    %v5396 = vpop.f32.mrf.mxu0
    %v5397 = vadd.f32 %v5293, %v5396
    %5398 = vmatmul.bf16.gmra.mxu0 %v3854
    %v5399 = vpop.f32.mrf.mxu0
    %v5400 = vadd.f32 %v5296, %v5399
    %v5401 = vpop.f32.mrf.mxu0
    %v5402 = vadd.f32 %v5298, %v5401
    %5403 = vmatmul.bf16.gmra.mxu0 %v3856
    %v5404 = vpop.f32.mrf.mxu0
    %v5405 = vadd.f32 %v5301, %v5404
    %v5406 = vpop.f32.mrf.mxu0
    %v5407 = vadd.f32 %v5303, %v5406
    %5408 = vdwg.mxu0
    %5409 = vmatpush.bf16.msra.mxu0 %v4406
    %5410 = vmatpush.bf16.msra.mxu0 %v4399
    %5411 = vmatpush.bf16.msra.mxu0 %v4392
    %5412 = vmatpush.bf16.msra.mxu0 %v4385
    %5413 = vmatpush.bf16.msra.mxu0 %v4378
    %5414 = vmatpush.bf16.msra.mxu0 %v4371
    %5415 = vmatpush.bf16.msra.mxu0 %v4364
    %5416 = vmatpush.bf16.msra.mxu0 %v4357
    %5417 = vmatmul.bf16.gmra.mxu0 %v3819
    %v5418 = vpop.f32.mrf.mxu0
    %v5419 = vadd.f32 %v3991, %v5418
    %v5420 = vpop.f32.mrf.mxu0
    %v5421 = vadd.f32 %v3991, %v5420
    %5422 = vmatmul.bf16.gmra.mxu0 %v3821
    %v5423 = vpop.f32.mrf.mxu0
    %v5424 = vadd.f32 %v3991, %v5423
    %v5425 = vpop.f32.mrf.mxu0
    %v5426 = vadd.f32 %v3991, %v5425
    %5427 = vmatmul.bf16.gmra.mxu0 %v3823
    %v5428 = vpop.f32.mrf.mxu0
    %v5429 = vadd.f32 %v3991, %v5428
    %v5430 = vpop.f32.mrf.mxu0
    %v5431 = vadd.f32 %v3991, %v5430
    %5432 = vmatmul.bf16.gmra.mxu0 %v3825
    %v5433 = vpop.f32.mrf.mxu0
    %v5434 = vadd.f32 %v3991, %v5433
    %v5435 = vpop.f32.mrf.mxu0
    %v5436 = vadd.f32 %v3991, %v5435
    %5437 = vmatmul.bf16.gmra.mxu0 %v3827
    %v5438 = vpop.f32.mrf.mxu0
    %v5439 = vadd.f32 %v3991, %v5438
    %v5440 = vpop.f32.mrf.mxu0
    %v5441 = vadd.f32 %v3991, %v5440
    %5442 = vmatmul.bf16.gmra.mxu0 %v3829
    %v5443 = vpop.f32.mrf.mxu0
    %v5444 = vadd.f32 %v3991, %v5443
    %v5445 = vpop.f32.mrf.mxu0
    %v5446 = vadd.f32 %v3991, %v5445
    %5447 = vmatmul.bf16.gmra.mxu0 %v3831
    %v5448 = vpop.f32.mrf.mxu0
    %v5449 = vadd.f32 %v3991, %v5448
    %v5450 = vpop.f32.mrf.mxu0
    %v5451 = vadd.f32 %v3991, %v5450
    %5452 = vmatmul.bf16.gmra.mxu0 %v3833
    %v5453 = vpop.f32.mrf.mxu0
    %v5454 = vadd.f32 %v3991, %v5453
    %v5455 = vpop.f32.mrf.mxu0
    %v5456 = vadd.f32 %v3991, %v5455
    %5457 = vmatmul.bf16.gmra.mxu0 %v3835
    %v5458 = vpop.f32.mrf.mxu0
    %v5459 = vadd.f32 %v3991, %v5458
    %v5460 = vpop.f32.mrf.mxu0
    %v5461 = vadd.f32 %v3991, %v5460
    %5462 = vmatmul.bf16.gmra.mxu0 %v3837
    %v5463 = vpop.f32.mrf.mxu0
    %v5464 = vadd.f32 %v3991, %v5463
    %v5465 = vpop.f32.mrf.mxu0
    %v5466 = vadd.f32 %v3991, %v5465
    %5467 = vmatmul.bf16.gmra.mxu0 %v3839
    %v5468 = vpop.f32.mrf.mxu0
    %v5469 = vadd.f32 %v3991, %v5468
    %v5470 = vpop.f32.mrf.mxu0
    %v5471 = vadd.f32 %v3991, %v5470
    %5472 = vmatmul.bf16.gmra.mxu0 %v3841
    %v5473 = vpop.f32.mrf.mxu0
    %v5474 = vadd.f32 %v3991, %v5473
    %v5475 = vpop.f32.mrf.mxu0
    %v5476 = vadd.f32 %v3991, %v5475
    %5477 = vmatmul.bf16.gmra.mxu0 %v3843
    %v5478 = vpop.f32.mrf.mxu0
    %v5479 = vadd.f32 %v3991, %v5478
    %v5480 = vpop.f32.mrf.mxu0
    %v5481 = vadd.f32 %v3991, %v5480
    %5482 = vmatmul.bf16.gmra.mxu0 %v3845
    %v5483 = vpop.f32.mrf.mxu0
    %v5484 = vadd.f32 %v3991, %v5483
    %v5485 = vpop.f32.mrf.mxu0
    %v5486 = vadd.f32 %v3991, %v5485
    %5487 = vmatmul.bf16.gmra.mxu0 %v3847
    %v5488 = vpop.f32.mrf.mxu0
    %v5489 = vadd.f32 %v3991, %v5488
    %v5490 = vpop.f32.mrf.mxu0
    %v5491 = vadd.f32 %v3991, %v5490
    %5492 = vmatmul.bf16.gmra.mxu0 %v3849
    %v5493 = vpop.f32.mrf.mxu0
    %v5494 = vadd.f32 %v3991, %v5493
    %v5495 = vpop.f32.mrf.mxu0
    %v5496 = vadd.f32 %v3991, %v5495
    %5497 = vmatmul.bf16.gmra.mxu0 %v3851
    %v5498 = vpop.f32.mrf.mxu0
    %v5499 = vadd.f32 %v3991, %v5498
    %v5500 = vpop.f32.mrf.mxu0
    %v5501 = vadd.f32 %v3991, %v5500
    %5502 = vmatmul.bf16.gmra.mxu0 %v3853
    %v5503 = vpop.f32.mrf.mxu0
    %v5504 = vadd.f32 %v3991, %v5503
    %v5505 = vpop.f32.mrf.mxu0
    %v5506 = vadd.f32 %v3991, %v5505
    %5507 = vmatmul.bf16.gmra.mxu0 %v3855
    %v5508 = vpop.f32.mrf.mxu0
    %v5509 = vadd.f32 %v3991, %v5508
    %v5510 = vpop.f32.mrf.mxu0
    %v5511 = vadd.f32 %v3991, %v5510
    %5512 = vdwg.mxu0
    %5513 = vmatpush.bf16.msra.mxu0 %v4462
    %5514 = vmatpush.bf16.msra.mxu0 %v4455
    %5515 = vmatpush.bf16.msra.mxu0 %v4448
    %5516 = vmatpush.bf16.msra.mxu0 %v4441
    %5517 = vmatpush.bf16.msra.mxu0 %v4434
    %5518 = vmatpush.bf16.msra.mxu0 %v4427
    %5519 = vmatpush.bf16.msra.mxu0 %v4420
    %5520 = vmatpush.bf16.msra.mxu0 %v4413
    %5521 = vmatmul.bf16.gmra.mxu0 %v3820
    %v5522 = vpop.f32.mrf.mxu0
    %v5523 = vadd.f32 %v5419, %v5522
    %v5524 = vpop.f32.mrf.mxu0
    %v5525 = vadd.f32 %v5421, %v5524
    %5526 = vmatmul.bf16.gmra.mxu0 %v3822
    %v5527 = vpop.f32.mrf.mxu0
    %v5528 = vadd.f32 %v5424, %v5527
    %v5529 = vpop.f32.mrf.mxu0
    %v5530 = vadd.f32 %v5426, %v5529
    %5531 = vmatmul.bf16.gmra.mxu0 %v3824
    %v5532 = vpop.f32.mrf.mxu0
    %v5533 = vadd.f32 %v5429, %v5532
    %v5534 = vpop.f32.mrf.mxu0
    %v5535 = vadd.f32 %v5431, %v5534
    %5536 = vmatmul.bf16.gmra.mxu0 %v3826
    %v5537 = vpop.f32.mrf.mxu0
    %v5538 = vadd.f32 %v5434, %v5537
    %v5539 = vpop.f32.mrf.mxu0
    %v5540 = vadd.f32 %v5436, %v5539
    %5541 = vmatmul.bf16.gmra.mxu0 %v3828
    %v5542 = vpop.f32.mrf.mxu0
    %v5543 = vadd.f32 %v5439, %v5542
    %v5544 = vpop.f32.mrf.mxu0
    %v5545 = vadd.f32 %v5441, %v5544
    %5546 = vmatmul.bf16.gmra.mxu0 %v3830
    %v5547 = vpop.f32.mrf.mxu0
    %v5548 = vadd.f32 %v5444, %v5547
    %v5549 = vpop.f32.mrf.mxu0
    %v5550 = vadd.f32 %v5446, %v5549
    %5551 = vmatmul.bf16.gmra.mxu0 %v3832
    %v5552 = vpop.f32.mrf.mxu0
    %v5553 = vadd.f32 %v5449, %v5552
    %v5554 = vpop.f32.mrf.mxu0
    %v5555 = vadd.f32 %v5451, %v5554
    %5556 = vmatmul.bf16.gmra.mxu0 %v3834
    %v5557 = vpop.f32.mrf.mxu0
    %v5558 = vadd.f32 %v5454, %v5557
    %v5559 = vpop.f32.mrf.mxu0
    %v5560 = vadd.f32 %v5456, %v5559
    %5561 = vmatmul.bf16.gmra.mxu0 %v3836
    %v5562 = vpop.f32.mrf.mxu0
    %v5563 = vadd.f32 %v5459, %v5562
    %v5564 = vpop.f32.mrf.mxu0
    %v5565 = vadd.f32 %v5461, %v5564
    %5566 = vmatmul.bf16.gmra.mxu0 %v3838
    %v5567 = vpop.f32.mrf.mxu0
    %v5568 = vadd.f32 %v5464, %v5567
    %v5569 = vpop.f32.mrf.mxu0
    %v5570 = vadd.f32 %v5466, %v5569
    %5571 = vmatmul.bf16.gmra.mxu0 %v3840
    %v5572 = vpop.f32.mrf.mxu0
    %v5573 = vadd.f32 %v5469, %v5572
    %v5574 = vpop.f32.mrf.mxu0
    %v5575 = vadd.f32 %v5471, %v5574
    %5576 = vmatmul.bf16.gmra.mxu0 %v3842
    %v5577 = vpop.f32.mrf.mxu0
    %v5578 = vadd.f32 %v5474, %v5577
    %v5579 = vpop.f32.mrf.mxu0
    %v5580 = vadd.f32 %v5476, %v5579
    %5581 = vmatmul.bf16.gmra.mxu0 %v3844
    %v5582 = vpop.f32.mrf.mxu0
    %v5583 = vadd.f32 %v5479, %v5582
    %v5584 = vpop.f32.mrf.mxu0
    %v5585 = vadd.f32 %v5481, %v5584
    %5586 = vmatmul.bf16.gmra.mxu0 %v3846
    %v5587 = vpop.f32.mrf.mxu0
    %v5588 = vadd.f32 %v5484, %v5587
    %v5589 = vpop.f32.mrf.mxu0
    %v5590 = vadd.f32 %v5486, %v5589
    %5591 = vmatmul.bf16.gmra.mxu0 %v3848
    %v5592 = vpop.f32.mrf.mxu0
    %v5593 = vadd.f32 %v5489, %v5592
    %v5594 = vpop.f32.mrf.mxu0
    %v5595 = vadd.f32 %v5491, %v5594
    %5596 = vmatmul.bf16.gmra.mxu0 %v3850
    %v5597 = vpop.f32.mrf.mxu0
    %v5598 = vadd.f32 %v5494, %v5597
    %v5599 = vpop.f32.mrf.mxu0
    %v5600 = vadd.f32 %v5496, %v5599
    %5601 = vmatmul.bf16.gmra.mxu0 %v3852
    %v5602 = vpop.f32.mrf.mxu0
    %v5603 = vadd.f32 %v5499, %v5602
    %v5604 = vpop.f32.mrf.mxu0
    %v5605 = vadd.f32 %v5501, %v5604
    %5606 = vmatmul.bf16.gmra.mxu0 %v3854
    %v5607 = vpop.f32.mrf.mxu0
    %v5608 = vadd.f32 %v5504, %v5607
    %v5609 = vpop.f32.mrf.mxu0
    %v5610 = vadd.f32 %v5506, %v5609
    %5611 = vmatmul.bf16.gmra.mxu0 %v3856
    %v5612 = vpop.f32.mrf.mxu0
    %v5613 = vadd.f32 %v5509, %v5612
    %v5614 = vpop.f32.mrf.mxu0
    %v5615 = vadd.f32 %v5511, %v5614
    %5616 = vdwg.mxu0
    %5617 = vmatpush.bf16.msra.mxu0 %v4407
    %5618 = vmatpush.bf16.msra.mxu0 %v4400
    %5619 = vmatpush.bf16.msra.mxu0 %v4393
    %5620 = vmatpush.bf16.msra.mxu0 %v4386
    %5621 = vmatpush.bf16.msra.mxu0 %v4379
    %5622 = vmatpush.bf16.msra.mxu0 %v4372
    %5623 = vmatpush.bf16.msra.mxu0 %v4365
    %5624 = vmatpush.bf16.msra.mxu0 %v4358
    %5625 = vmatmul.bf16.gmra.mxu0 %v3819
    %v5626 = vpop.f32.mrf.mxu0
    %v5627 = vadd.f32 %v3992, %v5626
    %v5628 = vpop.f32.mrf.mxu0
    %v5629 = vadd.f32 %v3992, %v5628
    %5630 = vmatmul.bf16.gmra.mxu0 %v3821
    %v5631 = vpop.f32.mrf.mxu0
    %v5632 = vadd.f32 %v3992, %v5631
    %v5633 = vpop.f32.mrf.mxu0
    %v5634 = vadd.f32 %v3992, %v5633
    %5635 = vmatmul.bf16.gmra.mxu0 %v3823
    %v5636 = vpop.f32.mrf.mxu0
    %v5637 = vadd.f32 %v3992, %v5636
    %v5638 = vpop.f32.mrf.mxu0
    %v5639 = vadd.f32 %v3992, %v5638
    %5640 = vmatmul.bf16.gmra.mxu0 %v3825
    %v5641 = vpop.f32.mrf.mxu0
    %v5642 = vadd.f32 %v3992, %v5641
    %v5643 = vpop.f32.mrf.mxu0
    %v5644 = vadd.f32 %v3992, %v5643
    %5645 = vmatmul.bf16.gmra.mxu0 %v3827
    %v5646 = vpop.f32.mrf.mxu0
    %v5647 = vadd.f32 %v3992, %v5646
    %v5648 = vpop.f32.mrf.mxu0
    %v5649 = vadd.f32 %v3992, %v5648
    %5650 = vmatmul.bf16.gmra.mxu0 %v3829
    %v5651 = vpop.f32.mrf.mxu0
    %v5652 = vadd.f32 %v3992, %v5651
    %v5653 = vpop.f32.mrf.mxu0
    %v5654 = vadd.f32 %v3992, %v5653
    %5655 = vmatmul.bf16.gmra.mxu0 %v3831
    %v5656 = vpop.f32.mrf.mxu0
    %v5657 = vadd.f32 %v3992, %v5656
    %v5658 = vpop.f32.mrf.mxu0
    %v5659 = vadd.f32 %v3992, %v5658
    %5660 = vmatmul.bf16.gmra.mxu0 %v3833
    %v5661 = vpop.f32.mrf.mxu0
    %v5662 = vadd.f32 %v3992, %v5661
    %v5663 = vpop.f32.mrf.mxu0
    %v5664 = vadd.f32 %v3992, %v5663
    %5665 = vmatmul.bf16.gmra.mxu0 %v3835
    %v5666 = vpop.f32.mrf.mxu0
    %v5667 = vadd.f32 %v3992, %v5666
    %v5668 = vpop.f32.mrf.mxu0
    %v5669 = vadd.f32 %v3992, %v5668
    %5670 = vmatmul.bf16.gmra.mxu0 %v3837
    %v5671 = vpop.f32.mrf.mxu0
    %v5672 = vadd.f32 %v3992, %v5671
    %v5673 = vpop.f32.mrf.mxu0
    %v5674 = vadd.f32 %v3992, %v5673
    %5675 = vmatmul.bf16.gmra.mxu0 %v3839
    %v5676 = vpop.f32.mrf.mxu0
    %v5677 = vadd.f32 %v3992, %v5676
    %v5678 = vpop.f32.mrf.mxu0
    %v5679 = vadd.f32 %v3992, %v5678
    %5680 = vmatmul.bf16.gmra.mxu0 %v3841
    %v5681 = vpop.f32.mrf.mxu0
    %v5682 = vadd.f32 %v3992, %v5681
    %v5683 = vpop.f32.mrf.mxu0
    %v5684 = vadd.f32 %v3992, %v5683
    %5685 = vmatmul.bf16.gmra.mxu0 %v3843
    %v5686 = vpop.f32.mrf.mxu0
    %v5687 = vadd.f32 %v3992, %v5686
    %v5688 = vpop.f32.mrf.mxu0
    %v5689 = vadd.f32 %v3992, %v5688
    %5690 = vmatmul.bf16.gmra.mxu0 %v3845
    %v5691 = vpop.f32.mrf.mxu0
    %v5692 = vadd.f32 %v3992, %v5691
    %v5693 = vpop.f32.mrf.mxu0
    %v5694 = vadd.f32 %v3992, %v5693
    %5695 = vmatmul.bf16.gmra.mxu0 %v3847
    %v5696 = vpop.f32.mrf.mxu0
    %v5697 = vadd.f32 %v3992, %v5696
    %v5698 = vpop.f32.mrf.mxu0
    %v5699 = vadd.f32 %v3992, %v5698
    %5700 = vmatmul.bf16.gmra.mxu0 %v3849
    %v5701 = vpop.f32.mrf.mxu0
    %v5702 = vadd.f32 %v3992, %v5701
    %v5703 = vpop.f32.mrf.mxu0
    %v5704 = vadd.f32 %v3992, %v5703
    %5705 = vmatmul.bf16.gmra.mxu0 %v3851
    %v5706 = vpop.f32.mrf.mxu0
    %v5707 = vadd.f32 %v3992, %v5706
    %v5708 = vpop.f32.mrf.mxu0
    %v5709 = vadd.f32 %v3992, %v5708
    %5710 = vmatmul.bf16.gmra.mxu0 %v3853
    %v5711 = vpop.f32.mrf.mxu0
    %v5712 = vadd.f32 %v3992, %v5711
    %v5713 = vpop.f32.mrf.mxu0
    %v5714 = vadd.f32 %v3992, %v5713
    %5715 = vmatmul.bf16.gmra.mxu0 %v3855
    %v5716 = vpop.f32.mrf.mxu0
    %v5717 = vadd.f32 %v3992, %v5716
    %v5718 = vpop.f32.mrf.mxu0
    %v5719 = vadd.f32 %v3992, %v5718
    %5720 = vdwg.mxu0
    %5721 = vmatpush.bf16.msra.mxu0 %v4463
    %5722 = vmatpush.bf16.msra.mxu0 %v4456
    %5723 = vmatpush.bf16.msra.mxu0 %v4449
    %5724 = vmatpush.bf16.msra.mxu0 %v4442
    %5725 = vmatpush.bf16.msra.mxu0 %v4435
    %5726 = vmatpush.bf16.msra.mxu0 %v4428
    %5727 = vmatpush.bf16.msra.mxu0 %v4421
    %5728 = vmatpush.bf16.msra.mxu0 %v4414
    %5729 = vmatmul.bf16.gmra.mxu0 %v3820
    %v5730 = vpop.f32.mrf.mxu0
    %v5731 = vadd.f32 %v5627, %v5730
    %v5732 = vpop.f32.mrf.mxu0
    %v5733 = vadd.f32 %v5629, %v5732
    %5734 = vmatmul.bf16.gmra.mxu0 %v3822
    %v5735 = vpop.f32.mrf.mxu0
    %v5736 = vadd.f32 %v5632, %v5735
    %v5737 = vpop.f32.mrf.mxu0
    %v5738 = vadd.f32 %v5634, %v5737
    %5739 = vmatmul.bf16.gmra.mxu0 %v3824
    %v5740 = vpop.f32.mrf.mxu0
    %v5741 = vadd.f32 %v5637, %v5740
    %v5742 = vpop.f32.mrf.mxu0
    %v5743 = vadd.f32 %v5639, %v5742
    %5744 = vmatmul.bf16.gmra.mxu0 %v3826
    %v5745 = vpop.f32.mrf.mxu0
    %v5746 = vadd.f32 %v5642, %v5745
    %v5747 = vpop.f32.mrf.mxu0
    %v5748 = vadd.f32 %v5644, %v5747
    %5749 = vmatmul.bf16.gmra.mxu0 %v3828
    %v5750 = vpop.f32.mrf.mxu0
    %v5751 = vadd.f32 %v5647, %v5750
    %v5752 = vpop.f32.mrf.mxu0
    %v5753 = vadd.f32 %v5649, %v5752
    %5754 = vmatmul.bf16.gmra.mxu0 %v3830
    %v5755 = vpop.f32.mrf.mxu0
    %v5756 = vadd.f32 %v5652, %v5755
    %v5757 = vpop.f32.mrf.mxu0
    %v5758 = vadd.f32 %v5654, %v5757
    %5759 = vmatmul.bf16.gmra.mxu0 %v3832
    %v5760 = vpop.f32.mrf.mxu0
    %v5761 = vadd.f32 %v5657, %v5760
    %v5762 = vpop.f32.mrf.mxu0
    %v5763 = vadd.f32 %v5659, %v5762
    %5764 = vmatmul.bf16.gmra.mxu0 %v3834
    %v5765 = vpop.f32.mrf.mxu0
    %v5766 = vadd.f32 %v5662, %v5765
    %v5767 = vpop.f32.mrf.mxu0
    %v5768 = vadd.f32 %v5664, %v5767
    %5769 = vmatmul.bf16.gmra.mxu0 %v3836
    %v5770 = vpop.f32.mrf.mxu0
    %v5771 = vadd.f32 %v5667, %v5770
    %v5772 = vpop.f32.mrf.mxu0
    %v5773 = vadd.f32 %v5669, %v5772
    %5774 = vmatmul.bf16.gmra.mxu0 %v3838
    %v5775 = vpop.f32.mrf.mxu0
    %v5776 = vadd.f32 %v5672, %v5775
    %v5777 = vpop.f32.mrf.mxu0
    %v5778 = vadd.f32 %v5674, %v5777
    %5779 = vmatmul.bf16.gmra.mxu0 %v3840
    %v5780 = vpop.f32.mrf.mxu0
    %v5781 = vadd.f32 %v5677, %v5780
    %v5782 = vpop.f32.mrf.mxu0
    %v5783 = vadd.f32 %v5679, %v5782
    %5784 = vmatmul.bf16.gmra.mxu0 %v3842
    %v5785 = vpop.f32.mrf.mxu0
    %v5786 = vadd.f32 %v5682, %v5785
    %v5787 = vpop.f32.mrf.mxu0
    %v5788 = vadd.f32 %v5684, %v5787
    %5789 = vmatmul.bf16.gmra.mxu0 %v3844
    %v5790 = vpop.f32.mrf.mxu0
    %v5791 = vadd.f32 %v5687, %v5790
    %v5792 = vpop.f32.mrf.mxu0
    %v5793 = vadd.f32 %v5689, %v5792
    %5794 = vmatmul.bf16.gmra.mxu0 %v3846
    %v5795 = vpop.f32.mrf.mxu0
    %v5796 = vadd.f32 %v5692, %v5795
    %v5797 = vpop.f32.mrf.mxu0
    %v5798 = vadd.f32 %v5694, %v5797
    %5799 = vmatmul.bf16.gmra.mxu0 %v3848
    %v5800 = vpop.f32.mrf.mxu0
    %v5801 = vadd.f32 %v5697, %v5800
    %v5802 = vpop.f32.mrf.mxu0
    %v5803 = vadd.f32 %v5699, %v5802
    %5804 = vmatmul.bf16.gmra.mxu0 %v3850
    %v5805 = vpop.f32.mrf.mxu0
    %v5806 = vadd.f32 %v5702, %v5805
    %v5807 = vpop.f32.mrf.mxu0
    %v5808 = vadd.f32 %v5704, %v5807
    %5809 = vmatmul.bf16.gmra.mxu0 %v3852
    %v5810 = vpop.f32.mrf.mxu0
    %v5811 = vadd.f32 %v5707, %v5810
    %v5812 = vpop.f32.mrf.mxu0
    %v5813 = vadd.f32 %v5709, %v5812
    %5814 = vmatmul.bf16.gmra.mxu0 %v3854
    %v5815 = vpop.f32.mrf.mxu0
    %v5816 = vadd.f32 %v5712, %v5815
    %v5817 = vpop.f32.mrf.mxu0
    %v5818 = vadd.f32 %v5714, %v5817
    %5819 = vmatmul.bf16.gmra.mxu0 %v3856
    %v5820 = vpop.f32.mrf.mxu0
    %v5821 = vadd.f32 %v5717, %v5820
    %v5822 = vpop.f32.mrf.mxu0
    %v5823 = vadd.f32 %v5719, %v5822
    %5824 = vdwg.mxu0
    %5825 = vmatpush.bf16.msra.mxu0 %v4408
    %5826 = vmatpush.bf16.msra.mxu0 %v4401
    %5827 = vmatpush.bf16.msra.mxu0 %v4394
    %5828 = vmatpush.bf16.msra.mxu0 %v4387
    %5829 = vmatpush.bf16.msra.mxu0 %v4380
    %5830 = vmatpush.bf16.msra.mxu0 %v4373
    %5831 = vmatpush.bf16.msra.mxu0 %v4366
    %5832 = vmatpush.bf16.msra.mxu0 %v4359
    %5833 = vmatmul.bf16.gmra.mxu0 %v3819
    %v5834 = vpop.f32.mrf.mxu0
    %v5835 = vadd.f32 %v3993, %v5834
    %v5836 = vpop.f32.mrf.mxu0
    %v5837 = vadd.f32 %v3993, %v5836
    %5838 = vmatmul.bf16.gmra.mxu0 %v3821
    %v5839 = vpop.f32.mrf.mxu0
    %v5840 = vadd.f32 %v3993, %v5839
    %v5841 = vpop.f32.mrf.mxu0
    %v5842 = vadd.f32 %v3993, %v5841
    %5843 = vmatmul.bf16.gmra.mxu0 %v3823
    %v5844 = vpop.f32.mrf.mxu0
    %v5845 = vadd.f32 %v3993, %v5844
    %v5846 = vpop.f32.mrf.mxu0
    %v5847 = vadd.f32 %v3993, %v5846
    %5848 = vmatmul.bf16.gmra.mxu0 %v3825
    %v5849 = vpop.f32.mrf.mxu0
    %v5850 = vadd.f32 %v3993, %v5849
    %v5851 = vpop.f32.mrf.mxu0
    %v5852 = vadd.f32 %v3993, %v5851
    %5853 = vmatmul.bf16.gmra.mxu0 %v3827
    %v5854 = vpop.f32.mrf.mxu0
    %v5855 = vadd.f32 %v3993, %v5854
    %v5856 = vpop.f32.mrf.mxu0
    %v5857 = vadd.f32 %v3993, %v5856
    %5858 = vmatmul.bf16.gmra.mxu0 %v3829
    %v5859 = vpop.f32.mrf.mxu0
    %v5860 = vadd.f32 %v3993, %v5859
    %v5861 = vpop.f32.mrf.mxu0
    %v5862 = vadd.f32 %v3993, %v5861
    %5863 = vmatmul.bf16.gmra.mxu0 %v3831
    %v5864 = vpop.f32.mrf.mxu0
    %v5865 = vadd.f32 %v3993, %v5864
    %v5866 = vpop.f32.mrf.mxu0
    %v5867 = vadd.f32 %v3993, %v5866
    %5868 = vmatmul.bf16.gmra.mxu0 %v3833
    %v5869 = vpop.f32.mrf.mxu0
    %v5870 = vadd.f32 %v3993, %v5869
    %v5871 = vpop.f32.mrf.mxu0
    %v5872 = vadd.f32 %v3993, %v5871
    %5873 = vmatmul.bf16.gmra.mxu0 %v3835
    %v5874 = vpop.f32.mrf.mxu0
    %v5875 = vadd.f32 %v3993, %v5874
    %v5876 = vpop.f32.mrf.mxu0
    %v5877 = vadd.f32 %v3993, %v5876
    %5878 = vmatmul.bf16.gmra.mxu0 %v3837
    %v5879 = vpop.f32.mrf.mxu0
    %v5880 = vadd.f32 %v3993, %v5879
    %v5881 = vpop.f32.mrf.mxu0
    %v5882 = vadd.f32 %v3993, %v5881
    %5883 = vmatmul.bf16.gmra.mxu0 %v3839
    %v5884 = vpop.f32.mrf.mxu0
    %v5885 = vadd.f32 %v3993, %v5884
    %v5886 = vpop.f32.mrf.mxu0
    %v5887 = vadd.f32 %v3993, %v5886
    %5888 = vmatmul.bf16.gmra.mxu0 %v3841
    %v5889 = vpop.f32.mrf.mxu0
    %v5890 = vadd.f32 %v3993, %v5889
    %v5891 = vpop.f32.mrf.mxu0
    %v5892 = vadd.f32 %v3993, %v5891
    %5893 = vmatmul.bf16.gmra.mxu0 %v3843
    %v5894 = vpop.f32.mrf.mxu0
    %v5895 = vadd.f32 %v3993, %v5894
    %v5896 = vpop.f32.mrf.mxu0
    %v5897 = vadd.f32 %v3993, %v5896
    %5898 = vmatmul.bf16.gmra.mxu0 %v3845
    %v5899 = vpop.f32.mrf.mxu0
    %v5900 = vadd.f32 %v3993, %v5899
    %v5901 = vpop.f32.mrf.mxu0
    %v5902 = vadd.f32 %v3993, %v5901
    %5903 = vmatmul.bf16.gmra.mxu0 %v3847
    %v5904 = vpop.f32.mrf.mxu0
    %v5905 = vadd.f32 %v3993, %v5904
    %v5906 = vpop.f32.mrf.mxu0
    %v5907 = vadd.f32 %v3993, %v5906
    %5908 = vmatmul.bf16.gmra.mxu0 %v3849
    %v5909 = vpop.f32.mrf.mxu0
    %v5910 = vadd.f32 %v3993, %v5909
    %v5911 = vpop.f32.mrf.mxu0
    %v5912 = vadd.f32 %v3993, %v5911
    %5913 = vmatmul.bf16.gmra.mxu0 %v3851
    %v5914 = vpop.f32.mrf.mxu0
    %v5915 = vadd.f32 %v3993, %v5914
    %v5916 = vpop.f32.mrf.mxu0
    %v5917 = vadd.f32 %v3993, %v5916
    %5918 = vmatmul.bf16.gmra.mxu0 %v3853
    %v5919 = vpop.f32.mrf.mxu0
    %v5920 = vadd.f32 %v3993, %v5919
    %v5921 = vpop.f32.mrf.mxu0
    %v5922 = vadd.f32 %v3993, %v5921
    %5923 = vmatmul.bf16.gmra.mxu0 %v3855
    %v5924 = vpop.f32.mrf.mxu0
    %v5925 = vadd.f32 %v3993, %v5924
    %v5926 = vpop.f32.mrf.mxu0
    %v5927 = vadd.f32 %v3993, %v5926
    %5928 = vdwg.mxu0
    %5929 = vmatpush.bf16.msra.mxu0 %v4464
    %5930 = vmatpush.bf16.msra.mxu0 %v4457
    %5931 = vmatpush.bf16.msra.mxu0 %v4450
    %5932 = vmatpush.bf16.msra.mxu0 %v4443
    %5933 = vmatpush.bf16.msra.mxu0 %v4436
    %5934 = vmatpush.bf16.msra.mxu0 %v4429
    %5935 = vmatpush.bf16.msra.mxu0 %v4422
    %5936 = vmatpush.bf16.msra.mxu0 %v4415
    %5937 = vmatmul.bf16.gmra.mxu0 %v3820
    %v5938 = vpop.f32.mrf.mxu0
    %v5939 = vadd.f32 %v5835, %v5938
    %v5940 = vpop.f32.mrf.mxu0
    %v5941 = vadd.f32 %v5837, %v5940
    %5942 = vmatmul.bf16.gmra.mxu0 %v3822
    %v5943 = vpop.f32.mrf.mxu0
    %v5944 = vadd.f32 %v5840, %v5943
    %v5945 = vpop.f32.mrf.mxu0
    %v5946 = vadd.f32 %v5842, %v5945
    %5947 = vmatmul.bf16.gmra.mxu0 %v3824
    %v5948 = vpop.f32.mrf.mxu0
    %v5949 = vadd.f32 %v5845, %v5948
    %v5950 = vpop.f32.mrf.mxu0
    %v5951 = vadd.f32 %v5847, %v5950
    %5952 = vmatmul.bf16.gmra.mxu0 %v3826
    %v5953 = vpop.f32.mrf.mxu0
    %v5954 = vadd.f32 %v5850, %v5953
    %v5955 = vpop.f32.mrf.mxu0
    %v5956 = vadd.f32 %v5852, %v5955
    %5957 = vmatmul.bf16.gmra.mxu0 %v3828
    %v5958 = vpop.f32.mrf.mxu0
    %v5959 = vadd.f32 %v5855, %v5958
    %v5960 = vpop.f32.mrf.mxu0
    %v5961 = vadd.f32 %v5857, %v5960
    %5962 = vmatmul.bf16.gmra.mxu0 %v3830
    %v5963 = vpop.f32.mrf.mxu0
    %v5964 = vadd.f32 %v5860, %v5963
    %v5965 = vpop.f32.mrf.mxu0
    %v5966 = vadd.f32 %v5862, %v5965
    %5967 = vmatmul.bf16.gmra.mxu0 %v3832
    %v5968 = vpop.f32.mrf.mxu0
    %v5969 = vadd.f32 %v5865, %v5968
    %v5970 = vpop.f32.mrf.mxu0
    %v5971 = vadd.f32 %v5867, %v5970
    %5972 = vmatmul.bf16.gmra.mxu0 %v3834
    %v5973 = vpop.f32.mrf.mxu0
    %v5974 = vadd.f32 %v5870, %v5973
    %v5975 = vpop.f32.mrf.mxu0
    %v5976 = vadd.f32 %v5872, %v5975
    %5977 = vmatmul.bf16.gmra.mxu0 %v3836
    %v5978 = vpop.f32.mrf.mxu0
    %v5979 = vadd.f32 %v5875, %v5978
    %v5980 = vpop.f32.mrf.mxu0
    %v5981 = vadd.f32 %v5877, %v5980
    %5982 = vmatmul.bf16.gmra.mxu0 %v3838
    %v5983 = vpop.f32.mrf.mxu0
    %v5984 = vadd.f32 %v5880, %v5983
    %v5985 = vpop.f32.mrf.mxu0
    %v5986 = vadd.f32 %v5882, %v5985
    %5987 = vmatmul.bf16.gmra.mxu0 %v3840
    %v5988 = vpop.f32.mrf.mxu0
    %v5989 = vadd.f32 %v5885, %v5988
    %v5990 = vpop.f32.mrf.mxu0
    %v5991 = vadd.f32 %v5887, %v5990
    %5992 = vmatmul.bf16.gmra.mxu0 %v3842
    %v5993 = vpop.f32.mrf.mxu0
    %v5994 = vadd.f32 %v5890, %v5993
    %v5995 = vpop.f32.mrf.mxu0
    %v5996 = vadd.f32 %v5892, %v5995
    %5997 = vmatmul.bf16.gmra.mxu0 %v3844
    %v5998 = vpop.f32.mrf.mxu0
    %v5999 = vadd.f32 %v5895, %v5998
    %v6000 = vpop.f32.mrf.mxu0
    %v6001 = vadd.f32 %v5897, %v6000
    %6002 = vmatmul.bf16.gmra.mxu0 %v3846
    %v6003 = vpop.f32.mrf.mxu0
    %v6004 = vadd.f32 %v5900, %v6003
    %v6005 = vpop.f32.mrf.mxu0
    %v6006 = vadd.f32 %v5902, %v6005
    %6007 = vmatmul.bf16.gmra.mxu0 %v3848
    %v6008 = vpop.f32.mrf.mxu0
    %v6009 = vadd.f32 %v5905, %v6008
    %v6010 = vpop.f32.mrf.mxu0
    %v6011 = vadd.f32 %v5907, %v6010
    %6012 = vmatmul.bf16.gmra.mxu0 %v3850
    %v6013 = vpop.f32.mrf.mxu0
    %v6014 = vadd.f32 %v5910, %v6013
    %v6015 = vpop.f32.mrf.mxu0
    %v6016 = vadd.f32 %v5912, %v6015
    %6017 = vmatmul.bf16.gmra.mxu0 %v3852
    %v6018 = vpop.f32.mrf.mxu0
    %v6019 = vadd.f32 %v5915, %v6018
    %v6020 = vpop.f32.mrf.mxu0
    %v6021 = vadd.f32 %v5917, %v6020
    %6022 = vmatmul.bf16.gmra.mxu0 %v3854
    %v6023 = vpop.f32.mrf.mxu0
    %v6024 = vadd.f32 %v5920, %v6023
    %v6025 = vpop.f32.mrf.mxu0
    %v6026 = vadd.f32 %v5922, %v6025
    %6027 = vmatmul.bf16.gmra.mxu0 %v3856
    %v6028 = vpop.f32.mrf.mxu0
    %v6029 = vadd.f32 %v5925, %v6028
    %v6030 = vpop.f32.mrf.mxu0
    %v6031 = vadd.f32 %v5927, %v6030
    %6032 = vdwg.mxu0
    %v6033 = vtanh.pop %v4691
    %v6034 = vtanh.pop %v4899
    %v6035 = vtanh.pop %v5107
    %v6036 = vtanh.pop %v5315
    %v6037 = vtanh.pop %v5523
    %v6038 = vtanh.pop %v5731
    %v6039 = vtanh.pop %v5939
    %v6040 = vtanh.pop %v4693
    %v6041 = vtanh.pop %v4901
    %v6042 = vtanh.pop %v5109
    %v6043 = vtanh.pop %v5317
    %v6044 = vtanh.pop %v5525
    %v6045 = vtanh.pop %v5733
    %v6046 = vtanh.pop %v5941
    %v6047 = vtanh.pop %v4696
    %v6048 = vtanh.pop %v4904
    %v6049 = vtanh.pop %v5112
    %v6050 = vtanh.pop %v5320
    %v6051 = vtanh.pop %v5528
    %v6052 = vtanh.pop %v5736
    %v6053 = vtanh.pop %v5944
    %v6054 = vtanh.pop %v4698
    %v6055 = vtanh.pop %v4906
    %v6056 = vtanh.pop %v5114
    %v6057 = vtanh.pop %v5322
    %v6058 = vtanh.pop %v5530
    %v6059 = vtanh.pop %v5738
    %v6060 = vtanh.pop %v5946
    %v6061 = vtanh.pop %v4701
    %v6062 = vtanh.pop %v4909
    %v6063 = vtanh.pop %v5117
    %v6064 = vtanh.pop %v5325
    %v6065 = vtanh.pop %v5533
    %v6066 = vtanh.pop %v5741
    %v6067 = vtanh.pop %v5949
    %v6068 = vtanh.pop %v4703
    %v6069 = vtanh.pop %v4911
    %v6070 = vtanh.pop %v5119
    %v6071 = vtanh.pop %v5327
    %v6072 = vtanh.pop %v5535
    %v6073 = vtanh.pop %v5743
    %v6074 = vtanh.pop %v5951
    %v6075 = vtanh.pop %v4706
    %v6076 = vtanh.pop %v4914
    %v6077 = vtanh.pop %v5122
    %v6078 = vtanh.pop %v5330
    %v6079 = vtanh.pop %v5538
    %v6080 = vtanh.pop %v5746
    %v6081 = vtanh.pop %v5954
    %v6082 = vtanh.pop %v4708
    %v6083 = vtanh.pop %v4916
    %v6084 = vtanh.pop %v5124
    %v6085 = vtanh.pop %v5332
    %v6086 = vtanh.pop %v5540
    %v6087 = vtanh.pop %v5748
    %v6088 = vtanh.pop %v5956
    %v6089 = vtanh.pop %v4711
    %v6090 = vtanh.pop %v4919
    %v6091 = vtanh.pop %v5127
    %v6092 = vtanh.pop %v5335
    %v6093 = vtanh.pop %v5543
    %v6094 = vtanh.pop %v5751
    %v6095 = vtanh.pop %v5959
    %v6096 = vtanh.pop %v4713
    %v6097 = vtanh.pop %v4921
    %v6098 = vtanh.pop %v5129
    %v6099 = vtanh.pop %v5337
    %v6100 = vtanh.pop %v5545
    %v6101 = vtanh.pop %v5753
    %v6102 = vtanh.pop %v5961
    %v6103 = vtanh.pop %v4716
    %v6104 = vtanh.pop %v4924
    %v6105 = vtanh.pop %v5132
    %v6106 = vtanh.pop %v5340
    %v6107 = vtanh.pop %v5548
    %v6108 = vtanh.pop %v5756
    %v6109 = vtanh.pop %v5964
    %v6110 = vtanh.pop %v4718
    %v6111 = vtanh.pop %v4926
    %v6112 = vtanh.pop %v5134
    %v6113 = vtanh.pop %v5342
    %v6114 = vtanh.pop %v5550
    %v6115 = vtanh.pop %v5758
    %v6116 = vtanh.pop %v5966
    %v6117 = vtanh.pop %v4721
    %v6118 = vtanh.pop %v4929
    %v6119 = vtanh.pop %v5137
    %v6120 = vtanh.pop %v5345
    %v6121 = vtanh.pop %v5553
    %v6122 = vtanh.pop %v5761
    %v6123 = vtanh.pop %v5969
    %v6124 = vtanh.pop %v4723
    %v6125 = vtanh.pop %v4931
    %v6126 = vtanh.pop %v5139
    %v6127 = vtanh.pop %v5347
    %v6128 = vtanh.pop %v5555
    %v6129 = vtanh.pop %v5763
    %v6130 = vtanh.pop %v5971
    %v6131 = vtanh.pop %v4726
    %v6132 = vtanh.pop %v4934
    %v6133 = vtanh.pop %v5142
    %v6134 = vtanh.pop %v5350
    %v6135 = vtanh.pop %v5558
    %v6136 = vtanh.pop %v5766
    %v6137 = vtanh.pop %v5974
    %v6138 = vtanh.pop %v4728
    %v6139 = vtanh.pop %v4936
    %v6140 = vtanh.pop %v5144
    %v6141 = vtanh.pop %v5352
    %v6142 = vtanh.pop %v5560
    %v6143 = vtanh.pop %v5768
    %v6144 = vtanh.pop %v5976
    %v6145 = vtanh.pop %v4731
    %v6146 = vtanh.pop %v4939
    %v6147 = vtanh.pop %v5147
    %v6148 = vtanh.pop %v5355
    %v6149 = vtanh.pop %v5563
    %v6150 = vtanh.pop %v5771
    %v6151 = vtanh.pop %v5979
    %v6152 = vtanh.pop %v4733
    %v6153 = vtanh.pop %v4941
    %v6154 = vtanh.pop %v5149
    %v6155 = vtanh.pop %v5357
    %v6156 = vtanh.pop %v5565
    %v6157 = vtanh.pop %v5773
    %v6158 = vtanh.pop %v5981
    %v6159 = vtanh.pop %v4736
    %v6160 = vtanh.pop %v4944
    %v6161 = vtanh.pop %v5152
    %v6162 = vtanh.pop %v5360
    %v6163 = vtanh.pop %v5568
    %v6164 = vtanh.pop %v5776
    %v6165 = vtanh.pop %v5984
    %v6166 = vtanh.pop %v4738
    %v6167 = vtanh.pop %v4946
    %v6168 = vtanh.pop %v5154
    %v6169 = vtanh.pop %v5362
    %v6170 = vtanh.pop %v5570
    %v6171 = vtanh.pop %v5778
    %v6172 = vtanh.pop %v5986
    %v6173 = vtanh.pop %v4741
    %v6174 = vtanh.pop %v4949
    %v6175 = vtanh.pop %v5157
    %v6176 = vtanh.pop %v5365
    %v6177 = vtanh.pop %v5573
    %v6178 = vtanh.pop %v5781
    %v6179 = vtanh.pop %v5989
    %v6180 = vtanh.pop %v4743
    %v6181 = vtanh.pop %v4951
    %v6182 = vtanh.pop %v5159
    %v6183 = vtanh.pop %v5367
    %v6184 = vtanh.pop %v5575
    %v6185 = vtanh.pop %v5783
    %v6186 = vtanh.pop %v5991
    %v6187 = vtanh.pop %v4746
    %v6188 = vtanh.pop %v4954
    %v6189 = vtanh.pop %v5162
    %v6190 = vtanh.pop %v5370
    %v6191 = vtanh.pop %v5578
    %v6192 = vtanh.pop %v5786
    %v6193 = vtanh.pop %v5994
    %v6194 = vtanh.pop %v4748
    %v6195 = vtanh.pop %v4956
    %v6196 = vtanh.pop %v5164
    %v6197 = vtanh.pop %v5372
    %v6198 = vtanh.pop %v5580
    %v6199 = vtanh.pop %v5788
    %v6200 = vtanh.pop %v5996
    %v6201 = vtanh.pop %v4751
    %v6202 = vtanh.pop %v4959
    %v6203 = vtanh.pop %v5167
    %v6204 = vtanh.pop %v5375
    %v6205 = vtanh.pop %v5583
    %v6206 = vtanh.pop %v5791
    %v6207 = vtanh.pop %v5999
    %v6208 = vtanh.pop %v4753
    %v6209 = vtanh.pop %v4961
    %v6210 = vtanh.pop %v5169
    %v6211 = vtanh.pop %v5377
    %v6212 = vtanh.pop %v5585
    %v6213 = vtanh.pop %v5793
    %v6214 = vtanh.pop %v6001
    %v6215 = vtanh.pop %v4756
    %v6216 = vtanh.pop %v4964
    %v6217 = vtanh.pop %v5172
    %v6218 = vtanh.pop %v5380
    %v6219 = vtanh.pop %v5588
    %v6220 = vtanh.pop %v5796
    %v6221 = vtanh.pop %v6004
    %v6222 = vtanh.pop %v4758
    %v6223 = vtanh.pop %v4966
    %v6224 = vtanh.pop %v5174
    %v6225 = vtanh.pop %v5382
    %v6226 = vtanh.pop %v5590
    %v6227 = vtanh.pop %v5798
    %v6228 = vtanh.pop %v6006
    %v6229 = vtanh.pop %v4761
    %v6230 = vtanh.pop %v4969
    %v6231 = vtanh.pop %v5177
    %v6232 = vtanh.pop %v5385
    %v6233 = vtanh.pop %v5593
    %v6234 = vtanh.pop %v5801
    %v6235 = vtanh.pop %v6009
    %v6236 = vtanh.pop %v4763
    %v6237 = vtanh.pop %v4971
    %v6238 = vtanh.pop %v5179
    %v6239 = vtanh.pop %v5387
    %v6240 = vtanh.pop %v5595
    %v6241 = vtanh.pop %v5803
    %v6242 = vtanh.pop %v6011
    %v6243 = vtanh.pop %v4766
    %v6244 = vtanh.pop %v4974
    %v6245 = vtanh.pop %v5182
    %v6246 = vtanh.pop %v5390
    %v6247 = vtanh.pop %v5598
    %v6248 = vtanh.pop %v5806
    %v6249 = vtanh.pop %v6014
    %v6250 = vtanh.pop %v4768
    %v6251 = vtanh.pop %v4976
    %v6252 = vtanh.pop %v5184
    %v6253 = vtanh.pop %v5392
    %v6254 = vtanh.pop %v5600
    %v6255 = vtanh.pop %v5808
    %v6256 = vtanh.pop %v6016
    %v6257 = vtanh.pop %v4771
    %v6258 = vtanh.pop %v4979
    %v6259 = vtanh.pop %v5187
    %v6260 = vtanh.pop %v5395
    %v6261 = vtanh.pop %v5603
    %v6262 = vtanh.pop %v5811
    %v6263 = vtanh.pop %v6019
    %v6264 = vtanh.pop %v4773
    %v6265 = vtanh.pop %v4981
    %v6266 = vtanh.pop %v5189
    %v6267 = vtanh.pop %v5397
    %v6268 = vtanh.pop %v5605
    %v6269 = vtanh.pop %v5813
    %v6270 = vtanh.pop %v6021
    %v6271 = vtanh.pop %v4776
    %v6272 = vtanh.pop %v4984
    %v6273 = vtanh.pop %v5192
    %v6274 = vtanh.pop %v5400
    %v6275 = vtanh.pop %v5608
    %v6276 = vtanh.pop %v5816
    %v6277 = vtanh.pop %v6024
    %v6278 = vtanh.pop %v4778
    %v6279 = vtanh.pop %v4986
    %v6280 = vtanh.pop %v5194
    %v6281 = vtanh.pop %v5402
    %v6282 = vtanh.pop %v5610
    %v6283 = vtanh.pop %v5818
    %v6284 = vtanh.pop %v6026
    %v6285 = vtanh.pop %v4781
    %v6286 = vtanh.pop %v4989
    %v6287 = vtanh.pop %v5197
    %v6288 = vtanh.pop %v5405
    %v6289 = vtanh.pop %v5613
    %v6290 = vtanh.pop %v5821
    %v6291 = vtanh.pop %v6029
    %v6292 = vtanh.pop %v4783
    %v6293 = vtanh.pop %v4991
    %v6294 = vtanh.pop %v5199
    %v6295 = vtanh.pop %v5407
    %v6296 = vtanh.pop %v5615
    %v6297 = vtanh.pop %v5823
    %v6298 = vtanh.pop %v6031
    %6299 = vst [vmem:[#allocation19] sm:$0xff] %v6033
    %6300 = vst [vmem:[#allocation19 + $0x8] sm:$0xff] %v6034
    %6301 = vst [vmem:[#allocation19 + $0x10] sm:$0xff] %v6035
    %6302 = vst [vmem:[#allocation19 + $0x18] sm:$0xff] %v6036
    %6303 = vst [vmem:[#allocation19 + $0x20] sm:$0xff] %v6037
    %6304 = vst [vmem:[#allocation19 + $0x28] sm:$0xff] %v6038
    %6305 = vst.msk [vmem:[#allocation19 + $0x30] sm:$0xff] %vm1179, %v6039
    %6306 = vst [vmem:[#allocation19 + $0x38] sm:$0xff] %v6040
    %6307 = vst [vmem:[#allocation19 + $0x40] sm:$0xff] %v6041
    %6308 = vst [vmem:[#allocation19 + $0x48] sm:$0xff] %v6042
    %6309 = vst [vmem:[#allocation19 + $0x50] sm:$0xff] %v6043
    %6310 = vst [vmem:[#allocation19 + $0x58] sm:$0xff] %v6044
    %6311 = vst [vmem:[#allocation19 + $0x60] sm:$0xff] %v6045
    %6312 = vst.msk [vmem:[#allocation19 + $0x68] sm:$0xff] %vm1179, %v6046
    %6313 = vst [vmem:[#allocation19 + $0x70] sm:$0xff] %v6047
    %6314 = vst [vmem:[#allocation19 + $0x78] sm:$0xff] %v6048
    %6315 = vst [vmem:[#allocation19 + $0x80] sm:$0xff] %v6049
    %6316 = vst [vmem:[#allocation19 + $0x88] sm:$0xff] %v6050
    %6317 = vst [vmem:[#allocation19 + $0x90] sm:$0xff] %v6051
    %6318 = vst [vmem:[#allocation19 + $0x98] sm:$0xff] %v6052
    %6319 = vst.msk [vmem:[#allocation19 + $0xa0] sm:$0xff] %vm1179, %v6053
    %6320 = vst [vmem:[#allocation19 + $0xa8] sm:$0xff] %v6054
    %6321 = vst [vmem:[#allocation19 + $0xb0] sm:$0xff] %v6055
    %6322 = vst [vmem:[#allocation19 + $0xb8] sm:$0xff] %v6056
    %6323 = vst [vmem:[#allocation19 + $0xc0] sm:$0xff] %v6057
    %6324 = vst [vmem:[#allocation19 + $0xc8] sm:$0xff] %v6058
    %6325 = vst [vmem:[#allocation19 + $0xd0] sm:$0xff] %v6059
    %6326 = vst.msk [vmem:[#allocation19 + $0xd8] sm:$0xff] %vm1179, %v6060
    %6327 = vst [vmem:[#allocation19 + $0xe0] sm:$0xff] %v6061
    %6328 = vst [vmem:[#allocation19 + $0xe8] sm:$0xff] %v6062
    %6329 = vst [vmem:[#allocation19 + $0xf0] sm:$0xff] %v6063
    %6330 = vst [vmem:[#allocation19 + $0xf8] sm:$0xff] %v6064
    %6331 = vst [vmem:[#allocation19 + $0x100] sm:$0xff] %v6065
    %6332 = vst [vmem:[#allocation19 + $0x108] sm:$0xff] %v6066
    %6333 = vst.msk [vmem:[#allocation19 + $0x110] sm:$0xff] %vm1179, %v6067
    %6334 = vst [vmem:[#allocation19 + $0x118] sm:$0xff] %v6068
    %6335 = vst [vmem:[#allocation19 + $0x120] sm:$0xff] %v6069
    %6336 = vst [vmem:[#allocation19 + $0x128] sm:$0xff] %v6070
    %6337 = vst [vmem:[#allocation19 + $0x130] sm:$0xff] %v6071
    %6338 = vst [vmem:[#allocation19 + $0x138] sm:$0xff] %v6072
    %6339 = vst [vmem:[#allocation19 + $0x140] sm:$0xff] %v6073
    %6340 = vst.msk [vmem:[#allocation19 + $0x148] sm:$0xff] %vm1179, %v6074
    %6341 = vst [vmem:[#allocation19 + $0x150] sm:$0xff] %v6075
    %6342 = vst [vmem:[#allocation19 + $0x158] sm:$0xff] %v6076
    %6343 = vst [vmem:[#allocation19 + $0x160] sm:$0xff] %v6077
    %6344 = vst [vmem:[#allocation19 + $0x168] sm:$0xff] %v6078
    %6345 = vst [vmem:[#allocation19 + $0x170] sm:$0xff] %v6079
    %6346 = vst [vmem:[#allocation19 + $0x178] sm:$0xff] %v6080
    %6347 = vst.msk [vmem:[#allocation19 + $0x180] sm:$0xff] %vm1179, %v6081
    %6348 = vst [vmem:[#allocation19 + $0x188] sm:$0xff] %v6082
    %6349 = vst [vmem:[#allocation19 + $0x190] sm:$0xff] %v6083
    %6350 = vst [vmem:[#allocation19 + $0x198] sm:$0xff] %v6084
    %6351 = vst [vmem:[#allocation19 + $0x1a0] sm:$0xff] %v6085
    %6352 = vst [vmem:[#allocation19 + $0x1a8] sm:$0xff] %v6086
    %6353 = vst [vmem:[#allocation19 + $0x1b0] sm:$0xff] %v6087
    %6354 = vst.msk [vmem:[#allocation19 + $0x1b8] sm:$0xff] %vm1179, %v6088
    %6355 = vst [vmem:[#allocation19 + $0x1c0] sm:$0xff] %v6089
    %6356 = vst [vmem:[#allocation19 + $0x1c8] sm:$0xff] %v6090
    %6357 = vst [vmem:[#allocation19 + $0x1d0] sm:$0xff] %v6091
    %6358 = vst [vmem:[#allocation19 + $0x1d8] sm:$0xff] %v6092
    %6359 = vst [vmem:[#allocation19 + $0x1e0] sm:$0xff] %v6093
    %6360 = vst [vmem:[#allocation19 + $0x1e8] sm:$0xff] %v6094
    %6361 = vst.msk [vmem:[#allocation19 + $0x1f0] sm:$0xff] %vm1179, %v6095
    %6362 = vst [vmem:[#allocation19 + $0x1f8] sm:$0xff] %v6096
    %6363 = vst [vmem:[#allocation19 + $0x200] sm:$0xff] %v6097
    %6364 = vst [vmem:[#allocation19 + $0x208] sm:$0xff] %v6098
    %6365 = vst [vmem:[#allocation19 + $0x210] sm:$0xff] %v6099
    %6366 = vst [vmem:[#allocation19 + $0x218] sm:$0xff] %v6100
    %6367 = vst [vmem:[#allocation19 + $0x220] sm:$0xff] %v6101
    %6368 = vst.msk [vmem:[#allocation19 + $0x228] sm:$0xff] %vm1179, %v6102
    %6369 = vst [vmem:[#allocation19 + $0x230] sm:$0xff] %v6103
    %6370 = vst [vmem:[#allocation19 + $0x238] sm:$0xff] %v6104
    %6371 = vst [vmem:[#allocation19 + $0x240] sm:$0xff] %v6105
    %6372 = vst [vmem:[#allocation19 + $0x248] sm:$0xff] %v6106
    %6373 = vst [vmem:[#allocation19 + $0x250] sm:$0xff] %v6107
    %6374 = vst [vmem:[#allocation19 + $0x258] sm:$0xff] %v6108
    %6375 = vst.msk [vmem:[#allocation19 + $0x260] sm:$0xff] %vm1179, %v6109
    %6376 = vst [vmem:[#allocation19 + $0x268] sm:$0xff] %v6110
    %6377 = vst [vmem:[#allocation19 + $0x270] sm:$0xff] %v6111
    %6378 = vst [vmem:[#allocation19 + $0x278] sm:$0xff] %v6112
    %6379 = vst [vmem:[#allocation19 + $0x280] sm:$0xff] %v6113
    %6380 = vst [vmem:[#allocation19 + $0x288] sm:$0xff] %v6114
    %6381 = vst [vmem:[#allocation19 + $0x290] sm:$0xff] %v6115
    %6382 = vst.msk [vmem:[#allocation19 + $0x298] sm:$0xff] %vm1179, %v6116
    %6383 = vst [vmem:[#allocation19 + $0x2a0] sm:$0xff] %v6117
    %6384 = vst [vmem:[#allocation19 + $0x2a8] sm:$0xff] %v6118
    %6385 = vst [vmem:[#allocation19 + $0x2b0] sm:$0xff] %v6119
    %6386 = vst [vmem:[#allocation19 + $0x2b8] sm:$0xff] %v6120
    %6387 = vst [vmem:[#allocation19 + $0x2c0] sm:$0xff] %v6121
    %6388 = vst [vmem:[#allocation19 + $0x2c8] sm:$0xff] %v6122
    %6389 = vst.msk [vmem:[#allocation19 + $0x2d0] sm:$0xff] %vm1179, %v6123
    %6390 = vst [vmem:[#allocation19 + $0x2d8] sm:$0xff] %v6124
    %6391 = vst [vmem:[#allocation19 + $0x2e0] sm:$0xff] %v6125
    %6392 = vst [vmem:[#allocation19 + $0x2e8] sm:$0xff] %v6126
    %6393 = vst [vmem:[#allocation19 + $0x2f0] sm:$0xff] %v6127
    %6394 = vst [vmem:[#allocation19 + $0x2f8] sm:$0xff] %v6128
    %6395 = vst [vmem:[#allocation19 + $0x300] sm:$0xff] %v6129
    %6396 = vst.msk [vmem:[#allocation19 + $0x308] sm:$0xff] %vm1179, %v6130
    %6397 = vst [vmem:[#allocation19 + $0x310] sm:$0xff] %v6131
    %6398 = vst [vmem:[#allocation19 + $0x318] sm:$0xff] %v6132
    %6399 = vst [vmem:[#allocation19 + $0x320] sm:$0xff] %v6133
    %6400 = vst [vmem:[#allocation19 + $0x328] sm:$0xff] %v6134
    %6401 = vst [vmem:[#allocation19 + $0x330] sm:$0xff] %v6135
    %6402 = vst [vmem:[#allocation19 + $0x338] sm:$0xff] %v6136
    %6403 = vst.msk [vmem:[#allocation19 + $0x340] sm:$0xff] %vm1179, %v6137
    %6404 = vst [vmem:[#allocation19 + $0x348] sm:$0xff] %v6138
    %6405 = vst [vmem:[#allocation19 + $0x350] sm:$0xff] %v6139
    %6406 = vst [vmem:[#allocation19 + $0x358] sm:$0xff] %v6140
    %6407 = vst [vmem:[#allocation19 + $0x360] sm:$0xff] %v6141
    %6408 = vst [vmem:[#allocation19 + $0x368] sm:$0xff] %v6142
    %6409 = vst [vmem:[#allocation19 + $0x370] sm:$0xff] %v6143
    %6410 = vst.msk [vmem:[#allocation19 + $0x378] sm:$0xff] %vm1179, %v6144
    %6411 = vst [vmem:[#allocation19 + $0x380] sm:$0xff] %v6145
    %6412 = vst [vmem:[#allocation19 + $0x388] sm:$0xff] %v6146
    %6413 = vst [vmem:[#allocation19 + $0x390] sm:$0xff] %v6147
    %6414 = vst [vmem:[#allocation19 + $0x398] sm:$0xff] %v6148
    %6415 = vst [vmem:[#allocation19 + $0x3a0] sm:$0xff] %v6149
    %6416 = vst [vmem:[#allocation19 + $0x3a8] sm:$0xff] %v6150
    %6417 = vst.msk [vmem:[#allocation19 + $0x3b0] sm:$0xff] %vm1179, %v6151
    %6418 = vst [vmem:[#allocation19 + $0x3b8] sm:$0xff] %v6152
    %6419 = vst [vmem:[#allocation19 + $0x3c0] sm:$0xff] %v6153
    %6420 = vst [vmem:[#allocation19 + $0x3c8] sm:$0xff] %v6154
    %6421 = vst [vmem:[#allocation19 + $0x3d0] sm:$0xff] %v6155
    %6422 = vst [vmem:[#allocation19 + $0x3d8] sm:$0xff] %v6156
    %6423 = vst [vmem:[#allocation19 + $0x3e0] sm:$0xff] %v6157
    %6424 = vst.msk [vmem:[#allocation19 + $0x3e8] sm:$0xff] %vm1179, %v6158
    %6425 = vst [vmem:[#allocation19 + $0x3f0] sm:$0xff] %v6159
    %6426 = vst [vmem:[#allocation19 + $0x3f8] sm:$0xff] %v6160
    %6427 = vst [vmem:[#allocation19 + $0x400] sm:$0xff] %v6161
    %6428 = vst [vmem:[#allocation19 + $0x408] sm:$0xff] %v6162
    %6429 = vst [vmem:[#allocation19 + $0x410] sm:$0xff] %v6163
    %6430 = vst [vmem:[#allocation19 + $0x418] sm:$0xff] %v6164
    %6431 = vst.msk [vmem:[#allocation19 + $0x420] sm:$0xff] %vm1179, %v6165
    %6432 = vst [vmem:[#allocation19 + $0x428] sm:$0xff] %v6166
    %6433 = vst [vmem:[#allocation19 + $0x430] sm:$0xff] %v6167
    %6434 = vst [vmem:[#allocation19 + $0x438] sm:$0xff] %v6168
    %6435 = vst [vmem:[#allocation19 + $0x440] sm:$0xff] %v6169
    %6436 = vst [vmem:[#allocation19 + $0x448] sm:$0xff] %v6170
    %6437 = vst [vmem:[#allocation19 + $0x450] sm:$0xff] %v6171
    %6438 = vst.msk [vmem:[#allocation19 + $0x458] sm:$0xff] %vm1179, %v6172
    %6439 = vst [vmem:[#allocation19 + $0x460] sm:$0xff] %v6173
    %6440 = vst [vmem:[#allocation19 + $0x468] sm:$0xff] %v6174
    %6441 = vst [vmem:[#allocation19 + $0x470] sm:$0xff] %v6175
    %6442 = vst [vmem:[#allocation19 + $0x478] sm:$0xff] %v6176
    %6443 = vst [vmem:[#allocation19 + $0x480] sm:$0xff] %v6177
    %6444 = vst [vmem:[#allocation19 + $0x488] sm:$0xff] %v6178
    %6445 = vst.msk [vmem:[#allocation19 + $0x490] sm:$0xff] %vm1179, %v6179
    %6446 = vst [vmem:[#allocation19 + $0x498] sm:$0xff] %v6180
    %6447 = vst [vmem:[#allocation19 + $0x4a0] sm:$0xff] %v6181
    %6448 = vst [vmem:[#allocation19 + $0x4a8] sm:$0xff] %v6182
    %6449 = vst [vmem:[#allocation19 + $0x4b0] sm:$0xff] %v6183
    %6450 = vst [vmem:[#allocation19 + $0x4b8] sm:$0xff] %v6184
    %6451 = vst [vmem:[#allocation19 + $0x4c0] sm:$0xff] %v6185
    %6452 = vst.msk [vmem:[#allocation19 + $0x4c8] sm:$0xff] %vm1179, %v6186
    %6453 = vst [vmem:[#allocation19 + $0x4d0] sm:$0xff] %v6187
    %6454 = vst [vmem:[#allocation19 + $0x4d8] sm:$0xff] %v6188
    %6455 = vst [vmem:[#allocation19 + $0x4e0] sm:$0xff] %v6189
    %6456 = vst [vmem:[#allocation19 + $0x4e8] sm:$0xff] %v6190
    %6457 = vst [vmem:[#allocation19 + $0x4f0] sm:$0xff] %v6191
    %6458 = vst [vmem:[#allocation19 + $0x4f8] sm:$0xff] %v6192
    %6459 = vst.msk [vmem:[#allocation19 + $0x500] sm:$0xff] %vm1179, %v6193
    %6460 = vst [vmem:[#allocation19 + $0x508] sm:$0xff] %v6194
    %6461 = vst [vmem:[#allocation19 + $0x510] sm:$0xff] %v6195
    %6462 = vst [vmem:[#allocation19 + $0x518] sm:$0xff] %v6196
    %6463 = vst [vmem:[#allocation19 + $0x520] sm:$0xff] %v6197
    %6464 = vst [vmem:[#allocation19 + $0x528] sm:$0xff] %v6198
    %6465 = vst [vmem:[#allocation19 + $0x530] sm:$0xff] %v6199
    %6466 = vst.msk [vmem:[#allocation19 + $0x538] sm:$0xff] %vm1179, %v6200
    %6467 = vst [vmem:[#allocation19 + $0x540] sm:$0xff] %v6201
    %6468 = vst [vmem:[#allocation19 + $0x548] sm:$0xff] %v6202
    %6469 = vst [vmem:[#allocation19 + $0x550] sm:$0xff] %v6203
    %6470 = vst [vmem:[#allocation19 + $0x558] sm:$0xff] %v6204
    %6471 = vst [vmem:[#allocation19 + $0x560] sm:$0xff] %v6205
    %6472 = vst [vmem:[#allocation19 + $0x568] sm:$0xff] %v6206
    %6473 = vst.msk [vmem:[#allocation19 + $0x570] sm:$0xff] %vm1179, %v6207
    %6474 = vst [vmem:[#allocation19 + $0x578] sm:$0xff] %v6208
    %6475 = vst [vmem:[#allocation19 + $0x580] sm:$0xff] %v6209
    %6476 = vst [vmem:[#allocation19 + $0x588] sm:$0xff] %v6210
    %6477 = vst [vmem:[#allocation19 + $0x590] sm:$0xff] %v6211
    %6478 = vst [vmem:[#allocation19 + $0x598] sm:$0xff] %v6212
    %6479 = vst [vmem:[#allocation19 + $0x5a0] sm:$0xff] %v6213
    %6480 = vst.msk [vmem:[#allocation19 + $0x5a8] sm:$0xff] %vm1179, %v6214
    %6481 = vst [vmem:[#allocation19 + $0x5b0] sm:$0xff] %v6215
    %6482 = vst [vmem:[#allocation19 + $0x5b8] sm:$0xff] %v6216
    %6483 = vst [vmem:[#allocation19 + $0x5c0] sm:$0xff] %v6217
    %6484 = vst [vmem:[#allocation19 + $0x5c8] sm:$0xff] %v6218
    %6485 = vst [vmem:[#allocation19 + $0x5d0] sm:$0xff] %v6219
    %6486 = vst [vmem:[#allocation19 + $0x5d8] sm:$0xff] %v6220
    %6487 = vst.msk [vmem:[#allocation19 + $0x5e0] sm:$0xff] %vm1179, %v6221
    %6488 = vst [vmem:[#allocation19 + $0x5e8] sm:$0xff] %v6222
    %6489 = vst [vmem:[#allocation19 + $0x5f0] sm:$0xff] %v6223
    %6490 = vst [vmem:[#allocation19 + $0x5f8] sm:$0xff] %v6224
    %6491 = vst [vmem:[#allocation19 + $0x600] sm:$0xff] %v6225
    %6492 = vst [vmem:[#allocation19 + $0x608] sm:$0xff] %v6226
    %6493 = vst [vmem:[#allocation19 + $0x610] sm:$0xff] %v6227
    %6494 = vst.msk [vmem:[#allocation19 + $0x618] sm:$0xff] %vm1179, %v6228
    %6495 = vst [vmem:[#allocation19 + $0x620] sm:$0xff] %v6229
    %6496 = vst [vmem:[#allocation19 + $0x628] sm:$0xff] %v6230
    %6497 = vst [vmem:[#allocation19 + $0x630] sm:$0xff] %v6231
    %6498 = vst [vmem:[#allocation19 + $0x638] sm:$0xff] %v6232
    %6499 = vst [vmem:[#allocation19 + $0x640] sm:$0xff] %v6233
    %6500 = vst [vmem:[#allocation19 + $0x648] sm:$0xff] %v6234
    %6501 = vst.msk [vmem:[#allocation19 + $0x650] sm:$0xff] %vm1179, %v6235
    %6502 = vst [vmem:[#allocation19 + $0x658] sm:$0xff] %v6236
    %6503 = vst [vmem:[#allocation19 + $0x660] sm:$0xff] %v6237
    %6504 = vst [vmem:[#allocation19 + $0x668] sm:$0xff] %v6238
    %6505 = vst [vmem:[#allocation19 + $0x670] sm:$0xff] %v6239
    %6506 = vst [vmem:[#allocation19 + $0x678] sm:$0xff] %v6240
    %6507 = vst [vmem:[#allocation19 + $0x680] sm:$0xff] %v6241
    %6508 = vst.msk [vmem:[#allocation19 + $0x688] sm:$0xff] %vm1179, %v6242
    %6509 = vst [vmem:[#allocation19 + $0x690] sm:$0xff] %v6243
    %6510 = vst [vmem:[#allocation19 + $0x698] sm:$0xff] %v6244
    %6511 = vst [vmem:[#allocation19 + $0x6a0] sm:$0xff] %v6245
    %6512 = vst [vmem:[#allocation19 + $0x6a8] sm:$0xff] %v6246
    %6513 = vst [vmem:[#allocation19 + $0x6b0] sm:$0xff] %v6247
    %6514 = vst [vmem:[#allocation19 + $0x6b8] sm:$0xff] %v6248
    %6515 = vst.msk [vmem:[#allocation19 + $0x6c0] sm:$0xff] %vm1179, %v6249
    %6516 = vst [vmem:[#allocation19 + $0x6c8] sm:$0xff] %v6250
    %6517 = vst [vmem:[#allocation19 + $0x6d0] sm:$0xff] %v6251
    %6518 = vst [vmem:[#allocation19 + $0x6d8] sm:$0xff] %v6252
    %6519 = vst [vmem:[#allocation19 + $0x6e0] sm:$0xff] %v6253
    %6520 = vst [vmem:[#allocation19 + $0x6e8] sm:$0xff] %v6254
    %6521 = vst [vmem:[#allocation19 + $0x6f0] sm:$0xff] %v6255
    %6522 = vst.msk [vmem:[#allocation19 + $0x6f8] sm:$0xff] %vm1179, %v6256
    %6523 = vst [vmem:[#allocation19 + $0x700] sm:$0xff] %v6257
    %6524 = vst [vmem:[#allocation19 + $0x708] sm:$0xff] %v6258
    %6525 = vst [vmem:[#allocation19 + $0x710] sm:$0xff] %v6259
    %6526 = vst [vmem:[#allocation19 + $0x718] sm:$0xff] %v6260
    %6527 = vst [vmem:[#allocation19 + $0x720] sm:$0xff] %v6261
    %6528 = vst [vmem:[#allocation19 + $0x728] sm:$0xff] %v6262
    %6529 = vst.msk [vmem:[#allocation19 + $0x730] sm:$0xff] %vm1179, %v6263
    %6530 = vst [vmem:[#allocation19 + $0x738] sm:$0xff] %v6264
    %6531 = vst [vmem:[#allocation19 + $0x740] sm:$0xff] %v6265
    %6532 = vst [vmem:[#allocation19 + $0x748] sm:$0xff] %v6266
    %6533 = vst [vmem:[#allocation19 + $0x750] sm:$0xff] %v6267
    %6534 = vst [vmem:[#allocation19 + $0x758] sm:$0xff] %v6268
    %6535 = vst [vmem:[#allocation19 + $0x760] sm:$0xff] %v6269
    %6536 = vst.msk [vmem:[#allocation19 + $0x768] sm:$0xff] %vm1179, %v6270
    %6537 = vst [vmem:[#allocation19 + $0x770] sm:$0xff] %v6271
    %6538 = vst [vmem:[#allocation19 + $0x778] sm:$0xff] %v6272
    %6539 = vst [vmem:[#allocation19 + $0x780] sm:$0xff] %v6273
    %6540 = vst [vmem:[#allocation19 + $0x788] sm:$0xff] %v6274
    %6541 = vst [vmem:[#allocation19 + $0x790] sm:$0xff] %v6275
    %6542 = vst [vmem:[#allocation19 + $0x798] sm:$0xff] %v6276
    %6543 = vst.msk [vmem:[#allocation19 + $0x7a0] sm:$0xff] %vm1179, %v6277
    %6544 = vst [vmem:[#allocation19 + $0x7a8] sm:$0xff] %v6278
    %6545 = vst [vmem:[#allocation19 + $0x7b0] sm:$0xff] %v6279
    %6546 = vst [vmem:[#allocation19 + $0x7b8] sm:$0xff] %v6280
    %6547 = vst [vmem:[#allocation19 + $0x7c0] sm:$0xff] %v6281
    %6548 = vst [vmem:[#allocation19 + $0x7c8] sm:$0xff] %v6282
    %6549 = vst [vmem:[#allocation19 + $0x7d0] sm:$0xff] %v6283
    %6550 = vst.msk [vmem:[#allocation19 + $0x7d8] sm:$0xff] %vm1179, %v6284
    %6551 = vst [vmem:[#allocation19 + $0x7e0] sm:$0xff] %v6285
    %6552 = vst [vmem:[#allocation19 + $0x7e8] sm:$0xff] %v6286
    %6553 = vst [vmem:[#allocation19 + $0x7f0] sm:$0xff] %v6287
    %6554 = vst [vmem:[#allocation19 + $0x7f8] sm:$0xff] %v6288
    %6555 = vst [vmem:[#allocation19 + $0x800] sm:$0xff] %v6289
    %6556 = vst [vmem:[#allocation19 + $0x808] sm:$0xff] %v6290
    %6557 = vst.msk [vmem:[#allocation19 + $0x810] sm:$0xff] %vm1179, %v6291
    %6558 = vst [vmem:[#allocation19 + $0x818] sm:$0xf] %v6292
    %6559 = vst [vmem:[#allocation19 + $0x820] sm:$0xf] %v6293
    %6560 = vst [vmem:[#allocation19 + $0x828] sm:$0xf] %v6294
    %6561 = vst [vmem:[#allocation19 + $0x830] sm:$0xf] %v6295
    %6562 = vst [vmem:[#allocation19 + $0x838] sm:$0xf] %v6296
    %6563 = vst [vmem:[#allocation19 + $0x840] sm:$0xf] %v6297
    %vm6564 = vcmask 125952
    %6565 = vst.msk [vmem:[#allocation19 + $0x848] sm:$0xf] %vm6564, %v6298
    // Predicated region
    $region86: #{autoencoder_forward.1} parent=1 // pred_check
      _
    $region87: #{autoencoder_forward.1} parent=1 // pred_check_branch
      %6567 = sbr.rel (0) target = $region89
    $region88: #{autoencoder_forward.1} parent=1 // pred_region
      %6569 = vsyncadd [#allocation4], 0
      %s6570 = sshll.u32 [#allocation19], 4
      %s6571 = int_to_ptr.vmem [resolvable:$true] %s6570
      %s6572 = sshll.u32 %s11, 4
      %s6573 = int_to_ptr.hbm [resolvable:$true] %s6572
      %6578 = dma.vmem_to_hbm [thread:$0]  %s6571, 34048, %s6573, [#allocation4], 896, 896, 56
    $region89: #{autoencoder_forward.1} parent=1 // pred_fallthru
      _
    // Predicated region
    $region90: #{autoencoder_forward.1} parent=1 // pred_check
      _
    $region91: #{autoencoder_forward.1} parent=1 // pred_check_branch
      %6580 = sbr.rel (0) target = $region93
    $region92: #{autoencoder_forward.1} parent=1 // pred_region
      %6582 = dma.done [#allocation4], 34048
    $region93: #{autoencoder_forward.1} parent=1 // pred_fallthru
      _
    %6583 = vsyncpa [#allocation3], 1
    %6584 = vsyncpa [#allocation6], 1
    %6585 = vsyncpa [#allocation9], 1
    %6586 = vsyncpa [#allocation12], 1
    %6587 = vsyncpa [#allocation15], 1
    %6588 = vsyncpa [#allocation18], 1
    %6589 = vsyncpa [#allocation4], 1

</llo_original>
